<compile_context>
chip_gen: v6e
topology: v6e:2x2x1
jax: 0.10.0
libtpu: 0.0.40
codegen_flags: <defaults>
</compile_context>

<pallas_src>
import jax
import jax.numpy as jnp
from jax.experimental import pallas as pl
from jax.experimental.pallas import tpu as pltpu


def _hier_decoder_kernel(z_ref,
                         c_wih0, c_whh0, c_b0,
                         c_wih1, c_whh1, c_b1,
                         fc0_w, fc0_b, fc1_w, fc1_b,
                         d_wih0, d_whh0, d_b0,
                         d_wih1, d_whh1, d_b1,
                         out_w, out_b,
                         o_ref,
                         *, T):
    TUg = z_ref.shape[0]          # T * Ug rows, time-major stacked chunks
    Ug = TUg // T
    Hc = c_whh0.shape[0]
    Hd = d_whh0.shape[0]

    def mdot(x, w_ref):
        """Matmul against a weight ref; operands in weight dtype (bf16), f32 acc."""
        w = w_ref[...]
        return jnp.dot(x.astype(w.dtype), w, preferred_element_type=jnp.float32)

    def lstm_layer(x_stacked, wih_ref, whh_ref, b_ref, h0, c0):
        """PyTorch-style LSTM layer; all Ug chunks batched as rows.

        x_stacked: (T*Ug, K) time-major stacked input.  Gate order: i, f, g, o.
        Returns (stacked outputs (T*Ug, H), final hidden state (Ug, H)).
        """
        H = whh_ref.shape[0]
        # One stacked input projection + one bias broadcast for all T steps
        # (off the recurrent critical path).
        gates_x = mdot(x_stacked, wih_ref) + b_ref[...].astype(jnp.float32)
        whh = whh_ref[...]

        h, c = h0, c0
        outs = []
        # Fully unrolled — T is static and small (= batch size).
        for t in range(T):
            g_x = gates_x[t * Ug:(t + 1) * Ug, :]          # sublane-aligned slice
            gates = g_x + jnp.dot(h.astype(whh.dtype), whh,
                                  preferred_element_type=jnp.float32)
            i_g = jax.nn.sigmoid(gates[:, 0:H])
            f_g = jax.nn.sigmoid(gates[:, H:2 * H])
            g_g = jnp.tanh(gates[:, 2 * H:3 * H])
            o_g = jax.nn.sigmoid(gates[:, 3 * H:4 * H])
            c = f_g * c + i_g * g_g
            h = o_g * jnp.tanh(c)
            outs.append(h)
        return jnp.concatenate(outs, axis=0), h

    zeros_hc = jnp.zeros((Ug, Hc), jnp.float32)
    zeros_hd = jnp.zeros((Ug, Hd), jnp.float32)

    # Conductor LSTM (2 layers, zero-initialised state).
    z_stk = z_ref[...]
    seq_c0, h_c0 = lstm_layer(z_stk, c_wih0, c_whh0, c_b0, zeros_hc, zeros_hc)
    seq_c1, h_c1 = lstm_layer(seq_c0, c_wih1, c_whh1, c_b1, zeros_hc, zeros_hc)

    # fc0 = Linear + Tanh on the whole stacked (T*Ug, Hc) conductor output.
    seq_fc0 = jnp.tanh(mdot(seq_c1, fc0_w) + fc0_b[...].astype(jnp.float32))

    # fc1 = Linear + Tanh on both conductor layers' final hidden states,
    # stacked into one (2*Ug, Hc) matmul; sliced back per decoder layer.
    h_stack = jnp.concatenate([h_c0, h_c1], axis=0)
    h_dec = jnp.tanh(mdot(h_stack, fc1_w) + fc1_b[...].astype(jnp.float32))
    h_dec0 = h_dec[0:Ug, :]
    h_dec1 = h_dec[Ug:2 * Ug, :]

    # Decoder LSTM (2 layers); c0 = zeros_like(h0), as in the torch code.
    seq_d0, _ = lstm_layer(seq_fc0, d_wih0, d_whh0, d_b0, h_dec0, zeros_hd)
    seq_d1, _ = lstm_layer(seq_d0, d_wih1, d_whh1, d_b1, h_dec1, zeros_hd)

    # One stacked output projection, then Softmax over dim 0 (the batch-as-
    # time axis, per chunk / per feature) — matches torch.nn.Softmax(0).
    logits = mdot(seq_d1, out_w) + out_b[...].astype(jnp.float32)   # (T*Ug, P)
    lg = [logits[t * Ug:(t + 1) * Ug, :] for t in range(T)]          # free slices
    m = lg[0]
    for t in range(1, T):
        m = jnp.maximum(m, lg[t])
    e = [jnp.exp(x - m) for x in lg]
    denom = e[0]
    for t in range(1, T):
        denom = denom + e[t]
    # Note: approx reciprocal (EUP slot) -> probs don't sum to *exactly* 1.
    inv = pl.reciprocal(denom, approx=True)
    probs = jnp.concatenate([x * inv for x in e], axis=0)            # (T*Ug, P)
    o_ref[...] = probs                                               # single store


def _num_groups(U):
    """Split chunk groups across TensorCores only on v7x (2 TCs per chip)."""
    if U % 2 != 0:
        return 1
    try:
        kind = (getattr(jax.devices()[0], "device_kind", "") or "").lower()
    except Exception:
        kind = ""
    return 2 if "v7" in kind else 1


def hierarchical_decoder_forward(z, params, *, U, compute_dtype=jnp.bfloat16,
                                 num_groups=None):
    B, z_dim = z.shape
    Din = z_dim // U
    out_w = params[-2]
    P = out_w.shape[1]

    # Cast the 2-D weight matrices to bf16 (halves weight-DMA traffic, native
    # bf16 MXU path); biases stay f32 and all accumulation is f32.
    def cast_param(p):
        if compute_dtype is not None and p.ndim == 2 and p.shape[0] > 1:
            return p.astype(compute_dtype)
        return p.astype(jnp.float32)

    cparams = tuple(cast_param(p) for p in params)

    NG = num_groups if num_groups is not None else _num_groups(U)
    Ug = U // NG
    T = B

    # (B, z_dim) -> (NG, T*Ug, Din): within a group, all chunks for all T
    # steps are stacked time-major on the sublane axis; the grid only splits
    # the groups (v7x megacore), and is a single step elsewhere.
    zc = (z.astype(jnp.float32)
           .reshape(B, NG, Ug, Din)
           .transpose(1, 0, 2, 3)
           .reshape(NG, T * Ug, Din))

    # Constant index_map -> weights stay resident in VMEM across grid steps.
    weight_specs = [pl.BlockSpec(p.shape, lambda g: (0, 0)) for p in cparams]
    in_specs = ([pl.BlockSpec((pl.Squeezed(), T * Ug, Din),
                              lambda g: (g, 0, 0))]
                + weight_specs)
    out_specs = pl.BlockSpec((pl.Squeezed(), T * Ug, P),
                             lambda g: (g, 0, 0))

    import functools
    kernel = functools.partial(_hier_decoder_kernel, T=T)

    out = pl.pallas_call(
        kernel,
        grid=(NG,),
        in_specs=in_specs,
        out_specs=out_specs,
        out_shape=jax.ShapeDtypeStruct((NG, T * Ug, P), jnp.float32),
        compiler_params=pltpu.CompilerParams(
            dimension_semantics=("parallel",)),
    )(zc, *cparams)

    # Rows are (t, chunk-within-group); torch.cat(outputs, dim=1) order is
    # chunk-major across the feature axis: (B, U*P) -> (B, -1, 4).
    out = (out.reshape(NG, T, Ug, P)
              .transpose(1, 0, 2, 3)
              .reshape(B, U * P))
    return out.reshape(B, -1, 4)


def init_params(key, *, z_dim, hidden_dim, cond_dim, output_dim, U):
    Din = z_dim // U
    P = output_dim * 4 // U
    Hc, Hd = cond_dim, hidden_dim
    keys = iter(jax.random.split(key, 32))

    def u(shape, scale):
        return jax.random.uniform(next(keys), shape, jnp.float32, -scale, scale)

    def lstm(in_dim, H):
        s = 1.0 / (H ** 0.5)
        wih = u((4 * H, in_dim), s).T          # stored transposed: (in, 4H)
        whh = u((4 * H, H), s).T               # (H, 4H)
        b = (u((4 * H,), s) + u((4 * H,), s)).reshape(1, 4 * H)  # b_ih + b_hh
        return wih, whh, b

    def linear(in_dim, out_dim):
        s = 1.0 / (in_dim ** 0.5)
        w = u((out_dim, in_dim), s).T          # (in, out)
        b = u((out_dim,), s).reshape(1, out_dim)
        return w, b

    c0 = lstm(Din, Hc)
    c1 = lstm(Hc, Hc)
    fc0 = linear(Hc, Hc)
    fc1 = linear(Hc, Hd)
    d0 = lstm(Hc, Hd)
    d1 = lstm(Hd, Hd)
    outl = linear(Hd, P)
    return (*c0, *c1, *fc0, *fc1, *d0, *d1, *outl)


if __name__ == "__main__":
    # Small config consistent with the module:
    # z_dim=128, hidden_dim=128, condoctor_output_dim=128, output_dim=32,
    # num_layers=2, U=16 -> per-chunk input 8, per-chunk output 8.
    z_dim, hidden_dim, cond_dim, output_dim, U = 128, 128, 128, 32, 16
    B = 2

    key = jax.random.PRNGKey(0)
    kp, kz = jax.random.split(key)
    params = init_params(kp, z_dim=z_dim, hidden_dim=hidden_dim,
                         cond_dim=cond_dim, output_dim=output_dim, U=U)
    z = jax.random.normal(kz, (B, z_dim), jnp.float32)

    out = hierarchical_decoder_forward(z, params, U=U)
    jax.block_until_ready(out)
    assert out.shape == (B, output_dim, 4), out.shape
    assert bool(jnp.all(jnp.isfinite(out)))
    print("KERNEL_OK")
</pallas_src>

<mosaic_0001>
module attributes {stable_mosaic.version = 11 : i64} {
  func.func @_hier_decoder_kernel(%arg0: i32, %arg1: memref<1x32x8xf32, #tpu.memory_space<vmem>>, %arg2: memref<8x512xbf16, #tpu.memory_space<vmem>>, %arg3: memref<128x512xbf16, #tpu.memory_space<vmem>>, %arg4: memref<1x512xf32, #tpu.memory_space<vmem>>, %arg5: memref<128x512xbf16, #tpu.memory_space<vmem>>, %arg6: memref<128x512xbf16, #tpu.memory_space<vmem>>, %arg7: memref<1x512xf32, #tpu.memory_space<vmem>>, %arg8: memref<128x128xbf16, #tpu.memory_space<vmem>>, %arg9: memref<1x128xf32, #tpu.memory_space<vmem>>, %arg10: memref<128x128xbf16, #tpu.memory_space<vmem>>, %arg11: memref<1x128xf32, #tpu.memory_space<vmem>>, %arg12: memref<128x512xbf16, #tpu.memory_space<vmem>>, %arg13: memref<128x512xbf16, #tpu.memory_space<vmem>>, %arg14: memref<1x512xf32, #tpu.memory_space<vmem>>, %arg15: memref<128x512xbf16, #tpu.memory_space<vmem>>, %arg16: memref<128x512xbf16, #tpu.memory_space<vmem>>, %arg17: memref<1x512xf32, #tpu.memory_space<vmem>>, %arg18: memref<128x8xbf16, #tpu.memory_space<vmem>>, %arg19: memref<1x8xf32, #tpu.memory_space<vmem>>, %arg20: memref<1x32x8xf32, #tpu.memory_space<vmem>>) attributes {dimension_semantics = [#tpu.dimension_semantics<parallel>], iteration_bounds = array<i64: 1>, scalar_prefetch = 0 : i64, scratch_operands = 0 : i64, tpu.core_type = #tpu.core_type<tc>, window_params = [{transform_indices = @transform_0, window_bounds = array<i64: 1, 32, 8>}, {pipeline_mode = #tpu.pipeline_mode<synchronous>, transform_indices = @transform_1, window_bounds = array<i64: 8, 512>}, {pipeline_mode = #tpu.pipeline_mode<synchronous>, transform_indices = @transform_2, window_bounds = array<i64: 128, 512>}, {pipeline_mode = #tpu.pipeline_mode<synchronous>, transform_indices = @transform_3, window_bounds = array<i64: 1, 512>}, {pipeline_mode = #tpu.pipeline_mode<synchronous>, transform_indices = @transform_4, window_bounds = array<i64: 128, 512>}, {pipeline_mode = #tpu.pipeline_mode<synchronous>, transform_indices = @transform_5, window_bounds = array<i64: 128, 512>}, {pipeline_mode = #tpu.pipeline_mode<synchronous>, transform_indices = @transform_6, window_bounds = array<i64: 1, 512>}, {pipeline_mode = #tpu.pipeline_mode<synchronous>, transform_indices = @transform_7, window_bounds = array<i64: 128, 128>}, {pipeline_mode = #tpu.pipeline_mode<synchronous>, transform_indices = @transform_8, window_bounds = array<i64: 1, 128>}, {pipeline_mode = #tpu.pipeline_mode<synchronous>, transform_indices = @transform_9, window_bounds = array<i64: 128, 128>}, {pipeline_mode = #tpu.pipeline_mode<synchronous>, transform_indices = @transform_10, window_bounds = array<i64: 1, 128>}, {pipeline_mode = #tpu.pipeline_mode<synchronous>, transform_indices = @transform_11, window_bounds = array<i64: 128, 512>}, {pipeline_mode = #tpu.pipeline_mode<synchronous>, transform_indices = @transform_12, window_bounds = array<i64: 128, 512>}, {pipeline_mode = #tpu.pipeline_mode<synchronous>, transform_indices = @transform_13, window_bounds = array<i64: 1, 512>}, {pipeline_mode = #tpu.pipeline_mode<synchronous>, transform_indices = @transform_14, window_bounds = array<i64: 128, 512>}, {pipeline_mode = #tpu.pipeline_mode<synchronous>, transform_indices = @transform_15, window_bounds = array<i64: 128, 512>}, {pipeline_mode = #tpu.pipeline_mode<synchronous>, transform_indices = @transform_16, window_bounds = array<i64: 1, 512>}, {pipeline_mode = #tpu.pipeline_mode<synchronous>, transform_indices = @transform_17, window_bounds = array<i64: 128, 8>}, {pipeline_mode = #tpu.pipeline_mode<synchronous>, transform_indices = @transform_18, window_bounds = array<i64: 1, 8>}, {transform_indices = @transform_19, window_bounds = array<i64: 1, 32, 8>}]} {
    %cst = arith.constant 0.000000e+00 : f32
    %0 = vector.broadcast %cst : f32 to vector<16x128xf32>
    %cst_0 = arith.constant 0.000000e+00 : f32
    %1 = vector.broadcast %cst_0 : f32 to vector<16x128xf32>
    %c0 = arith.constant 0 : index
    %c0_1 = arith.constant 0 : index
    %c0_2 = arith.constant 0 : index
    %2 = vector.load %arg1[%c0, %c0_1, %c0_2] : memref<1x32x8xf32, #tpu.memory_space<vmem>>, vector<1x32x8xf32>
    %3 = vector.shape_cast %2 : vector<1x32x8xf32> to vector<32x8xf32>
    %c0_3 = arith.constant 0 : index
    %c0_4 = arith.constant 0 : index
    %4 = vector.load %arg2[%c0_3, %c0_4] : memref<8x512xbf16, #tpu.memory_space<vmem>>, vector<8x512xbf16>
    %5 = arith.truncf %3 : vector<32x8xf32> to vector<32x8xbf16>
    %cst_5 = arith.constant dense<0.000000e+00> : vector<32x512xf32>
    %6 = tpu.matmul %5, %4, %cst_5 {dimension_numbers = #tpu.dot_dimension_numbers<[1], [0], [0], [1], [0, 0, 1, 1], [], []>} : vector<32x8xbf16>, vector<8x512xbf16>, vector<32x512xf32> -> vector<32x512xf32>
    %c0_6 = arith.constant 0 : index
    %c0_7 = arith.constant 0 : index
    %7 = vector.load %arg4[%c0_6, %c0_7] : memref<1x512xf32, #tpu.memory_space<vmem>>, vector<1x512xf32>
    %8 = vector.broadcast %7 : vector<1x512xf32> to vector<32x512xf32>
    %9 = arith.addf %6, %8 : vector<32x512xf32>
    %c0_8 = arith.constant 0 : index
    %c0_9 = arith.constant 0 : index
    %10 = vector.load %arg3[%c0_8, %c0_9] : memref<128x512xbf16, #tpu.memory_space<vmem>>, vector<128x512xbf16>
    %11 = vector.extract_strided_slice %9 {offsets = [0, 0], sizes = [16, 512], strides = [1, 1]} : vector<32x512xf32> to vector<16x512xf32>
    %12 = arith.truncf %0 : vector<16x128xf32> to vector<16x128xbf16>
    %cst_10 = arith.constant dense<0.000000e+00> : vector<16x512xf32>
    %13 = tpu.matmul %12, %10, %cst_10 {dimension_numbers = #tpu.dot_dimension_numbers<[1], [0], [0], [1], [0, 0, 1, 1], [], []>} : vector<16x128xbf16>, vector<128x512xbf16>, vector<16x512xf32> -> vector<16x512xf32>
    %14 = arith.addf %11, %13 : vector<16x512xf32>
    %15 = vector.extract_strided_slice %14 {offsets = [0, 0], sizes = [16, 128], strides = [1, 1]} : vector<16x512xf32> to vector<16x128xf32>
    %16 = arith.negf %15 : vector<16x128xf32>
    %17 = math.exp %16 : vector<16x128xf32>
    %cst_11 = arith.constant 1.000000e+00 : f32
    %18 = vector.broadcast %cst_11 : f32 to vector<16x128xf32>
    %19 = arith.addf %18, %17 : vector<16x128xf32>
    %20 = arith.divf %18, %19 : vector<16x128xf32>
    %21 = vector.extract_strided_slice %14 {offsets = [0, 128], sizes = [16, 128], strides = [1, 1]} : vector<16x512xf32> to vector<16x128xf32>
    %22 = arith.negf %21 : vector<16x128xf32>
    %23 = math.exp %22 : vector<16x128xf32>
    %cst_12 = arith.constant 1.000000e+00 : f32
    %24 = vector.broadcast %cst_12 : f32 to vector<16x128xf32>
    %25 = arith.addf %24, %23 : vector<16x128xf32>
    %26 = arith.divf %24, %25 : vector<16x128xf32>
    %27 = vector.extract_strided_slice %14 {offsets = [0, 256], sizes = [16, 128], strides = [1, 1]} : vector<16x512xf32> to vector<16x128xf32>
    %28 = math.tanh %27 : vector<16x128xf32>
    %29 = vector.extract_strided_slice %14 {offsets = [0, 384], sizes = [16, 128], strides = [1, 1]} : vector<16x512xf32> to vector<16x128xf32>
    %30 = arith.negf %29 : vector<16x128xf32>
    %31 = math.exp %30 : vector<16x128xf32>
    %cst_13 = arith.constant 1.000000e+00 : f32
    %32 = vector.broadcast %cst_13 : f32 to vector<16x128xf32>
    %33 = arith.addf %32, %31 : vector<16x128xf32>
    %34 = arith.divf %32, %33 : vector<16x128xf32>
    %35 = arith.mulf %26, %0 : vector<16x128xf32>
    %36 = arith.mulf %20, %28 : vector<16x128xf32>
    %37 = arith.addf %35, %36 : vector<16x128xf32>
    %38 = math.tanh %37 : vector<16x128xf32>
    %39 = arith.mulf %34, %38 : vector<16x128xf32>
    %40 = vector.extract_strided_slice %9 {offsets = [16, 0], sizes = [16, 512], strides = [1, 1]} : vector<32x512xf32> to vector<16x512xf32>
    %41 = arith.truncf %39 : vector<16x128xf32> to vector<16x128xbf16>
    %cst_14 = arith.constant dense<0.000000e+00> : vector<16x512xf32>
    %42 = tpu.matmul %41, %10, %cst_14 {dimension_numbers = #tpu.dot_dimension_numbers<[1], [0], [0], [1], [0, 0, 1, 1], [], []>} : vector<16x128xbf16>, vector<128x512xbf16>, vector<16x512xf32> -> vector<16x512xf32>
    %43 = arith.addf %40, %42 : vector<16x512xf32>
    %44 = vector.extract_strided_slice %43 {offsets = [0, 0], sizes = [16, 128], strides = [1, 1]} : vector<16x512xf32> to vector<16x128xf32>
    %45 = arith.negf %44 : vector<16x128xf32>
    %46 = math.exp %45 : vector<16x128xf32>
    %cst_15 = arith.constant 1.000000e+00 : f32
    %47 = vector.broadcast %cst_15 : f32 to vector<16x128xf32>
    %48 = arith.addf %47, %46 : vector<16x128xf32>
    %49 = arith.divf %47, %48 : vector<16x128xf32>
    %50 = vector.extract_strided_slice %43 {offsets = [0, 128], sizes = [16, 128], strides = [1, 1]} : vector<16x512xf32> to vector<16x128xf32>
    %51 = arith.negf %50 : vector<16x128xf32>
    %52 = math.exp %51 : vector<16x128xf32>
    %cst_16 = arith.constant 1.000000e+00 : f32
    %53 = vector.broadcast %cst_16 : f32 to vector<16x128xf32>
    %54 = arith.addf %53, %52 : vector<16x128xf32>
    %55 = arith.divf %53, %54 : vector<16x128xf32>
    %56 = vector.extract_strided_slice %43 {offsets = [0, 256], sizes = [16, 128], strides = [1, 1]} : vector<16x512xf32> to vector<16x128xf32>
    %57 = math.tanh %56 : vector<16x128xf32>
    %58 = vector.extract_strided_slice %43 {offsets = [0, 384], sizes = [16, 128], strides = [1, 1]} : vector<16x512xf32> to vector<16x128xf32>
    %59 = arith.negf %58 : vector<16x128xf32>
    %60 = math.exp %59 : vector<16x128xf32>
    %cst_17 = arith.constant 1.000000e+00 : f32
    %61 = vector.broadcast %cst_17 : f32 to vector<16x128xf32>
    %62 = arith.addf %61, %60 : vector<16x128xf32>
    %63 = arith.divf %61, %62 : vector<16x128xf32>
    %64 = arith.mulf %55, %37 : vector<16x128xf32>
    %65 = arith.mulf %49, %57 : vector<16x128xf32>
    %66 = arith.addf %64, %65 : vector<16x128xf32>
    %67 = math.tanh %66 : vector<16x128xf32>
    %68 = arith.mulf %63, %67 : vector<16x128xf32>
    %69 = tpu.concatenate %39, %68 in 0 : vector<16x128xf32>, vector<16x128xf32> -> vector<32x128xf32>
    %c0_18 = arith.constant 0 : index
    %c0_19 = arith.constant 0 : index
    %70 = vector.load %arg5[%c0_18, %c0_19] : memref<128x512xbf16, #tpu.memory_space<vmem>>, vector<128x512xbf16>
    %71 = arith.truncf %69 : vector<32x128xf32> to vector<32x128xbf16>
    %cst_20 = arith.constant dense<0.000000e+00> : vector<32x512xf32>
    %72 = tpu.matmul %71, %70, %cst_20 {dimension_numbers = #tpu.dot_dimension_numbers<[1], [0], [0], [1], [0, 0, 1, 1], [], []>} : vector<32x128xbf16>, vector<128x512xbf16>, vector<32x512xf32> -> vector<32x512xf32>
    %c0_21 = arith.constant 0 : index
    %c0_22 = arith.constant 0 : index
    %73 = vector.load %arg7[%c0_21, %c0_22] : memref<1x512xf32, #tpu.memory_space<vmem>>, vector<1x512xf32>
    %74 = vector.broadcast %73 : vector<1x512xf32> to vector<32x512xf32>
    %75 = arith.addf %72, %74 : vector<32x512xf32>
    %c0_23 = arith.constant 0 : index
    %c0_24 = arith.constant 0 : index
    %76 = vector.load %arg6[%c0_23, %c0_24] : memref<128x512xbf16, #tpu.memory_space<vmem>>, vector<128x512xbf16>
    %77 = vector.extract_strided_slice %75 {offsets = [0, 0], sizes = [16, 512], strides = [1, 1]} : vector<32x512xf32> to vector<16x512xf32>
    %78 = arith.truncf %0 : vector<16x128xf32> to vector<16x128xbf16>
    %cst_25 = arith.constant dense<0.000000e+00> : vector<16x512xf32>
    %79 = tpu.matmul %78, %76, %cst_25 {dimension_numbers = #tpu.dot_dimension_numbers<[1], [0], [0], [1], [0, 0, 1, 1], [], []>} : vector<16x128xbf16>, vector<128x512xbf16>, vector<16x512xf32> -> vector<16x512xf32>
    %80 = arith.addf %77, %79 : vector<16x512xf32>
    %81 = vector.extract_strided_slice %80 {offsets = [0, 0], sizes = [16, 128], strides = [1, 1]} : vector<16x512xf32> to vector<16x128xf32>
    %82 = arith.negf %81 : vector<16x128xf32>
    %83 = math.exp %82 : vector<16x128xf32>
    %cst_26 = arith.constant 1.000000e+00 : f32
    %84 = vector.broadcast %cst_26 : f32 to vector<16x128xf32>
    %85 = arith.addf %84, %83 : vector<16x128xf32>
    %86 = arith.divf %84, %85 : vector<16x128xf32>
    %87 = vector.extract_strided_slice %80 {offsets = [0, 128], sizes = [16, 128], strides = [1, 1]} : vector<16x512xf32> to vector<16x128xf32>
    %88 = arith.negf %87 : vector<16x128xf32>
    %89 = math.exp %88 : vector<16x128xf32>
    %cst_27 = arith.constant 1.000000e+00 : f32
    %90 = vector.broadcast %cst_27 : f32 to vector<16x128xf32>
    %91 = arith.addf %90, %89 : vector<16x128xf32>
    %92 = arith.divf %90, %91 : vector<16x128xf32>
    %93 = vector.extract_strided_slice %80 {offsets = [0, 256], sizes = [16, 128], strides = [1, 1]} : vector<16x512xf32> to vector<16x128xf32>
    %94 = math.tanh %93 : vector<16x128xf32>
    %95 = vector.extract_strided_slice %80 {offsets = [0, 384], sizes = [16, 128], strides = [1, 1]} : vector<16x512xf32> to vector<16x128xf32>
    %96 = arith.negf %95 : vector<16x128xf32>
    %97 = math.exp %96 : vector<16x128xf32>
    %cst_28 = arith.constant 1.000000e+00 : f32
    %98 = vector.broadcast %cst_28 : f32 to vector<16x128xf32>
    %99 = arith.addf %98, %97 : vector<16x128xf32>
    %100 = arith.divf %98, %99 : vector<16x128xf32>
    %101 = arith.mulf %92, %0 : vector<16x128xf32>
    %102 = arith.mulf %86, %94 : vector<16x128xf32>
    %103 = arith.addf %101, %102 : vector<16x128xf32>
    %104 = math.tanh %103 : vector<16x128xf32>
    %105 = arith.mulf %100, %104 : vector<16x128xf32>
    %106 = vector.extract_strided_slice %75 {offsets = [16, 0], sizes = [16, 512], strides = [1, 1]} : vector<32x512xf32> to vector<16x512xf32>
    %107 = arith.truncf %105 : vector<16x128xf32> to vector<16x128xbf16>
    %cst_29 = arith.constant dense<0.000000e+00> : vector<16x512xf32>
    %108 = tpu.matmul %107, %76, %cst_29 {dimension_numbers = #tpu.dot_dimension_numbers<[1], [0], [0], [1], [0, 0, 1, 1], [], []>} : vector<16x128xbf16>, vector<128x512xbf16>, vector<16x512xf32> -> vector<16x512xf32>
    %109 = arith.addf %106, %108 : vector<16x512xf32>
    %110 = vector.extract_strided_slice %109 {offsets = [0, 0], sizes = [16, 128], strides = [1, 1]} : vector<16x512xf32> to vector<16x128xf32>
    %111 = arith.negf %110 : vector<16x128xf32>
    %112 = math.exp %111 : vector<16x128xf32>
    %cst_30 = arith.constant 1.000000e+00 : f32
    %113 = vector.broadcast %cst_30 : f32 to vector<16x128xf32>
    %114 = arith.addf %113, %112 : vector<16x128xf32>
    %115 = arith.divf %113, %114 : vector<16x128xf32>
    %116 = vector.extract_strided_slice %109 {offsets = [0, 128], sizes = [16, 128], strides = [1, 1]} : vector<16x512xf32> to vector<16x128xf32>
    %117 = arith.negf %116 : vector<16x128xf32>
    %118 = math.exp %117 : vector<16x128xf32>
    %cst_31 = arith.constant 1.000000e+00 : f32
    %119 = vector.broadcast %cst_31 : f32 to vector<16x128xf32>
    %120 = arith.addf %119, %118 : vector<16x128xf32>
    %121 = arith.divf %119, %120 : vector<16x128xf32>
    %122 = vector.extract_strided_slice %109 {offsets = [0, 256], sizes = [16, 128], strides = [1, 1]} : vector<16x512xf32> to vector<16x128xf32>
    %123 = math.tanh %122 : vector<16x128xf32>
    %124 = vector.extract_strided_slice %109 {offsets = [0, 384], sizes = [16, 128], strides = [1, 1]} : vector<16x512xf32> to vector<16x128xf32>
    %125 = arith.negf %124 : vector<16x128xf32>
    %126 = math.exp %125 : vector<16x128xf32>
    %cst_32 = arith.constant 1.000000e+00 : f32
    %127 = vector.broadcast %cst_32 : f32 to vector<16x128xf32>
    %128 = arith.addf %127, %126 : vector<16x128xf32>
    %129 = arith.divf %127, %128 : vector<16x128xf32>
    %130 = arith.mulf %121, %103 : vector<16x128xf32>
    %131 = arith.mulf %115, %123 : vector<16x128xf32>
    %132 = arith.addf %130, %131 : vector<16x128xf32>
    %133 = math.tanh %132 : vector<16x128xf32>
    %134 = arith.mulf %129, %133 : vector<16x128xf32>
    %135 = tpu.concatenate %105, %134 in 0 : vector<16x128xf32>, vector<16x128xf32> -> vector<32x128xf32>
    %c0_33 = arith.constant 0 : index
    %c0_34 = arith.constant 0 : index
    %136 = vector.load %arg8[%c0_33, %c0_34] : memref<128x128xbf16, #tpu.memory_space<vmem>>, vector<128x128xbf16>
    %137 = arith.truncf %135 : vector<32x128xf32> to vector<32x128xbf16>
    %cst_35 = arith.constant dense<0.000000e+00> : vector<32x128xf32>
    %138 = tpu.matmul %137, %136, %cst_35 {dimension_numbers = #tpu.dot_dimension_numbers<[1], [0], [0], [1], [0, 0, 1, 1], [], []>} : vector<32x128xbf16>, vector<128x128xbf16>, vector<32x128xf32> -> vector<32x128xf32>
    %c0_36 = arith.constant 0 : index
    %c0_37 = arith.constant 0 : index
    %139 = vector.load %arg9[%c0_36, %c0_37] : memref<1x128xf32, #tpu.memory_space<vmem>>, vector<1x128xf32>
    %140 = vector.broadcast %139 : vector<1x128xf32> to vector<32x128xf32>
    %141 = arith.addf %138, %140 : vector<32x128xf32>
    %142 = math.tanh %141 : vector<32x128xf32>
    %143 = tpu.concatenate %68, %134 in 0 : vector<16x128xf32>, vector<16x128xf32> -> vector<32x128xf32>
    %c0_38 = arith.constant 0 : index
    %c0_39 = arith.constant 0 : index
    %144 = vector.load %arg10[%c0_38, %c0_39] : memref<128x128xbf16, #tpu.memory_space<vmem>>, vector<128x128xbf16>
    %145 = arith.truncf %143 : vector<32x128xf32> to vector<32x128xbf16>
    %cst_40 = arith.constant dense<0.000000e+00> : vector<32x128xf32>
    %146 = tpu.matmul %145, %144, %cst_40 {dimension_numbers = #tpu.dot_dimension_numbers<[1], [0], [0], [1], [0, 0, 1, 1], [], []>} : vector<32x128xbf16>, vector<128x128xbf16>, vector<32x128xf32> -> vector<32x128xf32>
    %c0_41 = arith.constant 0 : index
    %c0_42 = arith.constant 0 : index
    %147 = vector.load %arg11[%c0_41, %c0_42] : memref<1x128xf32, #tpu.memory_space<vmem>>, vector<1x128xf32>
    %148 = vector.broadcast %147 : vector<1x128xf32> to vector<32x128xf32>
    %149 = arith.addf %146, %148 : vector<32x128xf32>
    %150 = math.tanh %149 : vector<32x128xf32>
    %151 = vector.extract_strided_slice %150 {offsets = [0, 0], sizes = [16, 128], strides = [1, 1]} : vector<32x128xf32> to vector<16x128xf32>
    %152 = vector.extract_strided_slice %150 {offsets = [16, 0], sizes = [16, 128], strides = [1, 1]} : vector<32x128xf32> to vector<16x128xf32>
    %c0_43 = arith.constant 0 : index
    %c0_44 = arith.constant 0 : index
    %153 = vector.load %arg12[%c0_43, %c0_44] : memref<128x512xbf16, #tpu.memory_space<vmem>>, vector<128x512xbf16>
    %154 = arith.truncf %142 : vector<32x128xf32> to vector<32x128xbf16>
    %cst_45 = arith.constant dense<0.000000e+00> : vector<32x512xf32>
    %155 = tpu.matmul %154, %153, %cst_45 {dimension_numbers = #tpu.dot_dimension_numbers<[1], [0], [0], [1], [0, 0, 1, 1], [], []>} : vector<32x128xbf16>, vector<128x512xbf16>, vector<32x512xf32> -> vector<32x512xf32>
    %c0_46 = arith.constant 0 : index
    %c0_47 = arith.constant 0 : index
    %156 = vector.load %arg14[%c0_46, %c0_47] : memref<1x512xf32, #tpu.memory_space<vmem>>, vector<1x512xf32>
    %157 = vector.broadcast %156 : vector<1x512xf32> to vector<32x512xf32>
    %158 = arith.addf %155, %157 : vector<32x512xf32>
    %c0_48 = arith.constant 0 : index
    %c0_49 = arith.constant 0 : index
    %159 = vector.load %arg13[%c0_48, %c0_49] : memref<128x512xbf16, #tpu.memory_space<vmem>>, vector<128x512xbf16>
    %160 = vector.extract_strided_slice %158 {offsets = [0, 0], sizes = [16, 512], strides = [1, 1]} : vector<32x512xf32> to vector<16x512xf32>
    %161 = arith.truncf %151 : vector<16x128xf32> to vector<16x128xbf16>
    %cst_50 = arith.constant dense<0.000000e+00> : vector<16x512xf32>
    %162 = tpu.matmul %161, %159, %cst_50 {dimension_numbers = #tpu.dot_dimension_numbers<[1], [0], [0], [1], [0, 0, 1, 1], [], []>} : vector<16x128xbf16>, vector<128x512xbf16>, vector<16x512xf32> -> vector<16x512xf32>
    %163 = arith.addf %160, %162 : vector<16x512xf32>
    %164 = vector.extract_strided_slice %163 {offsets = [0, 0], sizes = [16, 128], strides = [1, 1]} : vector<16x512xf32> to vector<16x128xf32>
    %165 = arith.negf %164 : vector<16x128xf32>
    %166 = math.exp %165 : vector<16x128xf32>
    %cst_51 = arith.constant 1.000000e+00 : f32
    %167 = vector.broadcast %cst_51 : f32 to vector<16x128xf32>
    %168 = arith.addf %167, %166 : vector<16x128xf32>
    %169 = arith.divf %167, %168 : vector<16x128xf32>
    %170 = vector.extract_strided_slice %163 {offsets = [0, 128], sizes = [16, 128], strides = [1, 1]} : vector<16x512xf32> to vector<16x128xf32>
    %171 = arith.negf %170 : vector<16x128xf32>
    %172 = math.exp %171 : vector<16x128xf32>
    %cst_52 = arith.constant 1.000000e+00 : f32
    %173 = vector.broadcast %cst_52 : f32 to vector<16x128xf32>
    %174 = arith.addf %173, %172 : vector<16x128xf32>
    %175 = arith.divf %173, %174 : vector<16x128xf32>
    %176 = vector.extract_strided_slice %163 {offsets = [0, 256], sizes = [16, 128], strides = [1, 1]} : vector<16x512xf32> to vector<16x128xf32>
    %177 = math.tanh %176 : vector<16x128xf32>
    %178 = vector.extract_strided_slice %163 {offsets = [0, 384], sizes = [16, 128], strides = [1, 1]} : vector<16x512xf32> to vector<16x128xf32>
    %179 = arith.negf %178 : vector<16x128xf32>
    %180 = math.exp %179 : vector<16x128xf32>
    %cst_53 = arith.constant 1.000000e+00 : f32
    %181 = vector.broadcast %cst_53 : f32 to vector<16x128xf32>
    %182 = arith.addf %181, %180 : vector<16x128xf32>
    %183 = arith.divf %181, %182 : vector<16x128xf32>
    %184 = arith.mulf %175, %1 : vector<16x128xf32>
    %185 = arith.mulf %169, %177 : vector<16x128xf32>
    %186 = arith.addf %184, %185 : vector<16x128xf32>
    %187 = math.tanh %186 : vector<16x128xf32>
    %188 = arith.mulf %183, %187 : vector<16x128xf32>
    %189 = vector.extract_strided_slice %158 {offsets = [16, 0], sizes = [16, 512], strides = [1, 1]} : vector<32x512xf32> to vector<16x512xf32>
    %190 = arith.truncf %188 : vector<16x128xf32> to vector<16x128xbf16>
    %cst_54 = arith.constant dense<0.000000e+00> : vector<16x512xf32>
    %191 = tpu.matmul %190, %159, %cst_54 {dimension_numbers = #tpu.dot_dimension_numbers<[1], [0], [0], [1], [0, 0, 1, 1], [], []>} : vector<16x128xbf16>, vector<128x512xbf16>, vector<16x512xf32> -> vector<16x512xf32>
    %192 = arith.addf %189, %191 : vector<16x512xf32>
    %193 = vector.extract_strided_slice %192 {offsets = [0, 0], sizes = [16, 128], strides = [1, 1]} : vector<16x512xf32> to vector<16x128xf32>
    %194 = arith.negf %193 : vector<16x128xf32>
    %195 = math.exp %194 : vector<16x128xf32>
    %cst_55 = arith.constant 1.000000e+00 : f32
    %196 = vector.broadcast %cst_55 : f32 to vector<16x128xf32>
    %197 = arith.addf %196, %195 : vector<16x128xf32>
    %198 = arith.divf %196, %197 : vector<16x128xf32>
    %199 = vector.extract_strided_slice %192 {offsets = [0, 128], sizes = [16, 128], strides = [1, 1]} : vector<16x512xf32> to vector<16x128xf32>
    %200 = arith.negf %199 : vector<16x128xf32>
    %201 = math.exp %200 : vector<16x128xf32>
    %cst_56 = arith.constant 1.000000e+00 : f32
    %202 = vector.broadcast %cst_56 : f32 to vector<16x128xf32>
    %203 = arith.addf %202, %201 : vector<16x128xf32>
    %204 = arith.divf %202, %203 : vector<16x128xf32>
    %205 = vector.extract_strided_slice %192 {offsets = [0, 256], sizes = [16, 128], strides = [1, 1]} : vector<16x512xf32> to vector<16x128xf32>
    %206 = math.tanh %205 : vector<16x128xf32>
    %207 = vector.extract_strided_slice %192 {offsets = [0, 384], sizes = [16, 128], strides = [1, 1]} : vector<16x512xf32> to vector<16x128xf32>
    %208 = arith.negf %207 : vector<16x128xf32>
    %209 = math.exp %208 : vector<16x128xf32>
    %cst_57 = arith.constant 1.000000e+00 : f32
    %210 = vector.broadcast %cst_57 : f32 to vector<16x128xf32>
    %211 = arith.addf %210, %209 : vector<16x128xf32>
    %212 = arith.divf %210, %211 : vector<16x128xf32>
    %213 = arith.mulf %204, %186 : vector<16x128xf32>
    %214 = arith.mulf %198, %206 : vector<16x128xf32>
    %215 = arith.addf %213, %214 : vector<16x128xf32>
    %216 = math.tanh %215 : vector<16x128xf32>
    %217 = arith.mulf %212, %216 : vector<16x128xf32>
    %218 = tpu.concatenate %188, %217 in 0 : vector<16x128xf32>, vector<16x128xf32> -> vector<32x128xf32>
    %c0_58 = arith.constant 0 : index
    %c0_59 = arith.constant 0 : index
    %219 = vector.load %arg15[%c0_58, %c0_59] : memref<128x512xbf16, #tpu.memory_space<vmem>>, vector<128x512xbf16>
    %220 = arith.truncf %218 : vector<32x128xf32> to vector<32x128xbf16>
    %cst_60 = arith.constant dense<0.000000e+00> : vector<32x512xf32>
    %221 = tpu.matmul %220, %219, %cst_60 {dimension_numbers = #tpu.dot_dimension_numbers<[1], [0], [0], [1], [0, 0, 1, 1], [], []>} : vector<32x128xbf16>, vector<128x512xbf16>, vector<32x512xf32> -> vector<32x512xf32>
    %c0_61 = arith.constant 0 : index
    %c0_62 = arith.constant 0 : index
    %222 = vector.load %arg17[%c0_61, %c0_62] : memref<1x512xf32, #tpu.memory_space<vmem>>, vector<1x512xf32>
    %223 = vector.broadcast %222 : vector<1x512xf32> to vector<32x512xf32>
    %224 = arith.addf %221, %223 : vector<32x512xf32>
    %c0_63 = arith.constant 0 : index
    %c0_64 = arith.constant 0 : index
    %225 = vector.load %arg16[%c0_63, %c0_64] : memref<128x512xbf16, #tpu.memory_space<vmem>>, vector<128x512xbf16>
    %226 = vector.extract_strided_slice %224 {offsets = [0, 0], sizes = [16, 512], strides = [1, 1]} : vector<32x512xf32> to vector<16x512xf32>
    %227 = arith.truncf %152 : vector<16x128xf32> to vector<16x128xbf16>
    %cst_65 = arith.constant dense<0.000000e+00> : vector<16x512xf32>
    %228 = tpu.matmul %227, %225, %cst_65 {dimension_numbers = #tpu.dot_dimension_numbers<[1], [0], [0], [1], [0, 0, 1, 1], [], []>} : vector<16x128xbf16>, vector<128x512xbf16>, vector<16x512xf32> -> vector<16x512xf32>
    %229 = arith.addf %226, %228 : vector<16x512xf32>
    %230 = vector.extract_strided_slice %229 {offsets = [0, 0], sizes = [16, 128], strides = [1, 1]} : vector<16x512xf32> to vector<16x128xf32>
    %231 = arith.negf %230 : vector<16x128xf32>
    %232 = math.exp %231 : vector<16x128xf32>
    %cst_66 = arith.constant 1.000000e+00 : f32
    %233 = vector.broadcast %cst_66 : f32 to vector<16x128xf32>
    %234 = arith.addf %233, %232 : vector<16x128xf32>
    %235 = arith.divf %233, %234 : vector<16x128xf32>
    %236 = vector.extract_strided_slice %229 {offsets = [0, 128], sizes = [16, 128], strides = [1, 1]} : vector<16x512xf32> to vector<16x128xf32>
    %237 = arith.negf %236 : vector<16x128xf32>
    %238 = math.exp %237 : vector<16x128xf32>
    %cst_67 = arith.constant 1.000000e+00 : f32
    %239 = vector.broadcast %cst_67 : f32 to vector<16x128xf32>
    %240 = arith.addf %239, %238 : vector<16x128xf32>
    %241 = arith.divf %239, %240 : vector<16x128xf32>
    %242 = vector.extract_strided_slice %229 {offsets = [0, 256], sizes = [16, 128], strides = [1, 1]} : vector<16x512xf32> to vector<16x128xf32>
    %243 = math.tanh %242 : vector<16x128xf32>
    %244 = vector.extract_strided_slice %229 {offsets = [0, 384], sizes = [16, 128], strides = [1, 1]} : vector<16x512xf32> to vector<16x128xf32>
    %245 = arith.negf %244 : vector<16x128xf32>
    %246 = math.exp %245 : vector<16x128xf32>
    %cst_68 = arith.constant 1.000000e+00 : f32
    %247 = vector.broadcast %cst_68 : f32 to vector<16x128xf32>
    %248 = arith.addf %247, %246 : vector<16x128xf32>
    %249 = arith.divf %247, %248 : vector<16x128xf32>
    %250 = arith.mulf %241, %1 : vector<16x128xf32>
    %251 = arith.mulf %235, %243 : vector<16x128xf32>
    %252 = arith.addf %250, %251 : vector<16x128xf32>
    %253 = math.tanh %252 : vector<16x128xf32>
    %254 = arith.mulf %249, %253 : vector<16x128xf32>
    %255 = vector.extract_strided_slice %224 {offsets = [16, 0], sizes = [16, 512], strides = [1, 1]} : vector<32x512xf32> to vector<16x512xf32>
    %256 = arith.truncf %254 : vector<16x128xf32> to vector<16x128xbf16>
    %cst_69 = arith.constant dense<0.000000e+00> : vector<16x512xf32>
    %257 = tpu.matmul %256, %225, %cst_69 {dimension_numbers = #tpu.dot_dimension_numbers<[1], [0], [0], [1], [0, 0, 1, 1], [], []>} : vector<16x128xbf16>, vector<128x512xbf16>, vector<16x512xf32> -> vector<16x512xf32>
    %258 = arith.addf %255, %257 : vector<16x512xf32>
    %259 = vector.extract_strided_slice %258 {offsets = [0, 0], sizes = [16, 128], strides = [1, 1]} : vector<16x512xf32> to vector<16x128xf32>
    %260 = arith.negf %259 : vector<16x128xf32>
    %261 = math.exp %260 : vector<16x128xf32>
    %cst_70 = arith.constant 1.000000e+00 : f32
    %262 = vector.broadcast %cst_70 : f32 to vector<16x128xf32>
    %263 = arith.addf %262, %261 : vector<16x128xf32>
    %264 = arith.divf %262, %263 : vector<16x128xf32>
    %265 = vector.extract_strided_slice %258 {offsets = [0, 128], sizes = [16, 128], strides = [1, 1]} : vector<16x512xf32> to vector<16x128xf32>
    %266 = arith.negf %265 : vector<16x128xf32>
    %267 = math.exp %266 : vector<16x128xf32>
    %cst_71 = arith.constant 1.000000e+00 : f32
    %268 = vector.broadcast %cst_71 : f32 to vector<16x128xf32>
    %269 = arith.addf %268, %267 : vector<16x128xf32>
    %270 = arith.divf %268, %269 : vector<16x128xf32>
    %271 = vector.extract_strided_slice %258 {offsets = [0, 256], sizes = [16, 128], strides = [1, 1]} : vector<16x512xf32> to vector<16x128xf32>
    %272 = math.tanh %271 : vector<16x128xf32>
    %273 = vector.extract_strided_slice %258 {offsets = [0, 384], sizes = [16, 128], strides = [1, 1]} : vector<16x512xf32> to vector<16x128xf32>
    %274 = arith.negf %273 : vector<16x128xf32>
    %275 = math.exp %274 : vector<16x128xf32>
    %cst_72 = arith.constant 1.000000e+00 : f32
    %276 = vector.broadcast %cst_72 : f32 to vector<16x128xf32>
    %277 = arith.addf %276, %275 : vector<16x128xf32>
    %278 = arith.divf %276, %277 : vector<16x128xf32>
    %279 = arith.mulf %270, %252 : vector<16x128xf32>
    %280 = arith.mulf %264, %272 : vector<16x128xf32>
    %281 = arith.addf %279, %280 : vector<16x128xf32>
    %282 = math.tanh %281 : vector<16x128xf32>
    %283 = arith.mulf %278, %282 : vector<16x128xf32>
    %284 = tpu.concatenate %254, %283 in 0 : vector<16x128xf32>, vector<16x128xf32> -> vector<32x128xf32>
    %c0_73 = arith.constant 0 : index
    %c0_74 = arith.constant 0 : index
    %285 = vector.load %arg18[%c0_73, %c0_74] : memref<128x8xbf16, #tpu.memory_space<vmem>>, vector<128x8xbf16>
    %286 = arith.truncf %284 : vector<32x128xf32> to vector<32x128xbf16>
    %cst_75 = arith.constant dense<0.000000e+00> : vector<32x8xf32>
    %287 = tpu.matmul %286, %285, %cst_75 {dimension_numbers = #tpu.dot_dimension_numbers<[1], [0], [0], [1], [0, 0, 1, 1], [], []>} : vector<32x128xbf16>, vector<128x8xbf16>, vector<32x8xf32> -> vector<32x8xf32>
    %c0_76 = arith.constant 0 : index
    %c0_77 = arith.constant 0 : index
    %288 = vector.load %arg19[%c0_76, %c0_77] : memref<1x8xf32, #tpu.memory_space<vmem>>, vector<1x8xf32>
    %289 = vector.broadcast %288 : vector<1x8xf32> to vector<32x8xf32>
    %290 = arith.addf %287, %289 : vector<32x8xf32>
    %291 = vector.extract_strided_slice %290 {offsets = [0, 0], sizes = [16, 8], strides = [1, 1]} : vector<32x8xf32> to vector<16x8xf32>
    %292 = vector.extract_strided_slice %290 {offsets = [16, 0], sizes = [16, 8], strides = [1, 1]} : vector<32x8xf32> to vector<16x8xf32>
    %293 = arith.maximumf %291, %292 : vector<16x8xf32>
    %294 = arith.subf %291, %293 : vector<16x8xf32>
    %295 = math.exp %294 : vector<16x8xf32>
    %296 = arith.subf %292, %293 : vector<16x8xf32>
    %297 = math.exp %296 : vector<16x8xf32>
    %298 = arith.addf %295, %297 : vector<16x8xf32>
    %299 = tpu.reciprocal %298 {approx = true} : vector<16x8xf32> -> vector<16x8xf32>
    %300 = arith.mulf %295, %299 : vector<16x8xf32>
    %301 = arith.mulf %297, %299 : vector<16x8xf32>
    %302 = tpu.concatenate %300, %301 in 0 : vector<16x8xf32>, vector<16x8xf32> -> vector<32x8xf32>
    %c0_78 = arith.constant 0 : index
    %c0_79 = arith.constant 0 : index
    %c0_80 = arith.constant 0 : index
    %303 = vector.load %arg20[%c0_78, %c0_79, %c0_80] : memref<1x32x8xf32, #tpu.memory_space<vmem>>, vector<1x32x8xf32>
    %304 = vector.shape_cast %303 : vector<1x32x8xf32> to vector<32x8xf32>
    %305 = vector.shape_cast %302 : vector<32x8xf32> to vector<1x32x8xf32>
    tpu.vector_store %arg20[%c0_78, %c0_79, %c0_80], %305 {strides = array<i32>} : memref<1x32x8xf32, #tpu.memory_space<vmem>>, vector<1x32x8xf32>,
    return
  }
  func.func @transform_0(%arg0: i32) -> (i32, i32, i32) {
    %c0_i32 = arith.constant 0 : i32
    %c0_i32_0 = arith.constant 0 : i32
    %c0_i32_1 = arith.constant 0 : i32
    return %arg0, %c0_i32, %c0_i32_0 : i32, i32, i32
  }
  func.func @transform_1(%arg0: i32) -> (i32, i32) {
    %c0_i32 = arith.constant 0 : i32
    %c0_i32_0 = arith.constant 0 : i32
    %c0_i32_1 = arith.constant 0 : i32
    return %c0_i32, %c0_i32_0 : i32, i32
  }
  func.func @transform_2(%arg0: i32) -> (i32, i32) {
    %c0_i32 = arith.constant 0 : i32
    %c0_i32_0 = arith.constant 0 : i32
    %c0_i32_1 = arith.constant 0 : i32
    return %c0_i32, %c0_i32_0 : i32, i32
  }
  func.func @transform_3(%arg0: i32) -> (i32, i32) {
    %c0_i32 = arith.constant 0 : i32
    %c0_i32_0 = arith.constant 0 : i32
    %c0_i32_1 = arith.constant 0 : i32
    return %c0_i32, %c0_i32_0 : i32, i32
  }
  func.func @transform_4(%arg0: i32) -> (i32, i32) {
    %c0_i32 = arith.constant 0 : i32
    %c0_i32_0 = arith.constant 0 : i32
    %c0_i32_1 = arith.constant 0 : i32
    return %c0_i32, %c0_i32_0 : i32, i32
  }
  func.func @transform_5(%arg0: i32) -> (i32, i32) {
    %c0_i32 = arith.constant 0 : i32
    %c0_i32_0 = arith.constant 0 : i32
    %c0_i32_1 = arith.constant 0 : i32
    return %c0_i32, %c0_i32_0 : i32, i32
  }
  func.func @transform_6(%arg0: i32) -> (i32, i32) {
    %c0_i32 = arith.constant 0 : i32
    %c0_i32_0 = arith.constant 0 : i32
    %c0_i32_1 = arith.constant 0 : i32
    return %c0_i32, %c0_i32_0 : i32, i32
  }
  func.func @transform_7(%arg0: i32) -> (i32, i32) {
    %c0_i32 = arith.constant 0 : i32
    %c0_i32_0 = arith.constant 0 : i32
    %c0_i32_1 = arith.constant 0 : i32
    return %c0_i32, %c0_i32_0 : i32, i32
  }
  func.func @transform_8(%arg0: i32) -> (i32, i32) {
    %c0_i32 = arith.constant 0 : i32
    %c0_i32_0 = arith.constant 0 : i32
    %c0_i32_1 = arith.constant 0 : i32
    return %c0_i32, %c0_i32_0 : i32, i32
  }
  func.func @transform_9(%arg0: i32) -> (i32, i32) {
    %c0_i32 = arith.constant 0 : i32
    %c0_i32_0 = arith.constant 0 : i32
    %c0_i32_1 = arith.constant 0 : i32
    return %c0_i32, %c0_i32_0 : i32, i32
  }
  func.func @transform_10(%arg0: i32) -> (i32, i32) {
    %c0_i32 = arith.constant 0 : i32
    %c0_i32_0 = arith.constant 0 : i32
    %c0_i32_1 = arith.constant 0 : i32
    return %c0_i32, %c0_i32_0 : i32, i32
  }
  func.func @transform_11(%arg0: i32) -> (i32, i32) {
    %c0_i32 = arith.constant 0 : i32
    %c0_i32_0 = arith.constant 0 : i32
    %c0_i32_1 = arith.constant 0 : i32
    return %c0_i32, %c0_i32_0 : i32, i32
  }
  func.func @transform_12(%arg0: i32) -> (i32, i32) {
    %c0_i32 = arith.constant 0 : i32
    %c0_i32_0 = arith.constant 0 : i32
    %c0_i32_1 = arith.constant 0 : i32
    return %c0_i32, %c0_i32_0 : i32, i32
  }
  func.func @transform_13(%arg0: i32) -> (i32, i32) {
    %c0_i32 = arith.constant 0 : i32
    %c0_i32_0 = arith.constant 0 : i32
    %c0_i32_1 = arith.constant 0 : i32
    return %c0_i32, %c0_i32_0 : i32, i32
  }
  func.func @transform_14(%arg0: i32) -> (i32, i32) {
    %c0_i32 = arith.constant 0 : i32
    %c0_i32_0 = arith.constant 0 : i32
    %c0_i32_1 = arith.constant 0 : i32
    return %c0_i32, %c0_i32_0 : i32, i32
  }
  func.func @transform_15(%arg0: i32) -> (i32, i32) {
    %c0_i32 = arith.constant 0 : i32
    %c0_i32_0 = arith.constant 0 : i32
    %c0_i32_1 = arith.constant 0 : i32
    return %c0_i32, %c0_i32_0 : i32, i32
  }
  func.func @transform_16(%arg0: i32) -> (i32, i32) {
    %c0_i32 = arith.constant 0 : i32
    %c0_i32_0 = arith.constant 0 : i32
    %c0_i32_1 = arith.constant 0 : i32
    return %c0_i32, %c0_i32_0 : i32, i32
  }
  func.func @transform_17(%arg0: i32) -> (i32, i32) {
    %c0_i32 = arith.constant 0 : i32
    %c0_i32_0 = arith.constant 0 : i32
    %c0_i32_1 = arith.constant 0 : i32
    return %c0_i32, %c0_i32_0 : i32, i32
  }
  func.func @transform_18(%arg0: i32) -> (i32, i32) {
    %c0_i32 = arith.constant 0 : i32
    %c0_i32_0 = arith.constant 0 : i32
    %c0_i32_1 = arith.constant 0 : i32
    return %c0_i32, %c0_i32_0 : i32, i32
  }
  func.func @transform_19(%arg0: i32) -> (i32, i32, i32) {
    %c0_i32 = arith.constant 0 : i32
    %c0_i32_0 = arith.constant 0 : i32
    %c0_i32_1 = arith.constant 0 : i32
    return %arg0, %c0_i32, %c0_i32_0 : i32, i32, i32
  }
}

</mosaic_0001>

<llo_original>
// kernel: tpu_custom_call.1
$region0: #{tpu_custom_call.1}
  #allocation0 [shape = 'u32[]', space=smem, size = 0x4, offset = 0x4, fixed_abs, tag = 'smem constant byte address 0x4 - core index']
  #allocation1 [shape = 'u32[144,128]{1,0:T(1,128)}', space=vmem, size = 0x12000, scoped, tag = 'internal scratch']
  %s0 = inlined_call_operand.vmem [shape: f32[1,32,8], index: 0, kind: input, shape index: {}]
  %s1 = inlined_call_operand.vmem [shape: bf16[8,512], index: 1, kind: input, shape index: {}]
  %s2 = inlined_call_operand.hbm [shape: bf16[128,512], index: 2, kind: input, shape index: {}]
  %s3 = inlined_call_operand.vmem [shape: f32[1,512], index: 3, kind: input, shape index: {}]
  %s4 = inlined_call_operand.hbm [shape: bf16[128,512], index: 4, kind: input, shape index: {}]
  %s5 = inlined_call_operand.hbm [shape: bf16[128,512], index: 5, kind: input, shape index: {}]
  %s6 = inlined_call_operand.vmem [shape: f32[1,512], index: 6, kind: input, shape index: {}]
  %s7 = inlined_call_operand.vmem [shape: bf16[128,128], index: 7, kind: input, shape index: {}]
  %s8 = inlined_call_operand.vmem [shape: f32[1,128], index: 8, kind: input, shape index: {}]
  %s9 = inlined_call_operand.hbm [shape: bf16[128,128], index: 9, kind: input, shape index: {}]
  %s10 = inlined_call_operand.vmem [shape: f32[1,128], index: 10, kind: input, shape index: {}]
  %s11 = inlined_call_operand.hbm [shape: bf16[128,512], index: 11, kind: input, shape index: {}]
  %s12 = inlined_call_operand.hbm [shape: bf16[128,512], index: 12, kind: input, shape index: {}]
  %s13 = inlined_call_operand.vmem [shape: f32[1,512], index: 13, kind: input, shape index: {}]
  %s14 = inlined_call_operand.hbm [shape: bf16[128,512], index: 14, kind: input, shape index: {}]
  %s15 = inlined_call_operand.hbm [shape: bf16[128,512], index: 15, kind: input, shape index: {}]
  %s16 = inlined_call_operand.vmem [shape: f32[1,512], index: 16, kind: input, shape index: {}]
  %s17 = inlined_call_operand.vmem [shape: bf16[128,8], index: 17, kind: input, shape index: {}]
  %s18 = inlined_call_operand.vmem [shape: f32[1,8], index: 18, kind: input, shape index: {}]
  %s19 = inlined_call_operand.vmem [shape: f32[1,32,8], index: 19, kind: output, shape index: {}]
  %s20 = sld [smem:[#allocation0]]
  $region118: #{tpu_custom_call.1} parent=0
    _
  %s22 = ssub.s32 1, %s20
  %s23 = scalar_select 0, %s22, %s20
  $region1: #{tpu_custom_call.1} parent=0
    #allocation2 [shape = 'u8[131072]{0}', space=vmem, size = 0x20000, scoped, tag = 'input window, operand 2, single buffered']
    #allocation3 [shape = 's32[1]{0}', space=sflag, size = 0x4, scoped, tag = 'scoped memory for tpu_custom_call.1']
    #allocation4 [shape = 'u8[131072]{0}', space=vmem, size = 0x20000, scoped, tag = 'input window, operand 4, single buffered']
    #allocation5 [shape = 's32[1]{0}', space=sflag, size = 0x4, scoped, tag = 'scoped memory for tpu_custom_call.1']
    #allocation6 [shape = 'u8[131072]{0}', space=vmem, size = 0x20000, scoped, tag = 'input window, operand 5, single buffered']
    #allocation7 [shape = 'u8[32768]{0}', space=vmem, size = 0x8000, scoped, tag = 'input window, operand 9, single buffered']
    #allocation8 [shape = 's32[1]{0}', space=sflag, size = 0x4, scoped, tag = 'scoped memory for tpu_custom_call.1']
    #allocation9 [shape = 'u8[131072]{0}', space=vmem, size = 0x20000, scoped, tag = 'input window, operand 11, single buffered']
    #allocation10 [shape = 'u8[131072]{0}', space=vmem, size = 0x20000, scoped, tag = 'input window, operand 12, single buffered']
    #allocation11 [shape = 's32[1]{0}', space=sflag, size = 0x4, scoped, tag = 'scoped memory for tpu_custom_call.1']
    #allocation12 [shape = 'u8[131072]{0}', space=vmem, size = 0x20000, scoped, tag = 'input window, operand 14, single buffered']
    #allocation13 [shape = 'u8[131072]{0}', space=vmem, size = 0x20000, scoped, tag = 'input window, operand 15, single buffered']
    #allocation14 [shape = 's32[1]{0}', space=sflag, size = 0x4, scoped, tag = 'scoped memory for tpu_custom_call.1']
    %24 = vsyncpa [#allocation3], 0
    %25 = vsyncpa [#allocation5], 0
    %26 = vsyncpa [#allocation8], 0
    %27 = vsyncpa [#allocation11], 0
    %28 = vsyncpa [#allocation14], 0
    // Predicated region
    $region2: #{tpu_custom_call.1} parent=1 // pred_check
      _
    $region3: #{tpu_custom_call.1} parent=1 // pred_check_branch
      %30 = sbr.rel (0) target = $region5
    $region4: #{tpu_custom_call.1} parent=1 // pred_region
      _
    $region5: #{tpu_custom_call.1} parent=1 // pred_fallthru
      _
    // Predicated region
    $region6: #{tpu_custom_call.1} parent=1 // pred_check
      _
    $region7: #{tpu_custom_call.1} parent=1 // pred_check_branch
      %32 = sbr.rel (0) target = $region9
    $region8: #{tpu_custom_call.1} parent=1 // pred_region
      _
    $region9: #{tpu_custom_call.1} parent=1 // pred_fallthru
      _
    // Predicated region
    $region10: #{tpu_custom_call.1} parent=1 // pred_check
      _
    $region11: #{tpu_custom_call.1} parent=1 // pred_check_branch
      %34 = sbr.rel (0) target = $region13
    $region12: #{tpu_custom_call.1} parent=1 // pred_region
      %s36 = ssub.s32 4096, 4096
      %37 = vsyncadd [#allocation3], %s36
      %s38 = sshll.u32 [#allocation2], 4
      %s39 = int_to_ptr.vmem [resolvable:$true] %s38
      %44 = dma.hbm_to_vmem [thread:$0]  %s2, 4096, %s39, [#allocation3], 256, 256, 16
    $region13: #{tpu_custom_call.1} parent=1 // pred_fallthru
      _
    // Predicated region
    $region14: #{tpu_custom_call.1} parent=1 // pred_check
      _
    $region15: #{tpu_custom_call.1} parent=1 // pred_check_branch
      %46 = sbr.rel (0) target = $region17
    $region16: #{tpu_custom_call.1} parent=1 // pred_region
      _
    $region17: #{tpu_custom_call.1} parent=1 // pred_fallthru
      _
    // Predicated region
    $region18: #{tpu_custom_call.1} parent=1 // pred_check
      _
    $region19: #{tpu_custom_call.1} parent=1 // pred_check_branch
      %48 = sbr.rel (0) target = $region21
    $region20: #{tpu_custom_call.1} parent=1 // pred_region
      %s50 = ssub.s32 4096, 4096
      %51 = vsyncadd [#allocation5], %s50
      %s52 = sshll.u32 [#allocation4], 4
      %s53 = int_to_ptr.vmem [resolvable:$true] %s52
      %58 = dma.hbm_to_vmem [thread:$0]  %s4, 4096, %s53, [#allocation5], 256, 256, 16
    $region21: #{tpu_custom_call.1} parent=1 // pred_fallthru
      _
    // Predicated region
    $region22: #{tpu_custom_call.1} parent=1 // pred_check
      _
    $region23: #{tpu_custom_call.1} parent=1 // pred_check_branch
      %60 = sbr.rel (0) target = $region25
    $region24: #{tpu_custom_call.1} parent=1 // pred_region
      %s62 = ssub.s32 4096, 4096
      %63 = vsyncadd [#allocation5], %s62
      %s64 = sshll.u32 [#allocation6], 4
      %s65 = int_to_ptr.vmem [resolvable:$true] %s64
      %70 = dma.hbm_to_vmem [thread:$0]  %s5, 4096, %s65, [#allocation5], 256, 256, 16
    $region25: #{tpu_custom_call.1} parent=1 // pred_fallthru
      _
    // Predicated region
    $region26: #{tpu_custom_call.1} parent=1 // pred_check
      _
    $region27: #{tpu_custom_call.1} parent=1 // pred_check_branch
      %72 = sbr.rel (0) target = $region29
    $region28: #{tpu_custom_call.1} parent=1 // pred_region
      _
    $region29: #{tpu_custom_call.1} parent=1 // pred_fallthru
      _
    // Predicated region
    $region30: #{tpu_custom_call.1} parent=1 // pred_check
      _
    $region31: #{tpu_custom_call.1} parent=1 // pred_check_branch
      %74 = sbr.rel (0) target = $region33
    $region32: #{tpu_custom_call.1} parent=1 // pred_region
      _
    $region33: #{tpu_custom_call.1} parent=1 // pred_fallthru
      _
    // Predicated region
    $region34: #{tpu_custom_call.1} parent=1 // pred_check
      _
    $region35: #{tpu_custom_call.1} parent=1 // pred_check_branch
      %76 = sbr.rel (0) target = $region37
    $region36: #{tpu_custom_call.1} parent=1 // pred_region
      _
    $region37: #{tpu_custom_call.1} parent=1 // pred_fallthru
      _
    // Predicated region
    $region38: #{tpu_custom_call.1} parent=1 // pred_check
      _
    $region39: #{tpu_custom_call.1} parent=1 // pred_check_branch
      %78 = sbr.rel (0) target = $region41
    $region40: #{tpu_custom_call.1} parent=1 // pred_region
      %s80 = ssub.s32 1024, 1024
      %81 = vsyncadd [#allocation8], %s80
      %s82 = sshll.u32 [#allocation7], 4
      %s83 = int_to_ptr.vmem [resolvable:$true] %s82
      %88 = dma.hbm_to_vmem [thread:$0]  %s9, 1024, %s83, [#allocation8], 64, 64, 4
    $region41: #{tpu_custom_call.1} parent=1 // pred_fallthru
      _
    // Predicated region
    $region42: #{tpu_custom_call.1} parent=1 // pred_check
      _
    $region43: #{tpu_custom_call.1} parent=1 // pred_check_branch
      %90 = sbr.rel (0) target = $region45
    $region44: #{tpu_custom_call.1} parent=1 // pred_region
      _
    $region45: #{tpu_custom_call.1} parent=1 // pred_fallthru
      _
    // Predicated region
    $region46: #{tpu_custom_call.1} parent=1 // pred_check
      _
    $region47: #{tpu_custom_call.1} parent=1 // pred_check_branch
      %92 = sbr.rel (0) target = $region49
    $region48: #{tpu_custom_call.1} parent=1 // pred_region
      %s94 = ssub.s32 4096, 4096
      %95 = vsyncadd [#allocation8], %s94
      %s96 = sshll.u32 [#allocation9], 4
      %s97 = int_to_ptr.vmem [resolvable:$true] %s96
      %102 = dma.hbm_to_vmem [thread:$0]  %s11, 4096, %s97, [#allocation8], 256, 256, 16
    $region49: #{tpu_custom_call.1} parent=1 // pred_fallthru
      _
    // Predicated region
    $region50: #{tpu_custom_call.1} parent=1 // pred_check
      _
    $region51: #{tpu_custom_call.1} parent=1 // pred_check_branch
      %104 = sbr.rel (0) target = $region53
    $region52: #{tpu_custom_call.1} parent=1 // pred_region
      %s106 = ssub.s32 4096, 4096
      %107 = vsyncadd [#allocation11], %s106
      %s108 = sshll.u32 [#allocation10], 4
      %s109 = int_to_ptr.vmem [resolvable:$true] %s108
      %114 = dma.hbm_to_vmem [thread:$0]  %s12, 4096, %s109, [#allocation11], 256, 256, 16
    $region53: #{tpu_custom_call.1} parent=1 // pred_fallthru
      _
    // Predicated region
    $region54: #{tpu_custom_call.1} parent=1 // pred_check
      _
    $region55: #{tpu_custom_call.1} parent=1 // pred_check_branch
      %116 = sbr.rel (0) target = $region57
    $region56: #{tpu_custom_call.1} parent=1 // pred_region
      _
    $region57: #{tpu_custom_call.1} parent=1 // pred_fallthru
      _
    // Predicated region
    $region58: #{tpu_custom_call.1} parent=1 // pred_check
      _
    $region59: #{tpu_custom_call.1} parent=1 // pred_check_branch
      %118 = sbr.rel (0) target = $region61
    $region60: #{tpu_custom_call.1} parent=1 // pred_region
      %s120 = ssub.s32 4096, 4096
      %121 = vsyncadd [#allocation11], %s120
      %s122 = sshll.u32 [#allocation12], 4
      %s123 = int_to_ptr.vmem [resolvable:$true] %s122
      %128 = dma.hbm_to_vmem [thread:$0]  %s14, 4096, %s123, [#allocation11], 256, 256, 16
    $region61: #{tpu_custom_call.1} parent=1 // pred_fallthru
      _
    // Predicated region
    $region62: #{tpu_custom_call.1} parent=1 // pred_check
      _
    $region63: #{tpu_custom_call.1} parent=1 // pred_check_branch
      %130 = sbr.rel (0) target = $region65
    $region64: #{tpu_custom_call.1} parent=1 // pred_region
      %s132 = ssub.s32 4096, 4096
      %133 = vsyncadd [#allocation14], %s132
      %s134 = sshll.u32 [#allocation13], 4
      %s135 = int_to_ptr.vmem [resolvable:$true] %s134
      %140 = dma.hbm_to_vmem [thread:$0]  %s15, 4096, %s135, [#allocation14], 256, 256, 16
    $region65: #{tpu_custom_call.1} parent=1 // pred_fallthru
      _
    // Predicated region
    $region66: #{tpu_custom_call.1} parent=1 // pred_check
      _
    $region67: #{tpu_custom_call.1} parent=1 // pred_check_branch
      %142 = sbr.rel (0) target = $region69
    $region68: #{tpu_custom_call.1} parent=1 // pred_region
      _
    $region69: #{tpu_custom_call.1} parent=1 // pred_fallthru
      _
    // Predicated region
    $region70: #{tpu_custom_call.1} parent=1 // pred_check
      _
    $region71: #{tpu_custom_call.1} parent=1 // pred_check_branch
      %144 = sbr.rel (0) target = $region73
    $region72: #{tpu_custom_call.1} parent=1 // pred_region
      _
    $region73: #{tpu_custom_call.1} parent=1 // pred_fallthru
      _
    // Predicated region
    $region74: #{tpu_custom_call.1} parent=1 // pred_check
      _
    $region75: #{tpu_custom_call.1} parent=1 // pred_check_branch
      %146 = sbr.rel (0) target = $region77
    $region76: #{tpu_custom_call.1} parent=1 // pred_region
      _
    $region77: #{tpu_custom_call.1} parent=1 // pred_fallthru
      _
    // Predicated region
    $region78: #{tpu_custom_call.1} parent=1 // pred_check
      _
    $region79: #{tpu_custom_call.1} parent=1 // pred_check_branch
      %148 = sbr.rel (0) target = $region81
    $region80: #{tpu_custom_call.1} parent=1 // pred_region
      %149 = dma.done [#allocation3], 4096
    $region81: #{tpu_custom_call.1} parent=1 // pred_fallthru
      _
    // Predicated region
    $region82: #{tpu_custom_call.1} parent=1 // pred_check
      _
    $region83: #{tpu_custom_call.1} parent=1 // pred_check_branch
      %151 = sbr.rel (0) target = $region85
    $region84: #{tpu_custom_call.1} parent=1 // pred_region
      %152 = dma.done [#allocation5], 4096
    $region85: #{tpu_custom_call.1} parent=1 // pred_fallthru
      _
    // Predicated region
    $region86: #{tpu_custom_call.1} parent=1 // pred_check
      _
    $region87: #{tpu_custom_call.1} parent=1 // pred_check_branch
      %154 = sbr.rel (0) target = $region89
    $region88: #{tpu_custom_call.1} parent=1 // pred_region
      %155 = dma.done [#allocation5], 4096
    $region89: #{tpu_custom_call.1} parent=1 // pred_fallthru
      _
    // Predicated region
    $region90: #{tpu_custom_call.1} parent=1 // pred_check
      _
    $region91: #{tpu_custom_call.1} parent=1 // pred_check_branch
      %157 = sbr.rel (0) target = $region93
    $region92: #{tpu_custom_call.1} parent=1 // pred_region
      %158 = dma.done [#allocation8], 1024
    $region93: #{tpu_custom_call.1} parent=1 // pred_fallthru
      _
    // Predicated region
    $region94: #{tpu_custom_call.1} parent=1 // pred_check
      _
    $region95: #{tpu_custom_call.1} parent=1 // pred_check_branch
      %160 = sbr.rel (0) target = $region97
    $region96: #{tpu_custom_call.1} parent=1 // pred_region
      %161 = dma.done [#allocation8], 4096
    $region97: #{tpu_custom_call.1} parent=1 // pred_fallthru
      _
    // Predicated region
    $region98: #{tpu_custom_call.1} parent=1 // pred_check
      _
    $region99: #{tpu_custom_call.1} parent=1 // pred_check_branch
      %163 = sbr.rel (0) target = $region101
    $region100: #{tpu_custom_call.1} parent=1 // pred_region
      %164 = dma.done [#allocation11], 4096
    $region101: #{tpu_custom_call.1} parent=1 // pred_fallthru
      _
    // Predicated region
    $region102: #{tpu_custom_call.1} parent=1 // pred_check
      _
    $region103: #{tpu_custom_call.1} parent=1 // pred_check_branch
      %166 = sbr.rel (0) target = $region105
    $region104: #{tpu_custom_call.1} parent=1 // pred_region
      %167 = dma.done [#allocation11], 4096
    $region105: #{tpu_custom_call.1} parent=1 // pred_fallthru
      _
    // Predicated region
    $region106: #{tpu_custom_call.1} parent=1 // pred_check
      _
    $region107: #{tpu_custom_call.1} parent=1 // pred_check_branch
      %169 = sbr.rel (0) target = $region109
    $region108: #{tpu_custom_call.1} parent=1 // pred_region
      %170 = dma.done [#allocation14], 4096
    $region109: #{tpu_custom_call.1} parent=1 // pred_fallthru
      _
    %v172 = vld [vmem:[%s0] sm:$0xff]
    %v173 = vld [vmem:[%s0 + $0x8] sm:$0xff]
    %v174 = vld [vmem:[%s0 + $0x10] sm:$0xff]
    %v175 = vld [vmem:[%s0 + $0x18] sm:$0xff]
    %v176 = vld [vmem:[%s1] sm:$0xff]
    %v177 = vld [vmem:[%s1 + $0x8] sm:$0xff]
    %v178 = vpack.c.bf16 %v173, %v172
    %v179 = vpack.c.bf16 %v175, %v174
    %v180 = vld [vmem:[%s3] sm:$0xf]
    %v182 = vlaneseq
    %v183 = vshrl.u32 %v182, 7
    %v184 = vsub.s32 0, %v183
    %v185 = vrot.slane %v180, %v184
    %v186 = vlaneseq
    %v187 = vshrl.u32 %v186, 7
    %v188 = vsub.s32 1, %v187
    %v189 = vrot.slane %v180, %v188
    %v190 = vlaneseq
    %v191 = vshrl.u32 %v190, 7
    %v192 = vsub.s32 2, %v191
    %v193 = vrot.slane %v180, %v192
    %v194 = vlaneseq
    %v195 = vshrl.u32 %v194, 7
    %v196 = vsub.s32 3, %v195
    %v197 = vrot.slane %v180, %v196
    %v204 = vunpack.c.l.b16 %v176
    %v205 = vunpack.c.h.b16 %v176
    %v206 = vunpack.c.l.b16 %v177
    %v207 = vunpack.c.h.b16 %v177
    %v208 = vpack.c.b16 %v204, %v204
    %v209 = vpack.c.b16 %v205, %v205
    %v210 = vpack.c.b16 %v206, %v206
    %v211 = vpack.c.b16 %v207, %v207
    %vm212 = vcmask 64512
    %v214 = vsel %vm212, %v178, 0
    %v217 = vsel %vm212, %v179, 0
    %vm219 = vcmask 1043456
    %v221 = vsel %vm219, %v208, 0
    %v224 = vsel %vm219, %v209, 0
    %v227 = vsel %vm219, %v210, 0
    %v230 = vsel %vm219, %v211, 0
    %232 = vmatprep.subr.bf16.mxu0 0
    %233 = vmatpush1.bf16.msra.mxu0 0
    %234 = vmatprep.subr.bf16.mxu0 0
    %235 = vmatpush1.bf16.msra.mxu0 0
    %236 = vmatprep.subr.bf16.mxu0 0
    %237 = vmatpush1.bf16.msra.mxu0 0
    %238 = vmatprep.subr.bf16.mxu0 0
    %239 = vmatpush1.bf16.msra.mxu0 0
    %240 = vmatprep.subr.bf16.mxu0 0
    %241 = vmatpush1.bf16.msra.mxu0 0
    %242 = vmatprep.subr.bf16.mxu0 0
    %243 = vmatpush1.bf16.msra.mxu0 0
    %244 = vmatprep.subr.bf16.mxu0 0
    %245 = vmatpush1.bf16.msra.mxu0 0
    %246 = vmatprep.subr.bf16.mxu0 %v224
    %247 = vmatpush1.bf16.msra.mxu0 %v221
    %248 = vmatprep.subr.bf16.mxu0 0
    %249 = vmatpush2.bf16.msra.mxu0 0
    %250 = vmatprep.subr.bf16.mxu0 0
    %251 = vmatpush2.bf16.msra.mxu0 0
    %252 = vmatprep.subr.bf16.mxu0 0
    %253 = vmatpush2.bf16.msra.mxu0 0
    %254 = vmatprep.subr.bf16.mxu0 0
    %255 = vmatpush2.bf16.msra.mxu0 0
    %256 = vmatprep.subr.bf16.mxu0 0
    %257 = vmatpush2.bf16.msra.mxu0 0
    %258 = vmatprep.subr.bf16.mxu0 0
    %259 = vmatpush2.bf16.msra.mxu0 0
    %260 = vmatprep.subr.bf16.mxu0 0
    %261 = vmatpush2.bf16.msra.mxu0 0
    %262 = vmatprep.subr.bf16.mxu0 0
    %263 = vmatpush2.bf16.msra.mxu0 0
    %264 = vmatprep.mubr.bf16.mxu0 0
    %265 = vmatmul.mubr.bf16.gmra.mxu0 %v214
    %v266 = vpop.f32.mrf.mxu0
    %v267 = vadd.f32 %v185, %v266
    %v268 = vpop.f32.mrf.mxu0
    %v269 = vadd.f32 %v189, %v268
    %v270 = vpop.f32.mrf.mxu0
    %v271 = vadd.f32 %v185, %v270
    %v272 = vpop.f32.mrf.mxu0
    %v273 = vadd.f32 %v189, %v272
    %274 = vmatprep.mubr.bf16.mxu0 0
    %275 = vmatmul.mubr.bf16.gmra.mxu0 %v217
    %v276 = vpop.f32.mrf.mxu0
    %v277 = vadd.f32 %v185, %v276
    %v278 = vpop.f32.mrf.mxu0
    %v279 = vadd.f32 %v189, %v278
    %v280 = vpop.f32.mrf.mxu0
    %v281 = vadd.f32 %v185, %v280
    %v282 = vpop.f32.mrf.mxu0
    %v283 = vadd.f32 %v189, %v282
    %284 = vdwg.mxu0
    %285 = vmatprep.subr.bf16.mxu0 0
    %286 = vmatpush1.bf16.msra.mxu0 0
    %287 = vmatprep.subr.bf16.mxu0 0
    %288 = vmatpush1.bf16.msra.mxu0 0
    %289 = vmatprep.subr.bf16.mxu0 0
    %290 = vmatpush1.bf16.msra.mxu0 0
    %291 = vmatprep.subr.bf16.mxu0 0
    %292 = vmatpush1.bf16.msra.mxu0 0
    %293 = vmatprep.subr.bf16.mxu0 0
    %294 = vmatpush1.bf16.msra.mxu0 0
    %295 = vmatprep.subr.bf16.mxu0 0
    %296 = vmatpush1.bf16.msra.mxu0 0
    %297 = vmatprep.subr.bf16.mxu0 0
    %298 = vmatpush1.bf16.msra.mxu0 0
    %299 = vmatprep.subr.bf16.mxu0 %v230
    %300 = vmatpush1.bf16.msra.mxu0 %v227
    %301 = vmatprep.subr.bf16.mxu0 0
    %302 = vmatpush2.bf16.msra.mxu0 0
    %303 = vmatprep.subr.bf16.mxu0 0
    %304 = vmatpush2.bf16.msra.mxu0 0
    %305 = vmatprep.subr.bf16.mxu0 0
    %306 = vmatpush2.bf16.msra.mxu0 0
    %307 = vmatprep.subr.bf16.mxu0 0
    %308 = vmatpush2.bf16.msra.mxu0 0
    %309 = vmatprep.subr.bf16.mxu0 0
    %310 = vmatpush2.bf16.msra.mxu0 0
    %311 = vmatprep.subr.bf16.mxu0 0
    %312 = vmatpush2.bf16.msra.mxu0 0
    %313 = vmatprep.subr.bf16.mxu0 0
    %314 = vmatpush2.bf16.msra.mxu0 0
    %315 = vmatprep.subr.bf16.mxu0 0
    %316 = vmatpush2.bf16.msra.mxu0 0
    %317 = vmatprep.mubr.bf16.mxu0 0
    %318 = vmatmul.mubr.bf16.gmra.mxu0 %v214
    %v319 = vpop.f32.mrf.mxu0
    %v320 = vadd.f32 %v193, %v319
    %v321 = vpop.f32.mrf.mxu0
    %v322 = vadd.f32 %v197, %v321
    %v323 = vpop.f32.mrf.mxu0
    %v324 = vadd.f32 %v193, %v323
    %v325 = vpop.f32.mrf.mxu0
    %v326 = vadd.f32 %v197, %v325
    %327 = vmatprep.mubr.bf16.mxu0 0
    %328 = vmatmul.mubr.bf16.gmra.mxu0 %v217
    %v329 = vpop.f32.mrf.mxu0
    %v330 = vadd.f32 %v193, %v329
    %v331 = vpop.f32.mrf.mxu0
    %v332 = vadd.f32 %v197, %v331
    %v333 = vpop.f32.mrf.mxu0
    %v334 = vadd.f32 %v193, %v333
    %v335 = vpop.f32.mrf.mxu0
    %v336 = vadd.f32 %v197, %v335
    %337 = vdwg.mxu0
    %v338 = vld [vmem:[#allocation2] sm:$0xff]
    %v339 = vld [vmem:[#allocation2 + $0x8] sm:$0xff]
    %v340 = vld [vmem:[#allocation2 + $0x10] sm:$0xff]
    %v341 = vld [vmem:[#allocation2 + $0x18] sm:$0xff]
    %v342 = vld [vmem:[#allocation2 + $0x20] sm:$0xff]
    %v343 = vld [vmem:[#allocation2 + $0x28] sm:$0xff]
    %v344 = vld [vmem:[#allocation2 + $0x30] sm:$0xff]
    %v345 = vld [vmem:[#allocation2 + $0x38] sm:$0xff]
    %v346 = vld [vmem:[#allocation2 + $0x40] sm:$0xff]
    %v347 = vld [vmem:[#allocation2 + $0x48] sm:$0xff]
    %v348 = vld [vmem:[#allocation2 + $0x50] sm:$0xff]
    %v349 = vld [vmem:[#allocation2 + $0x58] sm:$0xff]
    %v350 = vld [vmem:[#allocation2 + $0x60] sm:$0xff]
    %v351 = vld [vmem:[#allocation2 + $0x68] sm:$0xff]
    %v352 = vld [vmem:[#allocation2 + $0x70] sm:$0xff]
    %v353 = vld [vmem:[#allocation2 + $0x78] sm:$0xff]
    %v354 = vld [vmem:[#allocation2 + $0x80] sm:$0xff]
    %v355 = vld [vmem:[#allocation2 + $0x88] sm:$0xff]
    %v356 = vld [vmem:[#allocation2 + $0x90] sm:$0xff]
    %v357 = vld [vmem:[#allocation2 + $0x98] sm:$0xff]
    %v358 = vld [vmem:[#allocation2 + $0xa0] sm:$0xff]
    %v359 = vld [vmem:[#allocation2 + $0xa8] sm:$0xff]
    %v360 = vld [vmem:[#allocation2 + $0xb0] sm:$0xff]
    %v361 = vld [vmem:[#allocation2 + $0xb8] sm:$0xff]
    %v362 = vld [vmem:[#allocation2 + $0xc0] sm:$0xff]
    %v363 = vld [vmem:[#allocation2 + $0xc8] sm:$0xff]
    %v364 = vld [vmem:[#allocation2 + $0xd0] sm:$0xff]
    %v365 = vld [vmem:[#allocation2 + $0xd8] sm:$0xff]
    %v366 = vld [vmem:[#allocation2 + $0xe0] sm:$0xff]
    %v367 = vld [vmem:[#allocation2 + $0xe8] sm:$0xff]
    %v368 = vld [vmem:[#allocation2 + $0xf0] sm:$0xff]
    %v369 = vld [vmem:[#allocation2 + $0xf8] sm:$0xff]
    %v402 = vunpack.c.l.b16 %v338
    %v403 = vunpack.c.h.b16 %v338
    %v404 = vunpack.c.l.b16 %v339
    %v405 = vunpack.c.h.b16 %v339
    %v406 = vunpack.c.l.b16 %v340
    %v407 = vunpack.c.h.b16 %v340
    %v408 = vunpack.c.l.b16 %v341
    %v409 = vunpack.c.h.b16 %v341
    %v410 = vunpack.c.l.b16 %v342
    %v411 = vunpack.c.h.b16 %v342
    %v412 = vunpack.c.l.b16 %v343
    %v413 = vunpack.c.h.b16 %v343
    %v414 = vunpack.c.l.b16 %v344
    %v415 = vunpack.c.h.b16 %v344
    %v416 = vunpack.c.l.b16 %v345
    %v417 = vunpack.c.h.b16 %v345
    %v418 = vunpack.c.l.b16 %v346
    %v419 = vunpack.c.h.b16 %v346
    %v420 = vunpack.c.l.b16 %v347
    %v421 = vunpack.c.h.b16 %v347
    %v422 = vunpack.c.l.b16 %v348
    %v423 = vunpack.c.h.b16 %v348
    %v424 = vunpack.c.l.b16 %v349
    %v425 = vunpack.c.h.b16 %v349
    %v426 = vunpack.c.l.b16 %v350
    %v427 = vunpack.c.h.b16 %v350
    %v428 = vunpack.c.l.b16 %v351
    %v429 = vunpack.c.h.b16 %v351
    %v430 = vunpack.c.l.b16 %v352
    %v431 = vunpack.c.h.b16 %v352
    %v432 = vunpack.c.l.b16 %v353
    %v433 = vunpack.c.h.b16 %v353
    %v434 = vunpack.c.l.b16 %v354
    %v435 = vunpack.c.h.b16 %v354
    %v436 = vunpack.c.l.b16 %v355
    %v437 = vunpack.c.h.b16 %v355
    %v438 = vunpack.c.l.b16 %v356
    %v439 = vunpack.c.h.b16 %v356
    %v440 = vunpack.c.l.b16 %v357
    %v441 = vunpack.c.h.b16 %v357
    %v442 = vunpack.c.l.b16 %v358
    %v443 = vunpack.c.h.b16 %v358
    %v444 = vunpack.c.l.b16 %v359
    %v445 = vunpack.c.h.b16 %v359
    %v446 = vunpack.c.l.b16 %v360
    %v447 = vunpack.c.h.b16 %v360
    %v448 = vunpack.c.l.b16 %v361
    %v449 = vunpack.c.h.b16 %v361
    %v450 = vunpack.c.l.b16 %v362
    %v451 = vunpack.c.h.b16 %v362
    %v452 = vunpack.c.l.b16 %v363
    %v453 = vunpack.c.h.b16 %v363
    %v454 = vunpack.c.l.b16 %v364
    %v455 = vunpack.c.h.b16 %v364
    %v456 = vunpack.c.l.b16 %v365
    %v457 = vunpack.c.h.b16 %v365
    %v458 = vunpack.c.l.b16 %v366
    %v459 = vunpack.c.h.b16 %v366
    %v460 = vunpack.c.l.b16 %v367
    %v461 = vunpack.c.h.b16 %v367
    %v462 = vunpack.c.l.b16 %v368
    %v463 = vunpack.c.h.b16 %v368
    %v464 = vunpack.c.l.b16 %v369
    %v465 = vunpack.c.h.b16 %v369
    %v466 = vpack.c.b16 %v406, %v402
    %v467 = vpack.c.b16 %v407, %v403
    %v468 = vpack.c.b16 %v408, %v404
    %v469 = vpack.c.b16 %v409, %v405
    %v470 = vpack.c.b16 %v414, %v410
    %v471 = vpack.c.b16 %v415, %v411
    %v472 = vpack.c.b16 %v416, %v412
    %v473 = vpack.c.b16 %v417, %v413
    %v474 = vpack.c.b16 %v422, %v418
    %v475 = vpack.c.b16 %v423, %v419
    %v476 = vpack.c.b16 %v424, %v420
    %v477 = vpack.c.b16 %v425, %v421
    %v478 = vpack.c.b16 %v430, %v426
    %v479 = vpack.c.b16 %v431, %v427
    %v480 = vpack.c.b16 %v432, %v428
    %v481 = vpack.c.b16 %v433, %v429
    %v482 = vpack.c.b16 %v438, %v434
    %v483 = vpack.c.b16 %v439, %v435
    %v484 = vpack.c.b16 %v440, %v436
    %v485 = vpack.c.b16 %v441, %v437
    %v486 = vpack.c.b16 %v446, %v442
    %v487 = vpack.c.b16 %v447, %v443
    %v488 = vpack.c.b16 %v448, %v444
    %v489 = vpack.c.b16 %v449, %v445
    %v490 = vpack.c.b16 %v454, %v450
    %v491 = vpack.c.b16 %v455, %v451
    %v492 = vpack.c.b16 %v456, %v452
    %v493 = vpack.c.b16 %v457, %v453
    %v494 = vpack.c.b16 %v462, %v458
    %v495 = vpack.c.b16 %v463, %v459
    %v496 = vpack.c.b16 %v464, %v460
    %v497 = vpack.c.b16 %v465, %v461
    %530 = vmatprep.subr.bf16.mxu0 %v495
    %531 = vmatpush1.bf16.msra.mxu0 %v494
    %532 = vmatprep.subr.bf16.mxu0 %v491
    %533 = vmatpush1.bf16.msra.mxu0 %v490
    %534 = vmatprep.subr.bf16.mxu0 %v487
    %535 = vmatpush1.bf16.msra.mxu0 %v486
    %536 = vmatprep.subr.bf16.mxu0 %v483
    %537 = vmatpush1.bf16.msra.mxu0 %v482
    %538 = vmatprep.subr.bf16.mxu0 %v479
    %539 = vmatpush1.bf16.msra.mxu0 %v478
    %540 = vmatprep.subr.bf16.mxu0 %v475
    %541 = vmatpush1.bf16.msra.mxu0 %v474
    %542 = vmatprep.subr.bf16.mxu0 %v471
    %543 = vmatpush1.bf16.msra.mxu0 %v470
    %544 = vmatprep.subr.bf16.mxu0 %v467
    %545 = vmatpush1.bf16.msra.mxu0 %v466
    %546 = vmatprep.subr.bf16.mxu0 0
    %547 = vmatpush2.bf16.msra.mxu0 0
    %548 = vmatprep.subr.bf16.mxu0 0
    %549 = vmatpush2.bf16.msra.mxu0 0
    %550 = vmatprep.subr.bf16.mxu0 0
    %551 = vmatpush2.bf16.msra.mxu0 0
    %552 = vmatprep.subr.bf16.mxu0 0
    %553 = vmatpush2.bf16.msra.mxu0 0
    %554 = vmatprep.subr.bf16.mxu0 0
    %555 = vmatpush2.bf16.msra.mxu0 0
    %556 = vmatprep.subr.bf16.mxu0 0
    %557 = vmatpush2.bf16.msra.mxu0 0
    %558 = vmatprep.subr.bf16.mxu0 0
    %559 = vmatpush2.bf16.msra.mxu0 0
    %560 = vmatprep.subr.bf16.mxu0 0
    %561 = vmatpush2.bf16.msra.mxu0 0
    %562 = vmatprep.mubr.bf16.mxu0 0
    %563 = vmatmul.mubr.bf16.gmra.mxu0 0
    %v564 = vpop.f32.mrf.mxu0
    %v565 = vadd.f32 0.0, %v564
    %v566 = vpop.f32.mrf.mxu0
    %v567 = vadd.f32 0.0, %v566
    %v568 = vpop.f32.mrf.mxu0
    %v569 = vadd.f32 0.0, %v568
    %v570 = vpop.f32.mrf.mxu0
    %v571 = vadd.f32 0.0, %v570
    %572 = vdwg.mxu0
    %573 = vmatprep.subr.bf16.mxu0 %v497
    %574 = vmatpush1.bf16.msra.mxu0 %v496
    %575 = vmatprep.subr.bf16.mxu0 %v493
    %576 = vmatpush1.bf16.msra.mxu0 %v492
    %577 = vmatprep.subr.bf16.mxu0 %v489
    %578 = vmatpush1.bf16.msra.mxu0 %v488
    %579 = vmatprep.subr.bf16.mxu0 %v485
    %580 = vmatpush1.bf16.msra.mxu0 %v484
    %581 = vmatprep.subr.bf16.mxu0 %v481
    %582 = vmatpush1.bf16.msra.mxu0 %v480
    %583 = vmatprep.subr.bf16.mxu0 %v477
    %584 = vmatpush1.bf16.msra.mxu0 %v476
    %585 = vmatprep.subr.bf16.mxu0 %v473
    %586 = vmatpush1.bf16.msra.mxu0 %v472
    %587 = vmatprep.subr.bf16.mxu0 %v469
    %588 = vmatpush1.bf16.msra.mxu0 %v468
    %589 = vmatprep.subr.bf16.mxu0 0
    %590 = vmatpush2.bf16.msra.mxu0 0
    %591 = vmatprep.subr.bf16.mxu0 0
    %592 = vmatpush2.bf16.msra.mxu0 0
    %593 = vmatprep.subr.bf16.mxu0 0
    %594 = vmatpush2.bf16.msra.mxu0 0
    %595 = vmatprep.subr.bf16.mxu0 0
    %596 = vmatpush2.bf16.msra.mxu0 0
    %597 = vmatprep.subr.bf16.mxu0 0
    %598 = vmatpush2.bf16.msra.mxu0 0
    %599 = vmatprep.subr.bf16.mxu0 0
    %600 = vmatpush2.bf16.msra.mxu0 0
    %601 = vmatprep.subr.bf16.mxu0 0
    %602 = vmatpush2.bf16.msra.mxu0 0
    %603 = vmatprep.subr.bf16.mxu0 0
    %604 = vmatpush2.bf16.msra.mxu0 0
    %605 = vmatprep.mubr.bf16.mxu0 0
    %606 = vmatmul.mubr.bf16.gmra.mxu0 0
    %v607 = vpop.f32.mrf.mxu0
    %v608 = vadd.f32 0.0, %v607
    %v609 = vpop.f32.mrf.mxu0
    %v610 = vadd.f32 0.0, %v609
    %v611 = vpop.f32.mrf.mxu0
    %v612 = vadd.f32 0.0, %v611
    %v613 = vpop.f32.mrf.mxu0
    %v614 = vadd.f32 0.0, %v613
    %615 = vdwg.mxu0
    %v616 = vadd.f32 %v267, %v565
    %v617 = vadd.f32 %v269, %v567
    %v618 = vadd.f32 %v320, %v608
    %v619 = vadd.f32 %v322, %v610
    %v620 = vadd.f32 %v271, %v569
    %v621 = vadd.f32 %v273, %v571
    %v622 = vadd.f32 %v324, %v612
    %v623 = vadd.f32 %v326, %v614
    %v624 = vxor.u32 %v616, 2147483648
    %v625 = vxor.u32 %v620, 2147483648
    %v626 = vmul.f32 %v624, 1.442695
    %v627 = vpow.pop %v626
    %v628 = vmul.f32 %v625, 1.442695
    %v629 = vpow.pop %v628
    %v630 = vadd.f32 %v627, 1.0
    %v631 = vadd.f32 %v629, 1.0
    %v632 = vrcp.pop %v630
    %v633 = vmul.f32 1.0, %v632
    %v634 = vrcp.pop %v631
    %v635 = vmul.f32 1.0, %v634
    %v636 = vxor.u32 %v617, 2147483648
    %v637 = vxor.u32 %v621, 2147483648
    %v638 = vmul.f32 %v636, 1.442695
    %v639 = vpow.pop %v638
    %v640 = vmul.f32 %v637, 1.442695
    %v641 = vpow.pop %v640
    %v642 = vadd.f32 %v639, 1.0
    %v643 = vadd.f32 %v641, 1.0
    %v644 = vrcp.pop %v642
    %v645 = vmul.f32 1.0, %v644
    %v646 = vrcp.pop %v643
    %v647 = vmul.f32 1.0, %v646
    %v648 = vtanh.pop %v618
    %v649 = vtanh.pop %v622
    %v650 = vxor.u32 %v619, 2147483648
    %v651 = vxor.u32 %v623, 2147483648
    %v652 = vmul.f32 %v650, 1.442695
    %v653 = vpow.pop %v652
    %v654 = vmul.f32 %v651, 1.442695
    %v655 = vpow.pop %v654
    %v656 = vadd.f32 %v653, 1.0
    %v657 = vadd.f32 %v655, 1.0
    %v658 = vrcp.pop %v656
    %v659 = vmul.f32 1.0, %v658
    %v660 = vrcp.pop %v657
    %v661 = vmul.f32 1.0, %v660
    %v662 = vmul.f32 %v645, 0.0
    %v663 = vmul.f32 %v647, 0.0
    %v664 = vmul.f32 %v633, %v648
    %v665 = vmul.f32 %v635, %v649
    %v666 = vadd.f32 %v662, %v664
    %v667 = vadd.f32 %v663, %v665
    %v668 = vtanh.pop %v666
    %v669 = vtanh.pop %v667
    %v670 = vmul.f32 %v659, %v668
    %v671 = vmul.f32 %v661, %v669
    %v672 = vpack.c.bf16 %v671, %v670
    %673 = vmatprep.subr.bf16.mxu0 %v495
    %674 = vmatpush1.bf16.msra.mxu0 %v494
    %675 = vmatprep.subr.bf16.mxu0 %v491
    %676 = vmatpush1.bf16.msra.mxu0 %v490
    %677 = vmatprep.subr.bf16.mxu0 %v487
    %678 = vmatpush1.bf16.msra.mxu0 %v486
    %679 = vmatprep.subr.bf16.mxu0 %v483
    %680 = vmatpush1.bf16.msra.mxu0 %v482
    %681 = vmatprep.subr.bf16.mxu0 %v479
    %682 = vmatpush1.bf16.msra.mxu0 %v478
    %683 = vmatprep.subr.bf16.mxu0 %v475
    %684 = vmatpush1.bf16.msra.mxu0 %v474
    %685 = vmatprep.subr.bf16.mxu0 %v471
    %686 = vmatpush1.bf16.msra.mxu0 %v470
    %687 = vmatprep.subr.bf16.mxu0 %v467
    %688 = vmatpush1.bf16.msra.mxu0 %v466
    %689 = vmatprep.subr.bf16.mxu0 0
    %690 = vmatpush2.bf16.msra.mxu0 0
    %691 = vmatprep.subr.bf16.mxu0 0
    %692 = vmatpush2.bf16.msra.mxu0 0
    %693 = vmatprep.subr.bf16.mxu0 0
    %694 = vmatpush2.bf16.msra.mxu0 0
    %695 = vmatprep.subr.bf16.mxu0 0
    %696 = vmatpush2.bf16.msra.mxu0 0
    %697 = vmatprep.subr.bf16.mxu0 0
    %698 = vmatpush2.bf16.msra.mxu0 0
    %699 = vmatprep.subr.bf16.mxu0 0
    %700 = vmatpush2.bf16.msra.mxu0 0
    %701 = vmatprep.subr.bf16.mxu0 0
    %702 = vmatpush2.bf16.msra.mxu0 0
    %703 = vmatprep.subr.bf16.mxu0 0
    %704 = vmatpush2.bf16.msra.mxu0 0
    %705 = vmatprep.mubr.bf16.mxu0 0
    %706 = vmatmul.mubr.bf16.gmra.mxu0 %v672
    %v707 = vpop.f32.mrf.mxu0
    %v708 = vadd.f32 0.0, %v707
    %v709 = vpop.f32.mrf.mxu0
    %v710 = vadd.f32 0.0, %v709
    %v711 = vpop.f32.mrf.mxu0
    %v712 = vadd.f32 0.0, %v711
    %v713 = vpop.f32.mrf.mxu0
    %v714 = vadd.f32 0.0, %v713
    %715 = vdwg.mxu0
    %716 = vmatprep.subr.bf16.mxu0 %v497
    %717 = vmatpush1.bf16.msra.mxu0 %v496
    %718 = vmatprep.subr.bf16.mxu0 %v493
    %719 = vmatpush1.bf16.msra.mxu0 %v492
    %720 = vmatprep.subr.bf16.mxu0 %v489
    %721 = vmatpush1.bf16.msra.mxu0 %v488
    %722 = vmatprep.subr.bf16.mxu0 %v485
    %723 = vmatpush1.bf16.msra.mxu0 %v484
    %724 = vmatprep.subr.bf16.mxu0 %v481
    %725 = vmatpush1.bf16.msra.mxu0 %v480
    %726 = vmatprep.subr.bf16.mxu0 %v477
    %727 = vmatpush1.bf16.msra.mxu0 %v476
    %728 = vmatprep.subr.bf16.mxu0 %v473
    %729 = vmatpush1.bf16.msra.mxu0 %v472
    %730 = vmatprep.subr.bf16.mxu0 %v469
    %731 = vmatpush1.bf16.msra.mxu0 %v468
    %732 = vmatprep.subr.bf16.mxu0 0
    %733 = vmatpush2.bf16.msra.mxu0 0
    %734 = vmatprep.subr.bf16.mxu0 0
    %735 = vmatpush2.bf16.msra.mxu0 0
    %736 = vmatprep.subr.bf16.mxu0 0
    %737 = vmatpush2.bf16.msra.mxu0 0
    %738 = vmatprep.subr.bf16.mxu0 0
    %739 = vmatpush2.bf16.msra.mxu0 0
    %740 = vmatprep.subr.bf16.mxu0 0
    %741 = vmatpush2.bf16.msra.mxu0 0
    %742 = vmatprep.subr.bf16.mxu0 0
    %743 = vmatpush2.bf16.msra.mxu0 0
    %744 = vmatprep.subr.bf16.mxu0 0
    %745 = vmatpush2.bf16.msra.mxu0 0
    %746 = vmatprep.subr.bf16.mxu0 0
    %747 = vmatpush2.bf16.msra.mxu0 0
    %748 = vmatprep.mubr.bf16.mxu0 0
    %749 = vmatmul.mubr.bf16.gmra.mxu0 %v672
    %v750 = vpop.f32.mrf.mxu0
    %v751 = vadd.f32 0.0, %v750
    %v752 = vpop.f32.mrf.mxu0
    %v753 = vadd.f32 0.0, %v752
    %v754 = vpop.f32.mrf.mxu0
    %v755 = vadd.f32 0.0, %v754
    %v756 = vpop.f32.mrf.mxu0
    %v757 = vadd.f32 0.0, %v756
    %758 = vdwg.mxu0
    %v759 = vadd.f32 %v277, %v708
    %v760 = vadd.f32 %v279, %v710
    %v761 = vadd.f32 %v330, %v751
    %v762 = vadd.f32 %v332, %v753
    %v763 = vadd.f32 %v281, %v712
    %v764 = vadd.f32 %v283, %v714
    %v765 = vadd.f32 %v334, %v755
    %v766 = vadd.f32 %v336, %v757
    %v767 = vxor.u32 %v759, 2147483648
    %v768 = vxor.u32 %v763, 2147483648
    %v769 = vmul.f32 %v767, 1.442695
    %v770 = vpow.pop %v769
    %v771 = vmul.f32 %v768, 1.442695
    %v772 = vpow.pop %v771
    %v773 = vadd.f32 %v770, 1.0
    %v774 = vadd.f32 %v772, 1.0
    %v775 = vrcp.pop %v773
    %v776 = vmul.f32 1.0, %v775
    %v777 = vrcp.pop %v774
    %v778 = vmul.f32 1.0, %v777
    %v779 = vxor.u32 %v760, 2147483648
    %v780 = vxor.u32 %v764, 2147483648
    %v781 = vmul.f32 %v779, 1.442695
    %v782 = vpow.pop %v781
    %v783 = vmul.f32 %v780, 1.442695
    %v784 = vpow.pop %v783
    %v785 = vadd.f32 %v782, 1.0
    %v786 = vadd.f32 %v784, 1.0
    %v787 = vrcp.pop %v785
    %v788 = vmul.f32 1.0, %v787
    %v789 = vrcp.pop %v786
    %v790 = vmul.f32 1.0, %v789
    %v791 = vtanh.pop %v761
    %v792 = vtanh.pop %v765
    %v793 = vxor.u32 %v762, 2147483648
    %v794 = vxor.u32 %v766, 2147483648
    %v795 = vmul.f32 %v793, 1.442695
    %v796 = vpow.pop %v795
    %v797 = vmul.f32 %v794, 1.442695
    %v798 = vpow.pop %v797
    %v799 = vadd.f32 %v796, 1.0
    %v800 = vadd.f32 %v798, 1.0
    %v801 = vrcp.pop %v799
    %v802 = vmul.f32 1.0, %v801
    %v803 = vrcp.pop %v800
    %v804 = vmul.f32 1.0, %v803
    %v805 = vmul.f32 %v788, %v666
    %v806 = vmul.f32 %v790, %v667
    %v807 = vmul.f32 %v776, %v791
    %v808 = vmul.f32 %v778, %v792
    %v809 = vadd.f32 %v805, %v807
    %v810 = vadd.f32 %v806, %v808
    %v811 = vtanh.pop %v809
    %v812 = vtanh.pop %v810
    %v813 = vmul.f32 %v802, %v811
    %v814 = vmul.f32 %v804, %v812
    %v815 = vld [vmem:[#allocation4] sm:$0xff]
    %v816 = vld [vmem:[#allocation4 + $0x8] sm:$0xff]
    %v817 = vld [vmem:[#allocation4 + $0x10] sm:$0xff]
    %v818 = vld [vmem:[#allocation4 + $0x18] sm:$0xff]
    %v819 = vld [vmem:[#allocation4 + $0x20] sm:$0xff]
    %v820 = vld [vmem:[#allocation4 + $0x28] sm:$0xff]
    %v821 = vld [vmem:[#allocation4 + $0x30] sm:$0xff]
    %v822 = vld [vmem:[#allocation4 + $0x38] sm:$0xff]
    %v823 = vld [vmem:[#allocation4 + $0x40] sm:$0xff]
    %v824 = vld [vmem:[#allocation4 + $0x48] sm:$0xff]
    %v825 = vld [vmem:[#allocation4 + $0x50] sm:$0xff]
    %v826 = vld [vmem:[#allocation4 + $0x58] sm:$0xff]
    %v827 = vld [vmem:[#allocation4 + $0x60] sm:$0xff]
    %v828 = vld [vmem:[#allocation4 + $0x68] sm:$0xff]
    %v829 = vld [vmem:[#allocation4 + $0x70] sm:$0xff]
    %v830 = vld [vmem:[#allocation4 + $0x78] sm:$0xff]
    %v831 = vld [vmem:[#allocation4 + $0x80] sm:$0xff]
    %v832 = vld [vmem:[#allocation4 + $0x88] sm:$0xff]
    %v833 = vld [vmem:[#allocation4 + $0x90] sm:$0xff]
    %v834 = vld [vmem:[#allocation4 + $0x98] sm:$0xff]
    %v835 = vld [vmem:[#allocation4 + $0xa0] sm:$0xff]
    %v836 = vld [vmem:[#allocation4 + $0xa8] sm:$0xff]
    %v837 = vld [vmem:[#allocation4 + $0xb0] sm:$0xff]
    %v838 = vld [vmem:[#allocation4 + $0xb8] sm:$0xff]
    %v839 = vld [vmem:[#allocation4 + $0xc0] sm:$0xff]
    %v840 = vld [vmem:[#allocation4 + $0xc8] sm:$0xff]
    %v841 = vld [vmem:[#allocation4 + $0xd0] sm:$0xff]
    %v842 = vld [vmem:[#allocation4 + $0xd8] sm:$0xff]
    %v843 = vld [vmem:[#allocation4 + $0xe0] sm:$0xff]
    %v844 = vld [vmem:[#allocation4 + $0xe8] sm:$0xff]
    %v845 = vld [vmem:[#allocation4 + $0xf0] sm:$0xff]
    %v846 = vld [vmem:[#allocation4 + $0xf8] sm:$0xff]
    %v847 = vpack.c.bf16 %v814, %v813
    %v848 = vld [vmem:[%s6] sm:$0xf]
    %v850 = vlaneseq
    %v851 = vshrl.u32 %v850, 7
    %v852 = vsub.s32 0, %v851
    %v853 = vrot.slane %v848, %v852
    %v854 = vlaneseq
    %v855 = vshrl.u32 %v854, 7
    %v856 = vsub.s32 1, %v855
    %v857 = vrot.slane %v848, %v856
    %v858 = vlaneseq
    %v859 = vshrl.u32 %v858, 7
    %v860 = vsub.s32 2, %v859
    %v861 = vrot.slane %v848, %v860
    %v862 = vlaneseq
    %v863 = vshrl.u32 %v862, 7
    %v864 = vsub.s32 3, %v863
    %v865 = vrot.slane %v848, %v864
    %v902 = vunpack.c.l.b16 %v815
    %v903 = vunpack.c.h.b16 %v815
    %v904 = vunpack.c.l.b16 %v816
    %v905 = vunpack.c.h.b16 %v816
    %v906 = vunpack.c.l.b16 %v817
    %v907 = vunpack.c.h.b16 %v817
    %v908 = vunpack.c.l.b16 %v818
    %v909 = vunpack.c.h.b16 %v818
    %v910 = vunpack.c.l.b16 %v819
    %v911 = vunpack.c.h.b16 %v819
    %v912 = vunpack.c.l.b16 %v820
    %v913 = vunpack.c.h.b16 %v820
    %v914 = vunpack.c.l.b16 %v821
    %v915 = vunpack.c.h.b16 %v821
    %v916 = vunpack.c.l.b16 %v822
    %v917 = vunpack.c.h.b16 %v822
    %v918 = vunpack.c.l.b16 %v823
    %v919 = vunpack.c.h.b16 %v823
    %v920 = vunpack.c.l.b16 %v824
    %v921 = vunpack.c.h.b16 %v824
    %v922 = vunpack.c.l.b16 %v825
    %v923 = vunpack.c.h.b16 %v825
    %v924 = vunpack.c.l.b16 %v826
    %v925 = vunpack.c.h.b16 %v826
    %v926 = vunpack.c.l.b16 %v827
    %v927 = vunpack.c.h.b16 %v827
    %v928 = vunpack.c.l.b16 %v828
    %v929 = vunpack.c.h.b16 %v828
    %v930 = vunpack.c.l.b16 %v829
    %v931 = vunpack.c.h.b16 %v829
    %v932 = vunpack.c.l.b16 %v830
    %v933 = vunpack.c.h.b16 %v830
    %v934 = vunpack.c.l.b16 %v831
    %v935 = vunpack.c.h.b16 %v831
    %v936 = vunpack.c.l.b16 %v832
    %v937 = vunpack.c.h.b16 %v832
    %v938 = vunpack.c.l.b16 %v833
    %v939 = vunpack.c.h.b16 %v833
    %v940 = vunpack.c.l.b16 %v834
    %v941 = vunpack.c.h.b16 %v834
    %v942 = vunpack.c.l.b16 %v835
    %v943 = vunpack.c.h.b16 %v835
    %v944 = vunpack.c.l.b16 %v836
    %v945 = vunpack.c.h.b16 %v836
    %v946 = vunpack.c.l.b16 %v837
    %v947 = vunpack.c.h.b16 %v837
    %v948 = vunpack.c.l.b16 %v838
    %v949 = vunpack.c.h.b16 %v838
    %v950 = vunpack.c.l.b16 %v839
    %v951 = vunpack.c.h.b16 %v839
    %v952 = vunpack.c.l.b16 %v840
    %v953 = vunpack.c.h.b16 %v840
    %v954 = vunpack.c.l.b16 %v841
    %v955 = vunpack.c.h.b16 %v841
    %v956 = vunpack.c.l.b16 %v842
    %v957 = vunpack.c.h.b16 %v842
    %v958 = vunpack.c.l.b16 %v843
    %v959 = vunpack.c.h.b16 %v843
    %v960 = vunpack.c.l.b16 %v844
    %v961 = vunpack.c.h.b16 %v844
    %v962 = vunpack.c.l.b16 %v845
    %v963 = vunpack.c.h.b16 %v845
    %v964 = vunpack.c.l.b16 %v846
    %v965 = vunpack.c.h.b16 %v846
    %v966 = vpack.c.b16 %v906, %v902
    %v967 = vpack.c.b16 %v907, %v903
    %v968 = vpack.c.b16 %v908, %v904
    %v969 = vpack.c.b16 %v909, %v905
    %v970 = vpack.c.b16 %v914, %v910
    %v971 = vpack.c.b16 %v915, %v911
    %v972 = vpack.c.b16 %v916, %v912
    %v973 = vpack.c.b16 %v917, %v913
    %v974 = vpack.c.b16 %v922, %v918
    %v975 = vpack.c.b16 %v923, %v919
    %v976 = vpack.c.b16 %v924, %v920
    %v977 = vpack.c.b16 %v925, %v921
    %v978 = vpack.c.b16 %v930, %v926
    %v979 = vpack.c.b16 %v931, %v927
    %v980 = vpack.c.b16 %v932, %v928
    %v981 = vpack.c.b16 %v933, %v929
    %v982 = vpack.c.b16 %v938, %v934
    %v983 = vpack.c.b16 %v939, %v935
    %v984 = vpack.c.b16 %v940, %v936
    %v985 = vpack.c.b16 %v941, %v937
    %v986 = vpack.c.b16 %v946, %v942
    %v987 = vpack.c.b16 %v947, %v943
    %v988 = vpack.c.b16 %v948, %v944
    %v989 = vpack.c.b16 %v949, %v945
    %v990 = vpack.c.b16 %v954, %v950
    %v991 = vpack.c.b16 %v955, %v951
    %v992 = vpack.c.b16 %v956, %v952
    %v993 = vpack.c.b16 %v957, %v953
    %v994 = vpack.c.b16 %v962, %v958
    %v995 = vpack.c.b16 %v963, %v959
    %v996 = vpack.c.b16 %v964, %v960
    %v997 = vpack.c.b16 %v965, %v961
    %1030 = vmatprep.subr.bf16.mxu0 %v995
    %1031 = vmatpush1.bf16.msra.mxu0 %v994
    %1032 = vmatprep.subr.bf16.mxu0 %v991
    %1033 = vmatpush1.bf16.msra.mxu0 %v990
    %1034 = vmatprep.subr.bf16.mxu0 %v987
    %1035 = vmatpush1.bf16.msra.mxu0 %v986
    %1036 = vmatprep.subr.bf16.mxu0 %v983
    %1037 = vmatpush1.bf16.msra.mxu0 %v982
    %1038 = vmatprep.subr.bf16.mxu0 %v979
    %1039 = vmatpush1.bf16.msra.mxu0 %v978
    %1040 = vmatprep.subr.bf16.mxu0 %v975
    %1041 = vmatpush1.bf16.msra.mxu0 %v974
    %1042 = vmatprep.subr.bf16.mxu0 %v971
    %1043 = vmatpush1.bf16.msra.mxu0 %v970
    %1044 = vmatprep.subr.bf16.mxu0 %v967
    %1045 = vmatpush1.bf16.msra.mxu0 %v966
    %1046 = vmatprep.subr.bf16.mxu0 0
    %1047 = vmatpush2.bf16.msra.mxu0 0
    %1048 = vmatprep.subr.bf16.mxu0 0
    %1049 = vmatpush2.bf16.msra.mxu0 0
    %1050 = vmatprep.subr.bf16.mxu0 0
    %1051 = vmatpush2.bf16.msra.mxu0 0
    %1052 = vmatprep.subr.bf16.mxu0 0
    %1053 = vmatpush2.bf16.msra.mxu0 0
    %1054 = vmatprep.subr.bf16.mxu0 0
    %1055 = vmatpush2.bf16.msra.mxu0 0
    %1056 = vmatprep.subr.bf16.mxu0 0
    %1057 = vmatpush2.bf16.msra.mxu0 0
    %1058 = vmatprep.subr.bf16.mxu0 0
    %1059 = vmatpush2.bf16.msra.mxu0 0
    %1060 = vmatprep.subr.bf16.mxu0 0
    %1061 = vmatpush2.bf16.msra.mxu0 0
    %1062 = vmatprep.mubr.bf16.mxu0 0
    %1063 = vmatmul.mubr.bf16.gmra.mxu0 %v672
    %v1064 = vpop.f32.mrf.mxu0
    %v1065 = vadd.f32 %v853, %v1064
    %v1066 = vpop.f32.mrf.mxu0
    %v1067 = vadd.f32 %v857, %v1066
    %v1068 = vpop.f32.mrf.mxu0
    %v1069 = vadd.f32 %v853, %v1068
    %v1070 = vpop.f32.mrf.mxu0
    %v1071 = vadd.f32 %v857, %v1070
    %1072 = vmatprep.mubr.bf16.mxu0 0
    %1073 = vmatmul.mubr.bf16.gmra.mxu0 %v847
    %v1074 = vpop.f32.mrf.mxu0
    %v1075 = vadd.f32 %v853, %v1074
    %v1076 = vpop.f32.mrf.mxu0
    %v1077 = vadd.f32 %v857, %v1076
    %v1078 = vpop.f32.mrf.mxu0
    %v1079 = vadd.f32 %v853, %v1078
    %v1080 = vpop.f32.mrf.mxu0
    %v1081 = vadd.f32 %v857, %v1080
    %1082 = vdwg.mxu0
    %1083 = vmatprep.subr.bf16.mxu0 %v997
    %1084 = vmatpush1.bf16.msra.mxu0 %v996
    %1085 = vmatprep.subr.bf16.mxu0 %v993
    %1086 = vmatpush1.bf16.msra.mxu0 %v992
    %1087 = vmatprep.subr.bf16.mxu0 %v989
    %1088 = vmatpush1.bf16.msra.mxu0 %v988
    %1089 = vmatprep.subr.bf16.mxu0 %v985
    %1090 = vmatpush1.bf16.msra.mxu0 %v984
    %1091 = vmatprep.subr.bf16.mxu0 %v981
    %1092 = vmatpush1.bf16.msra.mxu0 %v980
    %1093 = vmatprep.subr.bf16.mxu0 %v977
    %1094 = vmatpush1.bf16.msra.mxu0 %v976
    %1095 = vmatprep.subr.bf16.mxu0 %v973
    %1096 = vmatpush1.bf16.msra.mxu0 %v972
    %1097 = vmatprep.subr.bf16.mxu0 %v969
    %1098 = vmatpush1.bf16.msra.mxu0 %v968
    %1099 = vmatprep.subr.bf16.mxu0 0
    %1100 = vmatpush2.bf16.msra.mxu0 0
    %1101 = vmatprep.subr.bf16.mxu0 0
    %1102 = vmatpush2.bf16.msra.mxu0 0
    %1103 = vmatprep.subr.bf16.mxu0 0
    %1104 = vmatpush2.bf16.msra.mxu0 0
    %1105 = vmatprep.subr.bf16.mxu0 0
    %1106 = vmatpush2.bf16.msra.mxu0 0
    %1107 = vmatprep.subr.bf16.mxu0 0
    %1108 = vmatpush2.bf16.msra.mxu0 0
    %1109 = vmatprep.subr.bf16.mxu0 0
    %1110 = vmatpush2.bf16.msra.mxu0 0
    %1111 = vmatprep.subr.bf16.mxu0 0
    %1112 = vmatpush2.bf16.msra.mxu0 0
    %1113 = vmatprep.subr.bf16.mxu0 0
    %1114 = vmatpush2.bf16.msra.mxu0 0
    %1115 = vmatprep.mubr.bf16.mxu0 0
    %1116 = vmatmul.mubr.bf16.gmra.mxu0 %v672
    %v1117 = vpop.f32.mrf.mxu0
    %v1118 = vadd.f32 %v861, %v1117
    %v1119 = vpop.f32.mrf.mxu0
    %v1120 = vadd.f32 %v865, %v1119
    %v1121 = vpop.f32.mrf.mxu0
    %v1122 = vadd.f32 %v861, %v1121
    %v1123 = vpop.f32.mrf.mxu0
    %v1124 = vadd.f32 %v865, %v1123
    %1125 = vmatprep.mubr.bf16.mxu0 0
    %1126 = vmatmul.mubr.bf16.gmra.mxu0 %v847
    %v1127 = vpop.f32.mrf.mxu0
    %v1128 = vadd.f32 %v861, %v1127
    %v1129 = vpop.f32.mrf.mxu0
    %v1130 = vadd.f32 %v865, %v1129
    %v1131 = vpop.f32.mrf.mxu0
    %v1132 = vadd.f32 %v861, %v1131
    %v1133 = vpop.f32.mrf.mxu0
    %v1134 = vadd.f32 %v865, %v1133
    %1135 = vdwg.mxu0
    %v1136 = vld [vmem:[#allocation6] sm:$0xff]
    %v1137 = vld [vmem:[#allocation6 + $0x8] sm:$0xff]
    %v1138 = vld [vmem:[#allocation6 + $0x10] sm:$0xff]
    %v1139 = vld [vmem:[#allocation6 + $0x18] sm:$0xff]
    %v1140 = vld [vmem:[#allocation6 + $0x20] sm:$0xff]
    %v1141 = vld [vmem:[#allocation6 + $0x28] sm:$0xff]
    %v1142 = vld [vmem:[#allocation6 + $0x30] sm:$0xff]
    %v1143 = vld [vmem:[#allocation6 + $0x38] sm:$0xff]
    %v1144 = vld [vmem:[#allocation6 + $0x40] sm:$0xff]
    %v1145 = vld [vmem:[#allocation6 + $0x48] sm:$0xff]
    %v1146 = vld [vmem:[#allocation6 + $0x50] sm:$0xff]
    %v1147 = vld [vmem:[#allocation6 + $0x58] sm:$0xff]
    %v1148 = vld [vmem:[#allocation6 + $0x60] sm:$0xff]
    %v1149 = vld [vmem:[#allocation6 + $0x68] sm:$0xff]
    %v1150 = vld [vmem:[#allocation6 + $0x70] sm:$0xff]
    %v1151 = vld [vmem:[#allocation6 + $0x78] sm:$0xff]
    %v1152 = vld [vmem:[#allocation6 + $0x80] sm:$0xff]
    %v1153 = vld [vmem:[#allocation6 + $0x88] sm:$0xff]
    %v1154 = vld [vmem:[#allocation6 + $0x90] sm:$0xff]
    %v1155 = vld [vmem:[#allocation6 + $0x98] sm:$0xff]
    %v1156 = vld [vmem:[#allocation6 + $0xa0] sm:$0xff]
    %v1157 = vld [vmem:[#allocation6 + $0xa8] sm:$0xff]
    %v1158 = vld [vmem:[#allocation6 + $0xb0] sm:$0xff]
    %v1159 = vld [vmem:[#allocation6 + $0xb8] sm:$0xff]
    %v1160 = vld [vmem:[#allocation6 + $0xc0] sm:$0xff]
    %v1161 = vld [vmem:[#allocation6 + $0xc8] sm:$0xff]
    %v1162 = vld [vmem:[#allocation6 + $0xd0] sm:$0xff]
    %v1163 = vld [vmem:[#allocation6 + $0xd8] sm:$0xff]
    %v1164 = vld [vmem:[#allocation6 + $0xe0] sm:$0xff]
    %v1165 = vld [vmem:[#allocation6 + $0xe8] sm:$0xff]
    %v1166 = vld [vmem:[#allocation6 + $0xf0] sm:$0xff]
    %v1167 = vld [vmem:[#allocation6 + $0xf8] sm:$0xff]
    %v1200 = vunpack.c.l.b16 %v1136
    %v1201 = vunpack.c.h.b16 %v1136
    %v1202 = vunpack.c.l.b16 %v1137
    %v1203 = vunpack.c.h.b16 %v1137
    %v1204 = vunpack.c.l.b16 %v1138
    %v1205 = vunpack.c.h.b16 %v1138
    %v1206 = vunpack.c.l.b16 %v1139
    %v1207 = vunpack.c.h.b16 %v1139
    %v1208 = vunpack.c.l.b16 %v1140
    %v1209 = vunpack.c.h.b16 %v1140
    %v1210 = vunpack.c.l.b16 %v1141
    %v1211 = vunpack.c.h.b16 %v1141
    %v1212 = vunpack.c.l.b16 %v1142
    %v1213 = vunpack.c.h.b16 %v1142
    %v1214 = vunpack.c.l.b16 %v1143
    %v1215 = vunpack.c.h.b16 %v1143
    %v1216 = vunpack.c.l.b16 %v1144
    %v1217 = vunpack.c.h.b16 %v1144
    %v1218 = vunpack.c.l.b16 %v1145
    %v1219 = vunpack.c.h.b16 %v1145
    %v1220 = vunpack.c.l.b16 %v1146
    %v1221 = vunpack.c.h.b16 %v1146
    %v1222 = vunpack.c.l.b16 %v1147
    %v1223 = vunpack.c.h.b16 %v1147
    %v1224 = vunpack.c.l.b16 %v1148
    %v1225 = vunpack.c.h.b16 %v1148
    %v1226 = vunpack.c.l.b16 %v1149
    %v1227 = vunpack.c.h.b16 %v1149
    %v1228 = vunpack.c.l.b16 %v1150
    %v1229 = vunpack.c.h.b16 %v1150
    %v1230 = vunpack.c.l.b16 %v1151
    %v1231 = vunpack.c.h.b16 %v1151
    %v1232 = vunpack.c.l.b16 %v1152
    %v1233 = vunpack.c.h.b16 %v1152
    %v1234 = vunpack.c.l.b16 %v1153
    %v1235 = vunpack.c.h.b16 %v1153
    %v1236 = vunpack.c.l.b16 %v1154
    %v1237 = vunpack.c.h.b16 %v1154
    %v1238 = vunpack.c.l.b16 %v1155
    %v1239 = vunpack.c.h.b16 %v1155
    %v1240 = vunpack.c.l.b16 %v1156
    %v1241 = vunpack.c.h.b16 %v1156
    %v1242 = vunpack.c.l.b16 %v1157
    %v1243 = vunpack.c.h.b16 %v1157
    %v1244 = vunpack.c.l.b16 %v1158
    %v1245 = vunpack.c.h.b16 %v1158
    %v1246 = vunpack.c.l.b16 %v1159
    %v1247 = vunpack.c.h.b16 %v1159
    %v1248 = vunpack.c.l.b16 %v1160
    %v1249 = vunpack.c.h.b16 %v1160
    %v1250 = vunpack.c.l.b16 %v1161
    %v1251 = vunpack.c.h.b16 %v1161
    %v1252 = vunpack.c.l.b16 %v1162
    %v1253 = vunpack.c.h.b16 %v1162
    %v1254 = vunpack.c.l.b16 %v1163
    %v1255 = vunpack.c.h.b16 %v1163
    %v1256 = vunpack.c.l.b16 %v1164
    %v1257 = vunpack.c.h.b16 %v1164
    %v1258 = vunpack.c.l.b16 %v1165
    %v1259 = vunpack.c.h.b16 %v1165
    %v1260 = vunpack.c.l.b16 %v1166
    %v1261 = vunpack.c.h.b16 %v1166
    %v1262 = vunpack.c.l.b16 %v1167
    %v1263 = vunpack.c.h.b16 %v1167
    %v1264 = vpack.c.b16 %v1204, %v1200
    %v1265 = vpack.c.b16 %v1205, %v1201
    %v1266 = vpack.c.b16 %v1206, %v1202
    %v1267 = vpack.c.b16 %v1207, %v1203
    %v1268 = vpack.c.b16 %v1212, %v1208
    %v1269 = vpack.c.b16 %v1213, %v1209
    %v1270 = vpack.c.b16 %v1214, %v1210
    %v1271 = vpack.c.b16 %v1215, %v1211
    %v1272 = vpack.c.b16 %v1220, %v1216
    %v1273 = vpack.c.b16 %v1221, %v1217
    %v1274 = vpack.c.b16 %v1222, %v1218
    %v1275 = vpack.c.b16 %v1223, %v1219
    %v1276 = vpack.c.b16 %v1228, %v1224
    %v1277 = vpack.c.b16 %v1229, %v1225
    %v1278 = vpack.c.b16 %v1230, %v1226
    %v1279 = vpack.c.b16 %v1231, %v1227
    %v1280 = vpack.c.b16 %v1236, %v1232
    %v1281 = vpack.c.b16 %v1237, %v1233
    %v1282 = vpack.c.b16 %v1238, %v1234
    %v1283 = vpack.c.b16 %v1239, %v1235
    %v1284 = vpack.c.b16 %v1244, %v1240
    %v1285 = vpack.c.b16 %v1245, %v1241
    %v1286 = vpack.c.b16 %v1246, %v1242
    %v1287 = vpack.c.b16 %v1247, %v1243
    %v1288 = vpack.c.b16 %v1252, %v1248
    %v1289 = vpack.c.b16 %v1253, %v1249
    %v1290 = vpack.c.b16 %v1254, %v1250
    %v1291 = vpack.c.b16 %v1255, %v1251
    %v1292 = vpack.c.b16 %v1260, %v1256
    %v1293 = vpack.c.b16 %v1261, %v1257
    %v1294 = vpack.c.b16 %v1262, %v1258
    %v1295 = vpack.c.b16 %v1263, %v1259
    %1328 = vmatprep.subr.bf16.mxu0 %v1293
    %1329 = vmatpush1.bf16.msra.mxu0 %v1292
    %1330 = vmatprep.subr.bf16.mxu0 %v1289
    %1331 = vmatpush1.bf16.msra.mxu0 %v1288
    %1332 = vmatprep.subr.bf16.mxu0 %v1285
    %1333 = vmatpush1.bf16.msra.mxu0 %v1284
    %1334 = vmatprep.subr.bf16.mxu0 %v1281
    %1335 = vmatpush1.bf16.msra.mxu0 %v1280
    %1336 = vmatprep.subr.bf16.mxu0 %v1277
    %1337 = vmatpush1.bf16.msra.mxu0 %v1276
    %1338 = vmatprep.subr.bf16.mxu0 %v1273
    %1339 = vmatpush1.bf16.msra.mxu0 %v1272
    %1340 = vmatprep.subr.bf16.mxu0 %v1269
    %1341 = vmatpush1.bf16.msra.mxu0 %v1268
    %1342 = vmatprep.subr.bf16.mxu0 %v1265
    %1343 = vmatpush1.bf16.msra.mxu0 %v1264
    %1344 = vmatprep.subr.bf16.mxu0 0
    %1345 = vmatpush2.bf16.msra.mxu0 0
    %1346 = vmatprep.subr.bf16.mxu0 0
    %1347 = vmatpush2.bf16.msra.mxu0 0
    %1348 = vmatprep.subr.bf16.mxu0 0
    %1349 = vmatpush2.bf16.msra.mxu0 0
    %1350 = vmatprep.subr.bf16.mxu0 0
    %1351 = vmatpush2.bf16.msra.mxu0 0
    %1352 = vmatprep.subr.bf16.mxu0 0
    %1353 = vmatpush2.bf16.msra.mxu0 0
    %1354 = vmatprep.subr.bf16.mxu0 0
    %1355 = vmatpush2.bf16.msra.mxu0 0
    %1356 = vmatprep.subr.bf16.mxu0 0
    %1357 = vmatpush2.bf16.msra.mxu0 0
    %1358 = vmatprep.subr.bf16.mxu0 0
    %1359 = vmatpush2.bf16.msra.mxu0 0
    %1360 = vmatprep.mubr.bf16.mxu0 0
    %1361 = vmatmul.mubr.bf16.gmra.mxu0 0
    %v1362 = vpop.f32.mrf.mxu0
    %v1363 = vadd.f32 0.0, %v1362
    %v1364 = vpop.f32.mrf.mxu0
    %v1365 = vadd.f32 0.0, %v1364
    %v1366 = vpop.f32.mrf.mxu0
    %v1367 = vadd.f32 0.0, %v1366
    %v1368 = vpop.f32.mrf.mxu0
    %v1369 = vadd.f32 0.0, %v1368
    %1370 = vdwg.mxu0
    %1371 = vmatprep.subr.bf16.mxu0 %v1295
    %1372 = vmatpush1.bf16.msra.mxu0 %v1294
    %1373 = vmatprep.subr.bf16.mxu0 %v1291
    %1374 = vmatpush1.bf16.msra.mxu0 %v1290
    %1375 = vmatprep.subr.bf16.mxu0 %v1287
    %1376 = vmatpush1.bf16.msra.mxu0 %v1286
    %1377 = vmatprep.subr.bf16.mxu0 %v1283
    %1378 = vmatpush1.bf16.msra.mxu0 %v1282
    %1379 = vmatprep.subr.bf16.mxu0 %v1279
    %1380 = vmatpush1.bf16.msra.mxu0 %v1278
    %1381 = vmatprep.subr.bf16.mxu0 %v1275
    %1382 = vmatpush1.bf16.msra.mxu0 %v1274
    %1383 = vmatprep.subr.bf16.mxu0 %v1271
    %1384 = vmatpush1.bf16.msra.mxu0 %v1270
    %1385 = vmatprep.subr.bf16.mxu0 %v1267
    %1386 = vmatpush1.bf16.msra.mxu0 %v1266
    %1387 = vmatprep.subr.bf16.mxu0 0
    %1388 = vmatpush2.bf16.msra.mxu0 0
    %1389 = vmatprep.subr.bf16.mxu0 0
    %1390 = vmatpush2.bf16.msra.mxu0 0
    %1391 = vmatprep.subr.bf16.mxu0 0
    %1392 = vmatpush2.bf16.msra.mxu0 0
    %1393 = vmatprep.subr.bf16.mxu0 0
    %1394 = vmatpush2.bf16.msra.mxu0 0
    %1395 = vmatprep.subr.bf16.mxu0 0
    %1396 = vmatpush2.bf16.msra.mxu0 0
    %1397 = vmatprep.subr.bf16.mxu0 0
    %1398 = vmatpush2.bf16.msra.mxu0 0
    %1399 = vmatprep.subr.bf16.mxu0 0
    %1400 = vmatpush2.bf16.msra.mxu0 0
    %1401 = vmatprep.subr.bf16.mxu0 0
    %1402 = vmatpush2.bf16.msra.mxu0 0
    %1403 = vmatprep.mubr.bf16.mxu0 0
    %1404 = vmatmul.mubr.bf16.gmra.mxu0 0
    %v1405 = vpop.f32.mrf.mxu0
    %v1406 = vadd.f32 0.0, %v1405
    %v1407 = vpop.f32.mrf.mxu0
    %v1408 = vadd.f32 0.0, %v1407
    %v1409 = vpop.f32.mrf.mxu0
    %v1410 = vadd.f32 0.0, %v1409
    %v1411 = vpop.f32.mrf.mxu0
    %v1412 = vadd.f32 0.0, %v1411
    %1413 = vdwg.mxu0
    %v1414 = vadd.f32 %v1065, %v1363
    %v1415 = vadd.f32 %v1067, %v1365
    %v1416 = vadd.f32 %v1118, %v1406
    %v1417 = vadd.f32 %v1120, %v1408
    %v1418 = vadd.f32 %v1069, %v1367
    %v1419 = vadd.f32 %v1071, %v1369
    %v1420 = vadd.f32 %v1122, %v1410
    %v1421 = vadd.f32 %v1124, %v1412
    %v1422 = vxor.u32 %v1414, 2147483648
    %v1423 = vxor.u32 %v1418, 2147483648
    %v1424 = vmul.f32 %v1422, 1.442695
    %v1425 = vpow.pop %v1424
    %v1426 = vmul.f32 %v1423, 1.442695
    %v1427 = vpow.pop %v1426
    %v1428 = vadd.f32 %v1425, 1.0
    %v1429 = vadd.f32 %v1427, 1.0
    %v1430 = vrcp.pop %v1428
    %v1431 = vmul.f32 1.0, %v1430
    %v1432 = vrcp.pop %v1429
    %v1433 = vmul.f32 1.0, %v1432
    %v1434 = vxor.u32 %v1415, 2147483648
    %v1435 = vxor.u32 %v1419, 2147483648
    %v1436 = vmul.f32 %v1434, 1.442695
    %v1437 = vpow.pop %v1436
    %v1438 = vmul.f32 %v1435, 1.442695
    %v1439 = vpow.pop %v1438
    %v1440 = vadd.f32 %v1437, 1.0
    %v1441 = vadd.f32 %v1439, 1.0
    %v1442 = vrcp.pop %v1440
    %v1443 = vmul.f32 1.0, %v1442
    %v1444 = vrcp.pop %v1441
    %v1445 = vmul.f32 1.0, %v1444
    %v1446 = vtanh.pop %v1416
    %v1447 = vtanh.pop %v1420
    %v1448 = vxor.u32 %v1417, 2147483648
    %v1449 = vxor.u32 %v1421, 2147483648
    %v1450 = vmul.f32 %v1448, 1.442695
    %v1451 = vpow.pop %v1450
    %v1452 = vmul.f32 %v1449, 1.442695
    %v1453 = vpow.pop %v1452
    %v1454 = vadd.f32 %v1451, 1.0
    %v1455 = vadd.f32 %v1453, 1.0
    %v1456 = vrcp.pop %v1454
    %v1457 = vmul.f32 1.0, %v1456
    %v1458 = vrcp.pop %v1455
    %v1459 = vmul.f32 1.0, %v1458
    %v1460 = vmul.f32 %v1443, 0.0
    %v1461 = vmul.f32 %v1445, 0.0
    %v1462 = vmul.f32 %v1431, %v1446
    %v1463 = vmul.f32 %v1433, %v1447
    %v1464 = vadd.f32 %v1460, %v1462
    %v1465 = vadd.f32 %v1461, %v1463
    %v1466 = vtanh.pop %v1464
    %v1467 = vtanh.pop %v1465
    %v1468 = vmul.f32 %v1457, %v1466
    %v1469 = vmul.f32 %v1459, %v1467
    %v1470 = vpack.c.bf16 %v1469, %v1468
    %1471 = vmatprep.subr.bf16.mxu0 %v1293
    %1472 = vmatpush1.bf16.msra.mxu0 %v1292
    %1473 = vmatprep.subr.bf16.mxu0 %v1289
    %1474 = vmatpush1.bf16.msra.mxu0 %v1288
    %1475 = vmatprep.subr.bf16.mxu0 %v1285
    %1476 = vmatpush1.bf16.msra.mxu0 %v1284
    %1477 = vmatprep.subr.bf16.mxu0 %v1281
    %1478 = vmatpush1.bf16.msra.mxu0 %v1280
    %1479 = vmatprep.subr.bf16.mxu0 %v1277
    %1480 = vmatpush1.bf16.msra.mxu0 %v1276
    %1481 = vmatprep.subr.bf16.mxu0 %v1273
    %1482 = vmatpush1.bf16.msra.mxu0 %v1272
    %1483 = vmatprep.subr.bf16.mxu0 %v1269
    %1484 = vmatpush1.bf16.msra.mxu0 %v1268
    %1485 = vmatprep.subr.bf16.mxu0 %v1265
    %1486 = vmatpush1.bf16.msra.mxu0 %v1264
    %1487 = vmatprep.subr.bf16.mxu0 0
    %1488 = vmatpush2.bf16.msra.mxu0 0
    %1489 = vmatprep.subr.bf16.mxu0 0
    %1490 = vmatpush2.bf16.msra.mxu0 0
    %1491 = vmatprep.subr.bf16.mxu0 0
    %1492 = vmatpush2.bf16.msra.mxu0 0
    %1493 = vmatprep.subr.bf16.mxu0 0
    %1494 = vmatpush2.bf16.msra.mxu0 0
    %1495 = vmatprep.subr.bf16.mxu0 0
    %1496 = vmatpush2.bf16.msra.mxu0 0
    %1497 = vmatprep.subr.bf16.mxu0 0
    %1498 = vmatpush2.bf16.msra.mxu0 0
    %1499 = vmatprep.subr.bf16.mxu0 0
    %1500 = vmatpush2.bf16.msra.mxu0 0
    %1501 = vmatprep.subr.bf16.mxu0 0
    %1502 = vmatpush2.bf16.msra.mxu0 0
    %1503 = vmatprep.mubr.bf16.mxu0 0
    %1504 = vmatmul.mubr.bf16.gmra.mxu0 %v1470
    %v1505 = vpop.f32.mrf.mxu0
    %v1506 = vadd.f32 0.0, %v1505
    %v1507 = vpop.f32.mrf.mxu0
    %v1508 = vadd.f32 0.0, %v1507
    %v1509 = vpop.f32.mrf.mxu0
    %v1510 = vadd.f32 0.0, %v1509
    %v1511 = vpop.f32.mrf.mxu0
    %v1512 = vadd.f32 0.0, %v1511
    %1513 = vdwg.mxu0
    %1514 = vmatprep.subr.bf16.mxu0 %v1295
    %1515 = vmatpush1.bf16.msra.mxu0 %v1294
    %1516 = vmatprep.subr.bf16.mxu0 %v1291
    %1517 = vmatpush1.bf16.msra.mxu0 %v1290
    %1518 = vmatprep.subr.bf16.mxu0 %v1287
    %1519 = vmatpush1.bf16.msra.mxu0 %v1286
    %1520 = vmatprep.subr.bf16.mxu0 %v1283
    %1521 = vmatpush1.bf16.msra.mxu0 %v1282
    %1522 = vmatprep.subr.bf16.mxu0 %v1279
    %1523 = vmatpush1.bf16.msra.mxu0 %v1278
    %1524 = vmatprep.subr.bf16.mxu0 %v1275
    %1525 = vmatpush1.bf16.msra.mxu0 %v1274
    %1526 = vmatprep.subr.bf16.mxu0 %v1271
    %1527 = vmatpush1.bf16.msra.mxu0 %v1270
    %1528 = vmatprep.subr.bf16.mxu0 %v1267
    %1529 = vmatpush1.bf16.msra.mxu0 %v1266
    %1530 = vmatprep.subr.bf16.mxu0 0
    %1531 = vmatpush2.bf16.msra.mxu0 0
    %1532 = vmatprep.subr.bf16.mxu0 0
    %1533 = vmatpush2.bf16.msra.mxu0 0
    %1534 = vmatprep.subr.bf16.mxu0 0
    %1535 = vmatpush2.bf16.msra.mxu0 0
    %1536 = vmatprep.subr.bf16.mxu0 0
    %1537 = vmatpush2.bf16.msra.mxu0 0
    %1538 = vmatprep.subr.bf16.mxu0 0
    %1539 = vmatpush2.bf16.msra.mxu0 0
    %1540 = vmatprep.subr.bf16.mxu0 0
    %1541 = vmatpush2.bf16.msra.mxu0 0
    %1542 = vmatprep.subr.bf16.mxu0 0
    %1543 = vmatpush2.bf16.msra.mxu0 0
    %1544 = vmatprep.subr.bf16.mxu0 0
    %1545 = vmatpush2.bf16.msra.mxu0 0
    %1546 = vmatprep.mubr.bf16.mxu0 0
    %1547 = vmatmul.mubr.bf16.gmra.mxu0 %v1470
    %v1548 = vpop.f32.mrf.mxu0
    %v1549 = vadd.f32 0.0, %v1548
    %v1550 = vpop.f32.mrf.mxu0
    %v1551 = vadd.f32 0.0, %v1550
    %v1552 = vpop.f32.mrf.mxu0
    %v1553 = vadd.f32 0.0, %v1552
    %v1554 = vpop.f32.mrf.mxu0
    %v1555 = vadd.f32 0.0, %v1554
    %1556 = vdwg.mxu0
    %v1557 = vadd.f32 %v1075, %v1506
    %v1558 = vadd.f32 %v1077, %v1508
    %v1559 = vadd.f32 %v1128, %v1549
    %v1560 = vadd.f32 %v1130, %v1551
    %v1561 = vadd.f32 %v1079, %v1510
    %v1562 = vadd.f32 %v1081, %v1512
    %v1563 = vadd.f32 %v1132, %v1553
    %v1564 = vadd.f32 %v1134, %v1555
    %v1565 = vxor.u32 %v1557, 2147483648
    %v1566 = vxor.u32 %v1561, 2147483648
    %v1567 = vmul.f32 %v1565, 1.442695
    %v1568 = vpow.pop %v1567
    %v1569 = vmul.f32 %v1566, 1.442695
    %v1570 = vpow.pop %v1569
    %v1571 = vadd.f32 %v1568, 1.0
    %v1572 = vadd.f32 %v1570, 1.0
    %v1573 = vrcp.pop %v1571
    %v1574 = vmul.f32 1.0, %v1573
    %v1575 = vrcp.pop %v1572
    %v1576 = vmul.f32 1.0, %v1575
    %v1577 = vxor.u32 %v1558, 2147483648
    %v1578 = vxor.u32 %v1562, 2147483648
    %v1579 = vmul.f32 %v1577, 1.442695
    %v1580 = vpow.pop %v1579
    %v1581 = vmul.f32 %v1578, 1.442695
    %v1582 = vpow.pop %v1581
    %v1583 = vadd.f32 %v1580, 1.0
    %v1584 = vadd.f32 %v1582, 1.0
    %v1585 = vrcp.pop %v1583
    %v1586 = vmul.f32 1.0, %v1585
    %v1587 = vrcp.pop %v1584
    %v1588 = vmul.f32 1.0, %v1587
    %v1589 = vtanh.pop %v1559
    %v1590 = vtanh.pop %v1563
    %v1591 = vxor.u32 %v1560, 2147483648
    %v1592 = vxor.u32 %v1564, 2147483648
    %v1593 = vmul.f32 %v1591, 1.442695
    %v1594 = vpow.pop %v1593
    %v1595 = vmul.f32 %v1592, 1.442695
    %v1596 = vpow.pop %v1595
    %v1597 = vadd.f32 %v1594, 1.0
    %v1598 = vadd.f32 %v1596, 1.0
    %v1599 = vrcp.pop %v1597
    %v1600 = vmul.f32 1.0, %v1599
    %v1601 = vrcp.pop %v1598
    %v1602 = vmul.f32 1.0, %v1601
    %v1603 = vmul.f32 %v1586, %v1464
    %v1604 = vmul.f32 %v1588, %v1465
    %v1605 = vmul.f32 %v1574, %v1589
    %v1606 = vmul.f32 %v1576, %v1590
    %v1607 = vadd.f32 %v1603, %v1605
    %v1608 = vadd.f32 %v1604, %v1606
    %v1609 = vtanh.pop %v1607
    %v1610 = vtanh.pop %v1608
    %v1611 = vmul.f32 %v1600, %v1609
    %v1612 = vmul.f32 %v1602, %v1610
    %v1613 = vld [vmem:[%s7] sm:$0xf]
    %v1614 = vld [vmem:[%s7 + $0x4] sm:$0xf]
    %v1615 = vld [vmem:[%s7 + $0x8] sm:$0xf]
    %v1616 = vld [vmem:[%s7 + $0xc] sm:$0xf]
    %v1617 = vld [vmem:[%s7 + $0x10] sm:$0xf]
    %v1618 = vld [vmem:[%s7 + $0x14] sm:$0xf]
    %v1619 = vld [vmem:[%s7 + $0x18] sm:$0xf]
    %v1620 = vld [vmem:[%s7 + $0x1c] sm:$0xf]
    %v1621 = vld [vmem:[%s7 + $0x20] sm:$0xf]
    %v1622 = vld [vmem:[%s7 + $0x24] sm:$0xf]
    %v1623 = vld [vmem:[%s7 + $0x28] sm:$0xf]
    %v1624 = vld [vmem:[%s7 + $0x2c] sm:$0xf]
    %v1625 = vld [vmem:[%s7 + $0x30] sm:$0xf]
    %v1626 = vld [vmem:[%s7 + $0x34] sm:$0xf]
    %v1627 = vld [vmem:[%s7 + $0x38] sm:$0xf]
    %v1628 = vld [vmem:[%s7 + $0x3c] sm:$0xf]
    %v1629 = vpack.c.bf16 %v1612, %v1611
    %v1630 = vld [vmem:[%s8] sm:$0x1]
    %v1632 = vlaneseq
    %v1633 = vshrl.u32 %v1632, 7
    %v1634 = vsub.s32 0, %v1633
    %v1635 = vrot.slane %v1630, %v1634
    %v1653 = vunpack.c.l.b16 %v1613
    %v1654 = vunpack.c.l.b16 %v1614
    %v1655 = vunpack.c.l.b16 %v1615
    %v1656 = vunpack.c.l.b16 %v1616
    %v1657 = vunpack.c.l.b16 %v1617
    %v1658 = vunpack.c.l.b16 %v1618
    %v1659 = vunpack.c.l.b16 %v1619
    %v1660 = vunpack.c.l.b16 %v1620
    %v1661 = vunpack.c.l.b16 %v1621
    %v1662 = vunpack.c.l.b16 %v1622
    %v1663 = vunpack.c.l.b16 %v1623
    %v1664 = vunpack.c.l.b16 %v1624
    %v1665 = vunpack.c.l.b16 %v1625
    %v1666 = vunpack.c.l.b16 %v1626
    %v1667 = vunpack.c.l.b16 %v1627
    %v1668 = vunpack.c.l.b16 %v1628
    %v1669 = vpack.c.b16 %v1654, %v1653
    %v1670 = vpack.c.b16 %v1656, %v1655
    %v1671 = vpack.c.b16 %v1658, %v1657
    %v1672 = vpack.c.b16 %v1660, %v1659
    %v1673 = vpack.c.b16 %v1662, %v1661
    %v1674 = vpack.c.b16 %v1664, %v1663
    %v1675 = vpack.c.b16 %v1666, %v1665
    %v1676 = vpack.c.b16 %v1668, %v1667
    %1685 = vmatprep.subr.bf16.mxu0 0
    %1686 = vmatpush1.bf16.msra.mxu0 %v1676
    %1687 = vmatprep.subr.bf16.mxu0 0
    %1688 = vmatpush1.bf16.msra.mxu0 %v1675
    %1689 = vmatprep.subr.bf16.mxu0 0
    %1690 = vmatpush1.bf16.msra.mxu0 %v1674
    %1691 = vmatprep.subr.bf16.mxu0 0
    %1692 = vmatpush1.bf16.msra.mxu0 %v1673
    %1693 = vmatprep.subr.bf16.mxu0 0
    %1694 = vmatpush1.bf16.msra.mxu0 %v1672
    %1695 = vmatprep.subr.bf16.mxu0 0
    %1696 = vmatpush1.bf16.msra.mxu0 %v1671
    %1697 = vmatprep.subr.bf16.mxu0 0
    %1698 = vmatpush1.bf16.msra.mxu0 %v1670
    %1699 = vmatprep.subr.bf16.mxu0 0
    %1700 = vmatpush1.bf16.msra.mxu0 %v1669
    %1701 = vmatprep.subr.bf16.mxu0 0
    %1702 = vmatpush2.bf16.msra.mxu0 0
    %1703 = vmatprep.subr.bf16.mxu0 0
    %1704 = vmatpush2.bf16.msra.mxu0 0
    %1705 = vmatprep.subr.bf16.mxu0 0
    %1706 = vmatpush2.bf16.msra.mxu0 0
    %1707 = vmatprep.subr.bf16.mxu0 0
    %1708 = vmatpush2.bf16.msra.mxu0 0
    %1709 = vmatprep.subr.bf16.mxu0 0
    %1710 = vmatpush2.bf16.msra.mxu0 0
    %1711 = vmatprep.subr.bf16.mxu0 0
    %1712 = vmatpush2.bf16.msra.mxu0 0
    %1713 = vmatprep.subr.bf16.mxu0 0
    %1714 = vmatpush2.bf16.msra.mxu0 0
    %1715 = vmatprep.subr.bf16.mxu0 0
    %1716 = vmatpush2.bf16.msra.mxu0 0
    %1717 = vmatprep.mubr.bf16.mxu0 0
    %1718 = vmatmul.mubr.bf16.gmra.mxu0 %v1470
    %v1719 = vpop.f32.mrf.mxu0
    %v1720 = vadd.f32 %v1635, %v1719
    %v1721 = vpop.f32.mrf.mxu0
    %v1722 = vpop.f32.mrf.mxu0
    %v1723 = vadd.f32 %v1635, %v1722
    %v1724 = vpop.f32.mrf.mxu0
    %1725 = vmatprep.mubr.bf16.mxu0 0
    %1726 = vmatmul.mubr.bf16.gmra.mxu0 %v1629
    %v1727 = vpop.f32.mrf.mxu0
    %v1728 = vadd.f32 %v1635, %v1727
    %v1729 = vpop.f32.mrf.mxu0
    %v1730 = vpop.f32.mrf.mxu0
    %v1731 = vadd.f32 %v1635, %v1730
    %v1732 = vpop.f32.mrf.mxu0
    %1733 = vdwg.mxu0
    %v1734 = vtanh.pop %v1720
    %v1735 = vtanh.pop %v1723
    %v1736 = vtanh.pop %v1728
    %v1737 = vtanh.pop %v1731
    %v1738 = vld [vmem:[#allocation7] sm:$0xf]
    %v1739 = vld [vmem:[#allocation7 + $0x4] sm:$0xf]
    %v1740 = vld [vmem:[#allocation7 + $0x8] sm:$0xf]
    %v1741 = vld [vmem:[#allocation7 + $0xc] sm:$0xf]
    %v1742 = vld [vmem:[#allocation7 + $0x10] sm:$0xf]
    %v1743 = vld [vmem:[#allocation7 + $0x14] sm:$0xf]
    %v1744 = vld [vmem:[#allocation7 + $0x18] sm:$0xf]
    %v1745 = vld [vmem:[#allocation7 + $0x1c] sm:$0xf]
    %v1746 = vld [vmem:[#allocation7 + $0x20] sm:$0xf]
    %v1747 = vld [vmem:[#allocation7 + $0x24] sm:$0xf]
    %v1748 = vld [vmem:[#allocation7 + $0x28] sm:$0xf]
    %v1749 = vld [vmem:[#allocation7 + $0x2c] sm:$0xf]
    %v1750 = vld [vmem:[#allocation7 + $0x30] sm:$0xf]
    %v1751 = vld [vmem:[#allocation7 + $0x34] sm:$0xf]
    %v1752 = vld [vmem:[#allocation7 + $0x38] sm:$0xf]
    %v1753 = vld [vmem:[#allocation7 + $0x3c] sm:$0xf]
    %v1754 = vld [vmem:[%s10] sm:$0x1]
    %v1756 = vlaneseq
    %v1757 = vshrl.u32 %v1756, 7
    %v1758 = vsub.s32 0, %v1757
    %v1759 = vrot.slane %v1754, %v1758
    %v1777 = vunpack.c.l.b16 %v1738
    %v1778 = vunpack.c.l.b16 %v1739
    %v1779 = vunpack.c.l.b16 %v1740
    %v1780 = vunpack.c.l.b16 %v1741
    %v1781 = vunpack.c.l.b16 %v1742
    %v1782 = vunpack.c.l.b16 %v1743
    %v1783 = vunpack.c.l.b16 %v1744
    %v1784 = vunpack.c.l.b16 %v1745
    %v1785 = vunpack.c.l.b16 %v1746
    %v1786 = vunpack.c.l.b16 %v1747
    %v1787 = vunpack.c.l.b16 %v1748
    %v1788 = vunpack.c.l.b16 %v1749
    %v1789 = vunpack.c.l.b16 %v1750
    %v1790 = vunpack.c.l.b16 %v1751
    %v1791 = vunpack.c.l.b16 %v1752
    %v1792 = vunpack.c.l.b16 %v1753
    %v1793 = vpack.c.b16 %v1778, %v1777
    %v1794 = vpack.c.b16 %v1780, %v1779
    %v1795 = vpack.c.b16 %v1782, %v1781
    %v1796 = vpack.c.b16 %v1784, %v1783
    %v1797 = vpack.c.b16 %v1786, %v1785
    %v1798 = vpack.c.b16 %v1788, %v1787
    %v1799 = vpack.c.b16 %v1790, %v1789
    %v1800 = vpack.c.b16 %v1792, %v1791
    %1809 = vmatprep.subr.bf16.mxu0 0
    %1810 = vmatpush1.bf16.msra.mxu0 %v1800
    %1811 = vmatprep.subr.bf16.mxu0 0
    %1812 = vmatpush1.bf16.msra.mxu0 %v1799
    %1813 = vmatprep.subr.bf16.mxu0 0
    %1814 = vmatpush1.bf16.msra.mxu0 %v1798
    %1815 = vmatprep.subr.bf16.mxu0 0
    %1816 = vmatpush1.bf16.msra.mxu0 %v1797
    %1817 = vmatprep.subr.bf16.mxu0 0
    %1818 = vmatpush1.bf16.msra.mxu0 %v1796
    %1819 = vmatprep.subr.bf16.mxu0 0
    %1820 = vmatpush1.bf16.msra.mxu0 %v1795
    %1821 = vmatprep.subr.bf16.mxu0 0
    %1822 = vmatpush1.bf16.msra.mxu0 %v1794
    %1823 = vmatprep.subr.bf16.mxu0 0
    %1824 = vmatpush1.bf16.msra.mxu0 %v1793
    %1825 = vmatprep.subr.bf16.mxu0 0
    %1826 = vmatpush2.bf16.msra.mxu0 0
    %1827 = vmatprep.subr.bf16.mxu0 0
    %1828 = vmatpush2.bf16.msra.mxu0 0
    %1829 = vmatprep.subr.bf16.mxu0 0
    %1830 = vmatpush2.bf16.msra.mxu0 0
    %1831 = vmatprep.subr.bf16.mxu0 0
    %1832 = vmatpush2.bf16.msra.mxu0 0
    %1833 = vmatprep.subr.bf16.mxu0 0
    %1834 = vmatpush2.bf16.msra.mxu0 0
    %1835 = vmatprep.subr.bf16.mxu0 0
    %1836 = vmatpush2.bf16.msra.mxu0 0
    %1837 = vmatprep.subr.bf16.mxu0 0
    %1838 = vmatpush2.bf16.msra.mxu0 0
    %1839 = vmatprep.subr.bf16.mxu0 0
    %1840 = vmatpush2.bf16.msra.mxu0 0
    %1841 = vmatprep.mubr.bf16.mxu0 0
    %1842 = vmatmul.mubr.bf16.gmra.mxu0 %v847
    %v1843 = vpop.f32.mrf.mxu0
    %v1844 = vadd.f32 %v1759, %v1843
    %v1845 = vpop.f32.mrf.mxu0
    %v1846 = vpop.f32.mrf.mxu0
    %v1847 = vadd.f32 %v1759, %v1846
    %v1848 = vpop.f32.mrf.mxu0
    %1849 = vmatprep.mubr.bf16.mxu0 0
    %1850 = vmatmul.mubr.bf16.gmra.mxu0 %v1629
    %v1851 = vpop.f32.mrf.mxu0
    %v1852 = vadd.f32 %v1759, %v1851
    %v1853 = vpop.f32.mrf.mxu0
    %v1854 = vpop.f32.mrf.mxu0
    %v1855 = vadd.f32 %v1759, %v1854
    %v1856 = vpop.f32.mrf.mxu0
    %1857 = vdwg.mxu0
    %v1858 = vtanh.pop %v1844
    %v1859 = vtanh.pop %v1847
    %v1860 = vtanh.pop %v1852
    %v1861 = vtanh.pop %v1855
    %v1862 = vld [vmem:[#allocation9] sm:$0xff]
    %v1863 = vld [vmem:[#allocation9 + $0x8] sm:$0xff]
    %v1864 = vld [vmem:[#allocation9 + $0x10] sm:$0xff]
    %v1865 = vld [vmem:[#allocation9 + $0x18] sm:$0xff]
    %v1866 = vld [vmem:[#allocation9 + $0x20] sm:$0xff]
    %v1867 = vld [vmem:[#allocation9 + $0x28] sm:$0xff]
    %v1868 = vld [vmem:[#allocation9 + $0x30] sm:$0xff]
    %v1869 = vld [vmem:[#allocation9 + $0x38] sm:$0xff]
    %v1870 = vld [vmem:[#allocation9 + $0x40] sm:$0xff]
    %v1871 = vld [vmem:[#allocation9 + $0x48] sm:$0xff]
    %v1872 = vld [vmem:[#allocation9 + $0x50] sm:$0xff]
    %v1873 = vld [vmem:[#allocation9 + $0x58] sm:$0xff]
    %v1874 = vld [vmem:[#allocation9 + $0x60] sm:$0xff]
    %v1875 = vld [vmem:[#allocation9 + $0x68] sm:$0xff]
    %v1876 = vld [vmem:[#allocation9 + $0x70] sm:$0xff]
    %v1877 = vld [vmem:[#allocation9 + $0x78] sm:$0xff]
    %v1878 = vld [vmem:[#allocation9 + $0x80] sm:$0xff]
    %v1879 = vld [vmem:[#allocation9 + $0x88] sm:$0xff]
    %v1880 = vld [vmem:[#allocation9 + $0x90] sm:$0xff]
    %v1881 = vld [vmem:[#allocation9 + $0x98] sm:$0xff]
    %v1882 = vld [vmem:[#allocation9 + $0xa0] sm:$0xff]
    %v1883 = vld [vmem:[#allocation9 + $0xa8] sm:$0xff]
    %v1884 = vld [vmem:[#allocation9 + $0xb0] sm:$0xff]
    %v1885 = vld [vmem:[#allocation9 + $0xb8] sm:$0xff]
    %v1886 = vld [vmem:[#allocation9 + $0xc0] sm:$0xff]
    %v1887 = vld [vmem:[#allocation9 + $0xc8] sm:$0xff]
    %v1888 = vld [vmem:[#allocation9 + $0xd0] sm:$0xff]
    %v1889 = vld [vmem:[#allocation9 + $0xd8] sm:$0xff]
    %v1890 = vld [vmem:[#allocation9 + $0xe0] sm:$0xff]
    %v1891 = vld [vmem:[#allocation9 + $0xe8] sm:$0xff]
    %v1892 = vld [vmem:[#allocation9 + $0xf0] sm:$0xff]
    %v1893 = vld [vmem:[#allocation9 + $0xf8] sm:$0xff]
    %v1894 = vpack.c.bf16 %v1735, %v1734
    %v1895 = vpack.c.bf16 %v1737, %v1736
    %v1896 = vld [vmem:[%s13] sm:$0xf]
    %v1898 = vlaneseq
    %v1899 = vshrl.u32 %v1898, 7
    %v1900 = vsub.s32 0, %v1899
    %v1901 = vrot.slane %v1896, %v1900
    %v1902 = vlaneseq
    %v1903 = vshrl.u32 %v1902, 7
    %v1904 = vsub.s32 1, %v1903
    %v1905 = vrot.slane %v1896, %v1904
    %v1906 = vlaneseq
    %v1907 = vshrl.u32 %v1906, 7
    %v1908 = vsub.s32 2, %v1907
    %v1909 = vrot.slane %v1896, %v1908
    %v1910 = vlaneseq
    %v1911 = vshrl.u32 %v1910, 7
    %v1912 = vsub.s32 3, %v1911
    %v1913 = vrot.slane %v1896, %v1912
    %v1950 = vunpack.c.l.b16 %v1862
    %v1951 = vunpack.c.h.b16 %v1862
    %v1952 = vunpack.c.l.b16 %v1863
    %v1953 = vunpack.c.h.b16 %v1863
    %v1954 = vunpack.c.l.b16 %v1864
    %v1955 = vunpack.c.h.b16 %v1864
    %v1956 = vunpack.c.l.b16 %v1865
    %v1957 = vunpack.c.h.b16 %v1865
    %v1958 = vunpack.c.l.b16 %v1866
    %v1959 = vunpack.c.h.b16 %v1866
    %v1960 = vunpack.c.l.b16 %v1867
    %v1961 = vunpack.c.h.b16 %v1867
    %v1962 = vunpack.c.l.b16 %v1868
    %v1963 = vunpack.c.h.b16 %v1868
    %v1964 = vunpack.c.l.b16 %v1869
    %v1965 = vunpack.c.h.b16 %v1869
    %v1966 = vunpack.c.l.b16 %v1870
    %v1967 = vunpack.c.h.b16 %v1870
    %v1968 = vunpack.c.l.b16 %v1871
    %v1969 = vunpack.c.h.b16 %v1871
    %v1970 = vunpack.c.l.b16 %v1872
    %v1971 = vunpack.c.h.b16 %v1872
    %v1972 = vunpack.c.l.b16 %v1873
    %v1973 = vunpack.c.h.b16 %v1873
    %v1974 = vunpack.c.l.b16 %v1874
    %v1975 = vunpack.c.h.b16 %v1874
    %v1976 = vunpack.c.l.b16 %v1875
    %v1977 = vunpack.c.h.b16 %v1875
    %v1978 = vunpack.c.l.b16 %v1876
    %v1979 = vunpack.c.h.b16 %v1876
    %v1980 = vunpack.c.l.b16 %v1877
    %v1981 = vunpack.c.h.b16 %v1877
    %v1982 = vunpack.c.l.b16 %v1878
    %v1983 = vunpack.c.h.b16 %v1878
    %v1984 = vunpack.c.l.b16 %v1879
    %v1985 = vunpack.c.h.b16 %v1879
    %v1986 = vunpack.c.l.b16 %v1880
    %v1987 = vunpack.c.h.b16 %v1880
    %v1988 = vunpack.c.l.b16 %v1881
    %v1989 = vunpack.c.h.b16 %v1881
    %v1990 = vunpack.c.l.b16 %v1882
    %v1991 = vunpack.c.h.b16 %v1882
    %v1992 = vunpack.c.l.b16 %v1883
    %v1993 = vunpack.c.h.b16 %v1883
    %v1994 = vunpack.c.l.b16 %v1884
    %v1995 = vunpack.c.h.b16 %v1884
    %v1996 = vunpack.c.l.b16 %v1885
    %v1997 = vunpack.c.h.b16 %v1885
    %v1998 = vunpack.c.l.b16 %v1886
    %v1999 = vunpack.c.h.b16 %v1886
    %v2000 = vunpack.c.l.b16 %v1887
    %v2001 = vunpack.c.h.b16 %v1887
    %v2002 = vunpack.c.l.b16 %v1888
    %v2003 = vunpack.c.h.b16 %v1888
    %v2004 = vunpack.c.l.b16 %v1889
    %v2005 = vunpack.c.h.b16 %v1889
    %v2006 = vunpack.c.l.b16 %v1890
    %v2007 = vunpack.c.h.b16 %v1890
    %v2008 = vunpack.c.l.b16 %v1891
    %v2009 = vunpack.c.h.b16 %v1891
    %v2010 = vunpack.c.l.b16 %v1892
    %v2011 = vunpack.c.h.b16 %v1892
    %v2012 = vunpack.c.l.b16 %v1893
    %v2013 = vunpack.c.h.b16 %v1893
    %v2014 = vpack.c.b16 %v1954, %v1950
    %v2015 = vpack.c.b16 %v1955, %v1951
    %v2016 = vpack.c.b16 %v1956, %v1952
    %v2017 = vpack.c.b16 %v1957, %v1953
    %v2018 = vpack.c.b16 %v1962, %v1958
    %v2019 = vpack.c.b16 %v1963, %v1959
    %v2020 = vpack.c.b16 %v1964, %v1960
    %v2021 = vpack.c.b16 %v1965, %v1961
    %v2022 = vpack.c.b16 %v1970, %v1966
    %v2023 = vpack.c.b16 %v1971, %v1967
    %v2024 = vpack.c.b16 %v1972, %v1968
    %v2025 = vpack.c.b16 %v1973, %v1969
    %v2026 = vpack.c.b16 %v1978, %v1974
    %v2027 = vpack.c.b16 %v1979, %v1975
    %v2028 = vpack.c.b16 %v1980, %v1976
    %v2029 = vpack.c.b16 %v1981, %v1977
    %v2030 = vpack.c.b16 %v1986, %v1982
    %v2031 = vpack.c.b16 %v1987, %v1983
    %v2032 = vpack.c.b16 %v1988, %v1984
    %v2033 = vpack.c.b16 %v1989, %v1985
    %v2034 = vpack.c.b16 %v1994, %v1990
    %v2035 = vpack.c.b16 %v1995, %v1991
    %v2036 = vpack.c.b16 %v1996, %v1992
    %v2037 = vpack.c.b16 %v1997, %v1993
    %v2038 = vpack.c.b16 %v2002, %v1998
    %v2039 = vpack.c.b16 %v2003, %v1999
    %v2040 = vpack.c.b16 %v2004, %v2000
    %v2041 = vpack.c.b16 %v2005, %v2001
    %v2042 = vpack.c.b16 %v2010, %v2006
    %v2043 = vpack.c.b16 %v2011, %v2007
    %v2044 = vpack.c.b16 %v2012, %v2008
    %v2045 = vpack.c.b16 %v2013, %v2009
    %2078 = vmatprep.subr.bf16.mxu0 %v2043
    %2079 = vmatpush1.bf16.msra.mxu0 %v2042
    %2080 = vmatprep.subr.bf16.mxu0 %v2039
    %2081 = vmatpush1.bf16.msra.mxu0 %v2038
    %2082 = vmatprep.subr.bf16.mxu0 %v2035
    %2083 = vmatpush1.bf16.msra.mxu0 %v2034
    %2084 = vmatprep.subr.bf16.mxu0 %v2031
    %2085 = vmatpush1.bf16.msra.mxu0 %v2030
    %2086 = vmatprep.subr.bf16.mxu0 %v2027
    %2087 = vmatpush1.bf16.msra.mxu0 %v2026
    %2088 = vmatprep.subr.bf16.mxu0 %v2023
    %2089 = vmatpush1.bf16.msra.mxu0 %v2022
    %2090 = vmatprep.subr.bf16.mxu0 %v2019
    %2091 = vmatpush1.bf16.msra.mxu0 %v2018
    %2092 = vmatprep.subr.bf16.mxu0 %v2015
    %2093 = vmatpush1.bf16.msra.mxu0 %v2014
    %2094 = vmatprep.subr.bf16.mxu0 0
    %2095 = vmatpush2.bf16.msra.mxu0 0
    %2096 = vmatprep.subr.bf16.mxu0 0
    %2097 = vmatpush2.bf16.msra.mxu0 0
    %2098 = vmatprep.subr.bf16.mxu0 0
    %2099 = vmatpush2.bf16.msra.mxu0 0
    %2100 = vmatprep.subr.bf16.mxu0 0
    %2101 = vmatpush2.bf16.msra.mxu0 0
    %2102 = vmatprep.subr.bf16.mxu0 0
    %2103 = vmatpush2.bf16.msra.mxu0 0
    %2104 = vmatprep.subr.bf16.mxu0 0
    %2105 = vmatpush2.bf16.msra.mxu0 0
    %2106 = vmatprep.subr.bf16.mxu0 0
    %2107 = vmatpush2.bf16.msra.mxu0 0
    %2108 = vmatprep.subr.bf16.mxu0 0
    %2109 = vmatpush2.bf16.msra.mxu0 0
    %2110 = vmatprep.mubr.bf16.mxu0 0
    %2111 = vmatmul.mubr.bf16.gmra.mxu0 %v1894
    %v2112 = vpop.f32.mrf.mxu0
    %v2113 = vadd.f32 %v1901, %v2112
    %v2114 = vpop.f32.mrf.mxu0
    %v2115 = vadd.f32 %v1905, %v2114
    %v2116 = vpop.f32.mrf.mxu0
    %v2117 = vadd.f32 %v1901, %v2116
    %v2118 = vpop.f32.mrf.mxu0
    %v2119 = vadd.f32 %v1905, %v2118
    %2120 = vmatprep.mubr.bf16.mxu0 0
    %2121 = vmatmul.mubr.bf16.gmra.mxu0 %v1895
    %v2122 = vpop.f32.mrf.mxu0
    %v2123 = vadd.f32 %v1901, %v2122
    %v2124 = vpop.f32.mrf.mxu0
    %v2125 = vadd.f32 %v1905, %v2124
    %v2126 = vpop.f32.mrf.mxu0
    %v2127 = vadd.f32 %v1901, %v2126
    %v2128 = vpop.f32.mrf.mxu0
    %v2129 = vadd.f32 %v1905, %v2128
    %2130 = vdwg.mxu0
    %2131 = vmatprep.subr.bf16.mxu0 %v2045
    %2132 = vmatpush1.bf16.msra.mxu0 %v2044
    %2133 = vmatprep.subr.bf16.mxu0 %v2041
    %2134 = vmatpush1.bf16.msra.mxu0 %v2040
    %2135 = vmatprep.subr.bf16.mxu0 %v2037
    %2136 = vmatpush1.bf16.msra.mxu0 %v2036
    %2137 = vmatprep.subr.bf16.mxu0 %v2033
    %2138 = vmatpush1.bf16.msra.mxu0 %v2032
    %2139 = vmatprep.subr.bf16.mxu0 %v2029
    %2140 = vmatpush1.bf16.msra.mxu0 %v2028
    %2141 = vmatprep.subr.bf16.mxu0 %v2025
    %2142 = vmatpush1.bf16.msra.mxu0 %v2024
    %2143 = vmatprep.subr.bf16.mxu0 %v2021
    %2144 = vmatpush1.bf16.msra.mxu0 %v2020
    %2145 = vmatprep.subr.bf16.mxu0 %v2017
    %2146 = vmatpush1.bf16.msra.mxu0 %v2016
    %2147 = vmatprep.subr.bf16.mxu0 0
    %2148 = vmatpush2.bf16.msra.mxu0 0
    %2149 = vmatprep.subr.bf16.mxu0 0
    %2150 = vmatpush2.bf16.msra.mxu0 0
    %2151 = vmatprep.subr.bf16.mxu0 0
    %2152 = vmatpush2.bf16.msra.mxu0 0
    %2153 = vmatprep.subr.bf16.mxu0 0
    %2154 = vmatpush2.bf16.msra.mxu0 0
    %2155 = vmatprep.subr.bf16.mxu0 0
    %2156 = vmatpush2.bf16.msra.mxu0 0
    %2157 = vmatprep.subr.bf16.mxu0 0
    %2158 = vmatpush2.bf16.msra.mxu0 0
    %2159 = vmatprep.subr.bf16.mxu0 0
    %2160 = vmatpush2.bf16.msra.mxu0 0
    %2161 = vmatprep.subr.bf16.mxu0 0
    %2162 = vmatpush2.bf16.msra.mxu0 0
    %2163 = vmatprep.mubr.bf16.mxu0 0
    %2164 = vmatmul.mubr.bf16.gmra.mxu0 %v1894
    %v2165 = vpop.f32.mrf.mxu0
    %v2166 = vadd.f32 %v1909, %v2165
    %v2167 = vpop.f32.mrf.mxu0
    %v2168 = vadd.f32 %v1913, %v2167
    %v2169 = vpop.f32.mrf.mxu0
    %v2170 = vadd.f32 %v1909, %v2169
    %v2171 = vpop.f32.mrf.mxu0
    %v2172 = vadd.f32 %v1913, %v2171
    %2173 = vmatprep.mubr.bf16.mxu0 0
    %2174 = vmatmul.mubr.bf16.gmra.mxu0 %v1895
    %v2175 = vpop.f32.mrf.mxu0
    %v2176 = vadd.f32 %v1909, %v2175
    %v2177 = vpop.f32.mrf.mxu0
    %v2178 = vadd.f32 %v1913, %v2177
    %v2179 = vpop.f32.mrf.mxu0
    %v2180 = vadd.f32 %v1909, %v2179
    %v2181 = vpop.f32.mrf.mxu0
    %v2182 = vadd.f32 %v1913, %v2181
    %2183 = vdwg.mxu0
    %v2184 = vld [vmem:[#allocation10] sm:$0xff]
    %v2185 = vld [vmem:[#allocation10 + $0x8] sm:$0xff]
    %v2186 = vld [vmem:[#allocation10 + $0x10] sm:$0xff]
    %v2187 = vld [vmem:[#allocation10 + $0x18] sm:$0xff]
    %v2188 = vld [vmem:[#allocation10 + $0x20] sm:$0xff]
    %v2189 = vld [vmem:[#allocation10 + $0x28] sm:$0xff]
    %v2190 = vld [vmem:[#allocation10 + $0x30] sm:$0xff]
    %v2191 = vld [vmem:[#allocation10 + $0x38] sm:$0xff]
    %v2192 = vld [vmem:[#allocation10 + $0x40] sm:$0xff]
    %v2193 = vld [vmem:[#allocation10 + $0x48] sm:$0xff]
    %v2194 = vld [vmem:[#allocation10 + $0x50] sm:$0xff]
    %v2195 = vld [vmem:[#allocation10 + $0x58] sm:$0xff]
    %v2196 = vld [vmem:[#allocation10 + $0x60] sm:$0xff]
    %v2197 = vld [vmem:[#allocation10 + $0x68] sm:$0xff]
    %v2198 = vld [vmem:[#allocation10 + $0x70] sm:$0xff]
    %v2199 = vld [vmem:[#allocation10 + $0x78] sm:$0xff]
    %v2200 = vld [vmem:[#allocation10 + $0x80] sm:$0xff]
    %v2201 = vld [vmem:[#allocation10 + $0x88] sm:$0xff]
    %v2202 = vld [vmem:[#allocation10 + $0x90] sm:$0xff]
    %v2203 = vld [vmem:[#allocation10 + $0x98] sm:$0xff]
    %v2204 = vld [vmem:[#allocation10 + $0xa0] sm:$0xff]
    %v2205 = vld [vmem:[#allocation10 + $0xa8] sm:$0xff]
    %v2206 = vld [vmem:[#allocation10 + $0xb0] sm:$0xff]
    %v2207 = vld [vmem:[#allocation10 + $0xb8] sm:$0xff]
    %v2208 = vld [vmem:[#allocation10 + $0xc0] sm:$0xff]
    %v2209 = vld [vmem:[#allocation10 + $0xc8] sm:$0xff]
    %v2210 = vld [vmem:[#allocation10 + $0xd0] sm:$0xff]
    %v2211 = vld [vmem:[#allocation10 + $0xd8] sm:$0xff]
    %v2212 = vld [vmem:[#allocation10 + $0xe0] sm:$0xff]
    %v2213 = vld [vmem:[#allocation10 + $0xe8] sm:$0xff]
    %v2214 = vld [vmem:[#allocation10 + $0xf0] sm:$0xff]
    %v2215 = vld [vmem:[#allocation10 + $0xf8] sm:$0xff]
    %v2216 = vpack.c.bf16 %v1859, %v1858
    %v2249 = vunpack.c.l.b16 %v2184
    %v2250 = vunpack.c.h.b16 %v2184
    %v2251 = vunpack.c.l.b16 %v2185
    %v2252 = vunpack.c.h.b16 %v2185
    %v2253 = vunpack.c.l.b16 %v2186
    %v2254 = vunpack.c.h.b16 %v2186
    %v2255 = vunpack.c.l.b16 %v2187
    %v2256 = vunpack.c.h.b16 %v2187
    %v2257 = vunpack.c.l.b16 %v2188
    %v2258 = vunpack.c.h.b16 %v2188
    %v2259 = vunpack.c.l.b16 %v2189
    %v2260 = vunpack.c.h.b16 %v2189
    %v2261 = vunpack.c.l.b16 %v2190
    %v2262 = vunpack.c.h.b16 %v2190
    %v2263 = vunpack.c.l.b16 %v2191
    %v2264 = vunpack.c.h.b16 %v2191
    %v2265 = vunpack.c.l.b16 %v2192
    %v2266 = vunpack.c.h.b16 %v2192
    %v2267 = vunpack.c.l.b16 %v2193
    %v2268 = vunpack.c.h.b16 %v2193
    %v2269 = vunpack.c.l.b16 %v2194
    %v2270 = vunpack.c.h.b16 %v2194
    %v2271 = vunpack.c.l.b16 %v2195
    %v2272 = vunpack.c.h.b16 %v2195
    %v2273 = vunpack.c.l.b16 %v2196
    %v2274 = vunpack.c.h.b16 %v2196
    %v2275 = vunpack.c.l.b16 %v2197
    %v2276 = vunpack.c.h.b16 %v2197
    %v2277 = vunpack.c.l.b16 %v2198
    %v2278 = vunpack.c.h.b16 %v2198
    %v2279 = vunpack.c.l.b16 %v2199
    %v2280 = vunpack.c.h.b16 %v2199
    %v2281 = vunpack.c.l.b16 %v2200
    %v2282 = vunpack.c.h.b16 %v2200
    %v2283 = vunpack.c.l.b16 %v2201
    %v2284 = vunpack.c.h.b16 %v2201
    %v2285 = vunpack.c.l.b16 %v2202
    %v2286 = vunpack.c.h.b16 %v2202
    %v2287 = vunpack.c.l.b16 %v2203
    %v2288 = vunpack.c.h.b16 %v2203
    %v2289 = vunpack.c.l.b16 %v2204
    %v2290 = vunpack.c.h.b16 %v2204
    %v2291 = vunpack.c.l.b16 %v2205
    %v2292 = vunpack.c.h.b16 %v2205
    %v2293 = vunpack.c.l.b16 %v2206
    %v2294 = vunpack.c.h.b16 %v2206
    %v2295 = vunpack.c.l.b16 %v2207
    %v2296 = vunpack.c.h.b16 %v2207
    %v2297 = vunpack.c.l.b16 %v2208
    %v2298 = vunpack.c.h.b16 %v2208
    %v2299 = vunpack.c.l.b16 %v2209
    %v2300 = vunpack.c.h.b16 %v2209
    %v2301 = vunpack.c.l.b16 %v2210
    %v2302 = vunpack.c.h.b16 %v2210
    %v2303 = vunpack.c.l.b16 %v2211
    %v2304 = vunpack.c.h.b16 %v2211
    %v2305 = vunpack.c.l.b16 %v2212
    %v2306 = vunpack.c.h.b16 %v2212
    %v2307 = vunpack.c.l.b16 %v2213
    %v2308 = vunpack.c.h.b16 %v2213
    %v2309 = vunpack.c.l.b16 %v2214
    %v2310 = vunpack.c.h.b16 %v2214
    %v2311 = vunpack.c.l.b16 %v2215
    %v2312 = vunpack.c.h.b16 %v2215
    %v2313 = vpack.c.b16 %v2253, %v2249
    %v2314 = vpack.c.b16 %v2254, %v2250
    %v2315 = vpack.c.b16 %v2255, %v2251
    %v2316 = vpack.c.b16 %v2256, %v2252
    %v2317 = vpack.c.b16 %v2261, %v2257
    %v2318 = vpack.c.b16 %v2262, %v2258
    %v2319 = vpack.c.b16 %v2263, %v2259
    %v2320 = vpack.c.b16 %v2264, %v2260
    %v2321 = vpack.c.b16 %v2269, %v2265
    %v2322 = vpack.c.b16 %v2270, %v2266
    %v2323 = vpack.c.b16 %v2271, %v2267
    %v2324 = vpack.c.b16 %v2272, %v2268
    %v2325 = vpack.c.b16 %v2277, %v2273
    %v2326 = vpack.c.b16 %v2278, %v2274
    %v2327 = vpack.c.b16 %v2279, %v2275
    %v2328 = vpack.c.b16 %v2280, %v2276
    %v2329 = vpack.c.b16 %v2285, %v2281
    %v2330 = vpack.c.b16 %v2286, %v2282
    %v2331 = vpack.c.b16 %v2287, %v2283
    %v2332 = vpack.c.b16 %v2288, %v2284
    %v2333 = vpack.c.b16 %v2293, %v2289
    %v2334 = vpack.c.b16 %v2294, %v2290
    %v2335 = vpack.c.b16 %v2295, %v2291
    %v2336 = vpack.c.b16 %v2296, %v2292
    %v2337 = vpack.c.b16 %v2301, %v2297
    %v2338 = vpack.c.b16 %v2302, %v2298
    %v2339 = vpack.c.b16 %v2303, %v2299
    %v2340 = vpack.c.b16 %v2304, %v2300
    %v2341 = vpack.c.b16 %v2309, %v2305
    %v2342 = vpack.c.b16 %v2310, %v2306
    %v2343 = vpack.c.b16 %v2311, %v2307
    %v2344 = vpack.c.b16 %v2312, %v2308
    %2377 = vmatprep.subr.bf16.mxu0 %v2342
    %2378 = vmatpush1.bf16.msra.mxu0 %v2341
    %2379 = vmatprep.subr.bf16.mxu0 %v2338
    %2380 = vmatpush1.bf16.msra.mxu0 %v2337
    %2381 = vmatprep.subr.bf16.mxu0 %v2334
    %2382 = vmatpush1.bf16.msra.mxu0 %v2333
    %2383 = vmatprep.subr.bf16.mxu0 %v2330
    %2384 = vmatpush1.bf16.msra.mxu0 %v2329
    %2385 = vmatprep.subr.bf16.mxu0 %v2326
    %2386 = vmatpush1.bf16.msra.mxu0 %v2325
    %2387 = vmatprep.subr.bf16.mxu0 %v2322
    %2388 = vmatpush1.bf16.msra.mxu0 %v2321
    %2389 = vmatprep.subr.bf16.mxu0 %v2318
    %2390 = vmatpush1.bf16.msra.mxu0 %v2317
    %2391 = vmatprep.subr.bf16.mxu0 %v2314
    %2392 = vmatpush1.bf16.msra.mxu0 %v2313
    %2393 = vmatprep.subr.bf16.mxu0 0
    %2394 = vmatpush2.bf16.msra.mxu0 0
    %2395 = vmatprep.subr.bf16.mxu0 0
    %2396 = vmatpush2.bf16.msra.mxu0 0
    %2397 = vmatprep.subr.bf16.mxu0 0
    %2398 = vmatpush2.bf16.msra.mxu0 0
    %2399 = vmatprep.subr.bf16.mxu0 0
    %2400 = vmatpush2.bf16.msra.mxu0 0
    %2401 = vmatprep.subr.bf16.mxu0 0
    %2402 = vmatpush2.bf16.msra.mxu0 0
    %2403 = vmatprep.subr.bf16.mxu0 0
    %2404 = vmatpush2.bf16.msra.mxu0 0
    %2405 = vmatprep.subr.bf16.mxu0 0
    %2406 = vmatpush2.bf16.msra.mxu0 0
    %2407 = vmatprep.subr.bf16.mxu0 0
    %2408 = vmatpush2.bf16.msra.mxu0 0
    %2409 = vmatprep.mubr.bf16.mxu0 0
    %2410 = vmatmul.mubr.bf16.gmra.mxu0 %v2216
    %v2411 = vpop.f32.mrf.mxu0
    %v2412 = vadd.f32 0.0, %v2411
    %v2413 = vpop.f32.mrf.mxu0
    %v2414 = vadd.f32 0.0, %v2413
    %v2415 = vpop.f32.mrf.mxu0
    %v2416 = vadd.f32 0.0, %v2415
    %v2417 = vpop.f32.mrf.mxu0
    %v2418 = vadd.f32 0.0, %v2417
    %2419 = vdwg.mxu0
    %2420 = vmatprep.subr.bf16.mxu0 %v2344
    %2421 = vmatpush1.bf16.msra.mxu0 %v2343
    %2422 = vmatprep.subr.bf16.mxu0 %v2340
    %2423 = vmatpush1.bf16.msra.mxu0 %v2339
    %2424 = vmatprep.subr.bf16.mxu0 %v2336
    %2425 = vmatpush1.bf16.msra.mxu0 %v2335
    %2426 = vmatprep.subr.bf16.mxu0 %v2332
    %2427 = vmatpush1.bf16.msra.mxu0 %v2331
    %2428 = vmatprep.subr.bf16.mxu0 %v2328
    %2429 = vmatpush1.bf16.msra.mxu0 %v2327
    %2430 = vmatprep.subr.bf16.mxu0 %v2324
    %2431 = vmatpush1.bf16.msra.mxu0 %v2323
    %2432 = vmatprep.subr.bf16.mxu0 %v2320
    %2433 = vmatpush1.bf16.msra.mxu0 %v2319
    %2434 = vmatprep.subr.bf16.mxu0 %v2316
    %2435 = vmatpush1.bf16.msra.mxu0 %v2315
    %2436 = vmatprep.subr.bf16.mxu0 0
    %2437 = vmatpush2.bf16.msra.mxu0 0
    %2438 = vmatprep.subr.bf16.mxu0 0
    %2439 = vmatpush2.bf16.msra.mxu0 0
    %2440 = vmatprep.subr.bf16.mxu0 0
    %2441 = vmatpush2.bf16.msra.mxu0 0
    %2442 = vmatprep.subr.bf16.mxu0 0
    %2443 = vmatpush2.bf16.msra.mxu0 0
    %2444 = vmatprep.subr.bf16.mxu0 0
    %2445 = vmatpush2.bf16.msra.mxu0 0
    %2446 = vmatprep.subr.bf16.mxu0 0
    %2447 = vmatpush2.bf16.msra.mxu0 0
    %2448 = vmatprep.subr.bf16.mxu0 0
    %2449 = vmatpush2.bf16.msra.mxu0 0
    %2450 = vmatprep.subr.bf16.mxu0 0
    %2451 = vmatpush2.bf16.msra.mxu0 0
    %2452 = vmatprep.mubr.bf16.mxu0 0
    %2453 = vmatmul.mubr.bf16.gmra.mxu0 %v2216
    %v2454 = vpop.f32.mrf.mxu0
    %v2455 = vadd.f32 0.0, %v2454
    %v2456 = vpop.f32.mrf.mxu0
    %v2457 = vadd.f32 0.0, %v2456
    %v2458 = vpop.f32.mrf.mxu0
    %v2459 = vadd.f32 0.0, %v2458
    %v2460 = vpop.f32.mrf.mxu0
    %v2461 = vadd.f32 0.0, %v2460
    %2462 = vdwg.mxu0
    %v2463 = vadd.f32 %v2113, %v2412
    %v2464 = vadd.f32 %v2115, %v2414
    %v2465 = vadd.f32 %v2166, %v2455
    %v2466 = vadd.f32 %v2168, %v2457
    %v2467 = vadd.f32 %v2117, %v2416
    %v2468 = vadd.f32 %v2119, %v2418
    %v2469 = vadd.f32 %v2170, %v2459
    %v2470 = vadd.f32 %v2172, %v2461
    %v2471 = vxor.u32 %v2463, 2147483648
    %v2472 = vxor.u32 %v2467, 2147483648
    %v2473 = vmul.f32 %v2471, 1.442695
    %v2474 = vpow.pop %v2473
    %v2475 = vmul.f32 %v2472, 1.442695
    %v2476 = vpow.pop %v2475
    %v2477 = vadd.f32 %v2474, 1.0
    %v2478 = vadd.f32 %v2476, 1.0
    %v2479 = vrcp.pop %v2477
    %v2480 = vmul.f32 1.0, %v2479
    %v2481 = vrcp.pop %v2478
    %v2482 = vmul.f32 1.0, %v2481
    %v2483 = vxor.u32 %v2464, 2147483648
    %v2484 = vxor.u32 %v2468, 2147483648
    %v2485 = vmul.f32 %v2483, 1.442695
    %v2486 = vpow.pop %v2485
    %v2487 = vmul.f32 %v2484, 1.442695
    %v2488 = vpow.pop %v2487
    %v2489 = vadd.f32 %v2486, 1.0
    %v2490 = vadd.f32 %v2488, 1.0
    %v2491 = vrcp.pop %v2489
    %v2492 = vmul.f32 1.0, %v2491
    %v2493 = vrcp.pop %v2490
    %v2494 = vmul.f32 1.0, %v2493
    %v2495 = vtanh.pop %v2465
    %v2496 = vtanh.pop %v2469
    %v2497 = vxor.u32 %v2466, 2147483648
    %v2498 = vxor.u32 %v2470, 2147483648
    %v2499 = vmul.f32 %v2497, 1.442695
    %v2500 = vpow.pop %v2499
    %v2501 = vmul.f32 %v2498, 1.442695
    %v2502 = vpow.pop %v2501
    %v2503 = vadd.f32 %v2500, 1.0
    %v2504 = vadd.f32 %v2502, 1.0
    %v2505 = vrcp.pop %v2503
    %v2506 = vmul.f32 1.0, %v2505
    %v2507 = vrcp.pop %v2504
    %v2508 = vmul.f32 1.0, %v2507
    %v2509 = vmul.f32 %v2492, 0.0
    %v2510 = vmul.f32 %v2494, 0.0
    %v2511 = vmul.f32 %v2480, %v2495
    %v2512 = vmul.f32 %v2482, %v2496
    %v2513 = vadd.f32 %v2509, %v2511
    %v2514 = vadd.f32 %v2510, %v2512
    %v2515 = vtanh.pop %v2513
    %v2516 = vtanh.pop %v2514
    %v2517 = vmul.f32 %v2506, %v2515
    %v2518 = vmul.f32 %v2508, %v2516
    %v2519 = vpack.c.bf16 %v2518, %v2517
    %2520 = vmatprep.subr.bf16.mxu0 %v2342
    %2521 = vmatpush1.bf16.msra.mxu0 %v2341
    %2522 = vmatprep.subr.bf16.mxu0 %v2338
    %2523 = vmatpush1.bf16.msra.mxu0 %v2337
    %2524 = vmatprep.subr.bf16.mxu0 %v2334
    %2525 = vmatpush1.bf16.msra.mxu0 %v2333
    %2526 = vmatprep.subr.bf16.mxu0 %v2330
    %2527 = vmatpush1.bf16.msra.mxu0 %v2329
    %2528 = vmatprep.subr.bf16.mxu0 %v2326
    %2529 = vmatpush1.bf16.msra.mxu0 %v2325
    %2530 = vmatprep.subr.bf16.mxu0 %v2322
    %2531 = vmatpush1.bf16.msra.mxu0 %v2321
    %2532 = vmatprep.subr.bf16.mxu0 %v2318
    %2533 = vmatpush1.bf16.msra.mxu0 %v2317
    %2534 = vmatprep.subr.bf16.mxu0 %v2314
    %2535 = vmatpush1.bf16.msra.mxu0 %v2313
    %2536 = vmatprep.subr.bf16.mxu0 0
    %2537 = vmatpush2.bf16.msra.mxu0 0
    %2538 = vmatprep.subr.bf16.mxu0 0
    %2539 = vmatpush2.bf16.msra.mxu0 0
    %2540 = vmatprep.subr.bf16.mxu0 0
    %2541 = vmatpush2.bf16.msra.mxu0 0
    %2542 = vmatprep.subr.bf16.mxu0 0
    %2543 = vmatpush2.bf16.msra.mxu0 0
    %2544 = vmatprep.subr.bf16.mxu0 0
    %2545 = vmatpush2.bf16.msra.mxu0 0
    %2546 = vmatprep.subr.bf16.mxu0 0
    %2547 = vmatpush2.bf16.msra.mxu0 0
    %2548 = vmatprep.subr.bf16.mxu0 0
    %2549 = vmatpush2.bf16.msra.mxu0 0
    %2550 = vmatprep.subr.bf16.mxu0 0
    %2551 = vmatpush2.bf16.msra.mxu0 0
    %2552 = vmatprep.mubr.bf16.mxu0 0
    %2553 = vmatmul.mubr.bf16.gmra.mxu0 %v2519
    %v2554 = vpop.f32.mrf.mxu0
    %v2555 = vadd.f32 0.0, %v2554
    %v2556 = vpop.f32.mrf.mxu0
    %v2557 = vadd.f32 0.0, %v2556
    %v2558 = vpop.f32.mrf.mxu0
    %v2559 = vadd.f32 0.0, %v2558
    %v2560 = vpop.f32.mrf.mxu0
    %v2561 = vadd.f32 0.0, %v2560
    %2562 = vdwg.mxu0
    %2563 = vmatprep.subr.bf16.mxu0 %v2344
    %2564 = vmatpush1.bf16.msra.mxu0 %v2343
    %2565 = vmatprep.subr.bf16.mxu0 %v2340
    %2566 = vmatpush1.bf16.msra.mxu0 %v2339
    %2567 = vmatprep.subr.bf16.mxu0 %v2336
    %2568 = vmatpush1.bf16.msra.mxu0 %v2335
    %2569 = vmatprep.subr.bf16.mxu0 %v2332
    %2570 = vmatpush1.bf16.msra.mxu0 %v2331
    %2571 = vmatprep.subr.bf16.mxu0 %v2328
    %2572 = vmatpush1.bf16.msra.mxu0 %v2327
    %2573 = vmatprep.subr.bf16.mxu0 %v2324
    %2574 = vmatpush1.bf16.msra.mxu0 %v2323
    %2575 = vmatprep.subr.bf16.mxu0 %v2320
    %2576 = vmatpush1.bf16.msra.mxu0 %v2319
    %2577 = vmatprep.subr.bf16.mxu0 %v2316
    %2578 = vmatpush1.bf16.msra.mxu0 %v2315
    %2579 = vmatprep.subr.bf16.mxu0 0
    %2580 = vmatpush2.bf16.msra.mxu0 0
    %2581 = vmatprep.subr.bf16.mxu0 0
    %2582 = vmatpush2.bf16.msra.mxu0 0
    %2583 = vmatprep.subr.bf16.mxu0 0
    %2584 = vmatpush2.bf16.msra.mxu0 0
    %2585 = vmatprep.subr.bf16.mxu0 0
    %2586 = vmatpush2.bf16.msra.mxu0 0
    %2587 = vmatprep.subr.bf16.mxu0 0
    %2588 = vmatpush2.bf16.msra.mxu0 0
    %2589 = vmatprep.subr.bf16.mxu0 0
    %2590 = vmatpush2.bf16.msra.mxu0 0
    %2591 = vmatprep.subr.bf16.mxu0 0
    %2592 = vmatpush2.bf16.msra.mxu0 0
    %2593 = vmatprep.subr.bf16.mxu0 0
    %2594 = vmatpush2.bf16.msra.mxu0 0
    %2595 = vmatprep.mubr.bf16.mxu0 0
    %2596 = vmatmul.mubr.bf16.gmra.mxu0 %v2519
    %v2597 = vpop.f32.mrf.mxu0
    %v2598 = vadd.f32 0.0, %v2597
    %v2599 = vpop.f32.mrf.mxu0
    %v2600 = vadd.f32 0.0, %v2599
    %v2601 = vpop.f32.mrf.mxu0
    %v2602 = vadd.f32 0.0, %v2601
    %v2603 = vpop.f32.mrf.mxu0
    %v2604 = vadd.f32 0.0, %v2603
    %2605 = vdwg.mxu0
    %v2606 = vadd.f32 %v2123, %v2555
    %v2607 = vadd.f32 %v2125, %v2557
    %v2608 = vadd.f32 %v2176, %v2598
    %v2609 = vadd.f32 %v2178, %v2600
    %v2610 = vadd.f32 %v2127, %v2559
    %v2611 = vadd.f32 %v2129, %v2561
    %v2612 = vadd.f32 %v2180, %v2602
    %v2613 = vadd.f32 %v2182, %v2604
    %v2614 = vxor.u32 %v2606, 2147483648
    %v2615 = vxor.u32 %v2610, 2147483648
    %v2616 = vmul.f32 %v2614, 1.442695
    %v2617 = vpow.pop %v2616
    %v2618 = vmul.f32 %v2615, 1.442695
    %v2619 = vpow.pop %v2618
    %v2620 = vadd.f32 %v2617, 1.0
    %v2621 = vadd.f32 %v2619, 1.0
    %v2622 = vrcp.pop %v2620
    %v2623 = vmul.f32 1.0, %v2622
    %v2624 = vrcp.pop %v2621
    %v2625 = vmul.f32 1.0, %v2624
    %v2626 = vxor.u32 %v2607, 2147483648
    %v2627 = vxor.u32 %v2611, 2147483648
    %v2628 = vmul.f32 %v2626, 1.442695
    %v2629 = vpow.pop %v2628
    %v2630 = vmul.f32 %v2627, 1.442695
    %v2631 = vpow.pop %v2630
    %v2632 = vadd.f32 %v2629, 1.0
    %v2633 = vadd.f32 %v2631, 1.0
    %v2634 = vrcp.pop %v2632
    %v2635 = vmul.f32 1.0, %v2634
    %v2636 = vrcp.pop %v2633
    %v2637 = vmul.f32 1.0, %v2636
    %v2638 = vtanh.pop %v2608
    %v2639 = vtanh.pop %v2612
    %v2640 = vxor.u32 %v2609, 2147483648
    %v2641 = vxor.u32 %v2613, 2147483648
    %v2642 = vmul.f32 %v2640, 1.442695
    %v2643 = vpow.pop %v2642
    %v2644 = vmul.f32 %v2641, 1.442695
    %v2645 = vpow.pop %v2644
    %v2646 = vadd.f32 %v2643, 1.0
    %v2647 = vadd.f32 %v2645, 1.0
    %v2648 = vrcp.pop %v2646
    %v2649 = vmul.f32 1.0, %v2648
    %v2650 = vrcp.pop %v2647
    %v2651 = vmul.f32 1.0, %v2650
    %v2652 = vmul.f32 %v2635, %v2513
    %v2653 = vmul.f32 %v2637, %v2514
    %v2654 = vmul.f32 %v2623, %v2638
    %v2655 = vmul.f32 %v2625, %v2639
    %v2656 = vadd.f32 %v2652, %v2654
    %v2657 = vadd.f32 %v2653, %v2655
    %v2658 = vtanh.pop %v2656
    %v2659 = vtanh.pop %v2657
    %v2660 = vmul.f32 %v2649, %v2658
    %v2661 = vmul.f32 %v2651, %v2659
    %v2662 = vld [vmem:[#allocation12] sm:$0xff]
    %v2663 = vld [vmem:[#allocation12 + $0x8] sm:$0xff]
    %v2664 = vld [vmem:[#allocation12 + $0x10] sm:$0xff]
    %v2665 = vld [vmem:[#allocation12 + $0x18] sm:$0xff]
    %v2666 = vld [vmem:[#allocation12 + $0x20] sm:$0xff]
    %v2667 = vld [vmem:[#allocation12 + $0x28] sm:$0xff]
    %v2668 = vld [vmem:[#allocation12 + $0x30] sm:$0xff]
    %v2669 = vld [vmem:[#allocation12 + $0x38] sm:$0xff]
    %v2670 = vld [vmem:[#allocation12 + $0x40] sm:$0xff]
    %v2671 = vld [vmem:[#allocation12 + $0x48] sm:$0xff]
    %v2672 = vld [vmem:[#allocation12 + $0x50] sm:$0xff]
    %v2673 = vld [vmem:[#allocation12 + $0x58] sm:$0xff]
    %v2674 = vld [vmem:[#allocation12 + $0x60] sm:$0xff]
    %v2675 = vld [vmem:[#allocation12 + $0x68] sm:$0xff]
    %v2676 = vld [vmem:[#allocation12 + $0x70] sm:$0xff]
    %v2677 = vld [vmem:[#allocation12 + $0x78] sm:$0xff]
    %v2678 = vld [vmem:[#allocation12 + $0x80] sm:$0xff]
    %v2679 = vld [vmem:[#allocation12 + $0x88] sm:$0xff]
    %v2680 = vld [vmem:[#allocation12 + $0x90] sm:$0xff]
    %v2681 = vld [vmem:[#allocation12 + $0x98] sm:$0xff]
    %v2682 = vld [vmem:[#allocation12 + $0xa0] sm:$0xff]
    %v2683 = vld [vmem:[#allocation12 + $0xa8] sm:$0xff]
    %v2684 = vld [vmem:[#allocation12 + $0xb0] sm:$0xff]
    %v2685 = vld [vmem:[#allocation12 + $0xb8] sm:$0xff]
    %v2686 = vld [vmem:[#allocation12 + $0xc0] sm:$0xff]
    %v2687 = vld [vmem:[#allocation12 + $0xc8] sm:$0xff]
    %v2688 = vld [vmem:[#allocation12 + $0xd0] sm:$0xff]
    %v2689 = vld [vmem:[#allocation12 + $0xd8] sm:$0xff]
    %v2690 = vld [vmem:[#allocation12 + $0xe0] sm:$0xff]
    %v2691 = vld [vmem:[#allocation12 + $0xe8] sm:$0xff]
    %v2692 = vld [vmem:[#allocation12 + $0xf0] sm:$0xff]
    %v2693 = vld [vmem:[#allocation12 + $0xf8] sm:$0xff]
    %v2694 = vpack.c.bf16 %v2661, %v2660
    %v2695 = vld [vmem:[%s16] sm:$0xf]
    %v2697 = vlaneseq
    %v2698 = vshrl.u32 %v2697, 7
    %v2699 = vsub.s32 0, %v2698
    %v2700 = vrot.slane %v2695, %v2699
    %v2701 = vlaneseq
    %v2702 = vshrl.u32 %v2701, 7
    %v2703 = vsub.s32 1, %v2702
    %v2704 = vrot.slane %v2695, %v2703
    %v2705 = vlaneseq
    %v2706 = vshrl.u32 %v2705, 7
    %v2707 = vsub.s32 2, %v2706
    %v2708 = vrot.slane %v2695, %v2707
    %v2709 = vlaneseq
    %v2710 = vshrl.u32 %v2709, 7
    %v2711 = vsub.s32 3, %v2710
    %v2712 = vrot.slane %v2695, %v2711
    %v2749 = vunpack.c.l.b16 %v2662
    %v2750 = vunpack.c.h.b16 %v2662
    %v2751 = vunpack.c.l.b16 %v2663
    %v2752 = vunpack.c.h.b16 %v2663
    %v2753 = vunpack.c.l.b16 %v2664
    %v2754 = vunpack.c.h.b16 %v2664
    %v2755 = vunpack.c.l.b16 %v2665
    %v2756 = vunpack.c.h.b16 %v2665
    %v2757 = vunpack.c.l.b16 %v2666
    %v2758 = vunpack.c.h.b16 %v2666
    %v2759 = vunpack.c.l.b16 %v2667
    %v2760 = vunpack.c.h.b16 %v2667
    %v2761 = vunpack.c.l.b16 %v2668
    %v2762 = vunpack.c.h.b16 %v2668
    %v2763 = vunpack.c.l.b16 %v2669
    %v2764 = vunpack.c.h.b16 %v2669
    %v2765 = vunpack.c.l.b16 %v2670
    %v2766 = vunpack.c.h.b16 %v2670
    %v2767 = vunpack.c.l.b16 %v2671
    %v2768 = vunpack.c.h.b16 %v2671
    %v2769 = vunpack.c.l.b16 %v2672
    %v2770 = vunpack.c.h.b16 %v2672
    %v2771 = vunpack.c.l.b16 %v2673
    %v2772 = vunpack.c.h.b16 %v2673
    %v2773 = vunpack.c.l.b16 %v2674
    %v2774 = vunpack.c.h.b16 %v2674
    %v2775 = vunpack.c.l.b16 %v2675
    %v2776 = vunpack.c.h.b16 %v2675
    %v2777 = vunpack.c.l.b16 %v2676
    %v2778 = vunpack.c.h.b16 %v2676
    %v2779 = vunpack.c.l.b16 %v2677
    %v2780 = vunpack.c.h.b16 %v2677
    %v2781 = vunpack.c.l.b16 %v2678
    %v2782 = vunpack.c.h.b16 %v2678
    %v2783 = vunpack.c.l.b16 %v2679
    %v2784 = vunpack.c.h.b16 %v2679
    %v2785 = vunpack.c.l.b16 %v2680
    %v2786 = vunpack.c.h.b16 %v2680
    %v2787 = vunpack.c.l.b16 %v2681
    %v2788 = vunpack.c.h.b16 %v2681
    %v2789 = vunpack.c.l.b16 %v2682
    %v2790 = vunpack.c.h.b16 %v2682
    %v2791 = vunpack.c.l.b16 %v2683
    %v2792 = vunpack.c.h.b16 %v2683
    %v2793 = vunpack.c.l.b16 %v2684
    %v2794 = vunpack.c.h.b16 %v2684
    %v2795 = vunpack.c.l.b16 %v2685
    %v2796 = vunpack.c.h.b16 %v2685
    %v2797 = vunpack.c.l.b16 %v2686
    %v2798 = vunpack.c.h.b16 %v2686
    %v2799 = vunpack.c.l.b16 %v2687
    %v2800 = vunpack.c.h.b16 %v2687
    %v2801 = vunpack.c.l.b16 %v2688
    %v2802 = vunpack.c.h.b16 %v2688
    %v2803 = vunpack.c.l.b16 %v2689
    %v2804 = vunpack.c.h.b16 %v2689
    %v2805 = vunpack.c.l.b16 %v2690
    %v2806 = vunpack.c.h.b16 %v2690
    %v2807 = vunpack.c.l.b16 %v2691
    %v2808 = vunpack.c.h.b16 %v2691
    %v2809 = vunpack.c.l.b16 %v2692
    %v2810 = vunpack.c.h.b16 %v2692
    %v2811 = vunpack.c.l.b16 %v2693
    %v2812 = vunpack.c.h.b16 %v2693
    %v2813 = vpack.c.b16 %v2753, %v2749
    %v2814 = vpack.c.b16 %v2754, %v2750
    %v2815 = vpack.c.b16 %v2755, %v2751
    %v2816 = vpack.c.b16 %v2756, %v2752
    %v2817 = vpack.c.b16 %v2761, %v2757
    %v2818 = vpack.c.b16 %v2762, %v2758
    %v2819 = vpack.c.b16 %v2763, %v2759
    %v2820 = vpack.c.b16 %v2764, %v2760
    %v2821 = vpack.c.b16 %v2769, %v2765
    %v2822 = vpack.c.b16 %v2770, %v2766
    %v2823 = vpack.c.b16 %v2771, %v2767
    %v2824 = vpack.c.b16 %v2772, %v2768
    %v2825 = vpack.c.b16 %v2777, %v2773
    %v2826 = vpack.c.b16 %v2778, %v2774
    %v2827 = vpack.c.b16 %v2779, %v2775
    %v2828 = vpack.c.b16 %v2780, %v2776
    %v2829 = vpack.c.b16 %v2785, %v2781
    %v2830 = vpack.c.b16 %v2786, %v2782
    %v2831 = vpack.c.b16 %v2787, %v2783
    %v2832 = vpack.c.b16 %v2788, %v2784
    %v2833 = vpack.c.b16 %v2793, %v2789
    %v2834 = vpack.c.b16 %v2794, %v2790
    %v2835 = vpack.c.b16 %v2795, %v2791
    %v2836 = vpack.c.b16 %v2796, %v2792
    %v2837 = vpack.c.b16 %v2801, %v2797
    %v2838 = vpack.c.b16 %v2802, %v2798
    %v2839 = vpack.c.b16 %v2803, %v2799
    %v2840 = vpack.c.b16 %v2804, %v2800
    %v2841 = vpack.c.b16 %v2809, %v2805
    %v2842 = vpack.c.b16 %v2810, %v2806
    %v2843 = vpack.c.b16 %v2811, %v2807
    %v2844 = vpack.c.b16 %v2812, %v2808
    %2877 = vmatprep.subr.bf16.mxu0 %v2842
    %2878 = vmatpush1.bf16.msra.mxu0 %v2841
    %2879 = vmatprep.subr.bf16.mxu0 %v2838
    %2880 = vmatpush1.bf16.msra.mxu0 %v2837
    %2881 = vmatprep.subr.bf16.mxu0 %v2834
    %2882 = vmatpush1.bf16.msra.mxu0 %v2833
    %2883 = vmatprep.subr.bf16.mxu0 %v2830
    %2884 = vmatpush1.bf16.msra.mxu0 %v2829
    %2885 = vmatprep.subr.bf16.mxu0 %v2826
    %2886 = vmatpush1.bf16.msra.mxu0 %v2825
    %2887 = vmatprep.subr.bf16.mxu0 %v2822
    %2888 = vmatpush1.bf16.msra.mxu0 %v2821
    %2889 = vmatprep.subr.bf16.mxu0 %v2818
    %2890 = vmatpush1.bf16.msra.mxu0 %v2817
    %2891 = vmatprep.subr.bf16.mxu0 %v2814
    %2892 = vmatpush1.bf16.msra.mxu0 %v2813
    %2893 = vmatprep.subr.bf16.mxu0 0
    %2894 = vmatpush2.bf16.msra.mxu0 0
    %2895 = vmatprep.subr.bf16.mxu0 0
    %2896 = vmatpush2.bf16.msra.mxu0 0
    %2897 = vmatprep.subr.bf16.mxu0 0
    %2898 = vmatpush2.bf16.msra.mxu0 0
    %2899 = vmatprep.subr.bf16.mxu0 0
    %2900 = vmatpush2.bf16.msra.mxu0 0
    %2901 = vmatprep.subr.bf16.mxu0 0
    %2902 = vmatpush2.bf16.msra.mxu0 0
    %2903 = vmatprep.subr.bf16.mxu0 0
    %2904 = vmatpush2.bf16.msra.mxu0 0
    %2905 = vmatprep.subr.bf16.mxu0 0
    %2906 = vmatpush2.bf16.msra.mxu0 0
    %2907 = vmatprep.subr.bf16.mxu0 0
    %2908 = vmatpush2.bf16.msra.mxu0 0
    %2909 = vmatprep.mubr.bf16.mxu0 0
    %2910 = vmatmul.mubr.bf16.gmra.mxu0 %v2519
    %v2911 = vpop.f32.mrf.mxu0
    %v2912 = vadd.f32 %v2700, %v2911
    %v2913 = vpop.f32.mrf.mxu0
    %v2914 = vadd.f32 %v2704, %v2913
    %v2915 = vpop.f32.mrf.mxu0
    %v2916 = vadd.f32 %v2700, %v2915
    %v2917 = vpop.f32.mrf.mxu0
    %v2918 = vadd.f32 %v2704, %v2917
    %2919 = vmatprep.mubr.bf16.mxu0 0
    %2920 = vmatmul.mubr.bf16.gmra.mxu0 %v2694
    %v2921 = vpop.f32.mrf.mxu0
    %v2922 = vadd.f32 %v2700, %v2921
    %v2923 = vpop.f32.mrf.mxu0
    %v2924 = vadd.f32 %v2704, %v2923
    %v2925 = vpop.f32.mrf.mxu0
    %v2926 = vadd.f32 %v2700, %v2925
    %v2927 = vpop.f32.mrf.mxu0
    %v2928 = vadd.f32 %v2704, %v2927
    %2929 = vdwg.mxu0
    %2930 = vmatprep.subr.bf16.mxu0 %v2844
    %2931 = vmatpush1.bf16.msra.mxu0 %v2843
    %2932 = vmatprep.subr.bf16.mxu0 %v2840
    %2933 = vmatpush1.bf16.msra.mxu0 %v2839
    %2934 = vmatprep.subr.bf16.mxu0 %v2836
    %2935 = vmatpush1.bf16.msra.mxu0 %v2835
    %2936 = vmatprep.subr.bf16.mxu0 %v2832
    %2937 = vmatpush1.bf16.msra.mxu0 %v2831
    %2938 = vmatprep.subr.bf16.mxu0 %v2828
    %2939 = vmatpush1.bf16.msra.mxu0 %v2827
    %2940 = vmatprep.subr.bf16.mxu0 %v2824
    %2941 = vmatpush1.bf16.msra.mxu0 %v2823
    %2942 = vmatprep.subr.bf16.mxu0 %v2820
    %2943 = vmatpush1.bf16.msra.mxu0 %v2819
    %2944 = vmatprep.subr.bf16.mxu0 %v2816
    %2945 = vmatpush1.bf16.msra.mxu0 %v2815
    %2946 = vmatprep.subr.bf16.mxu0 0
    %2947 = vmatpush2.bf16.msra.mxu0 0
    %2948 = vmatprep.subr.bf16.mxu0 0
    %2949 = vmatpush2.bf16.msra.mxu0 0
    %2950 = vmatprep.subr.bf16.mxu0 0
    %2951 = vmatpush2.bf16.msra.mxu0 0
    %2952 = vmatprep.subr.bf16.mxu0 0
    %2953 = vmatpush2.bf16.msra.mxu0 0
    %2954 = vmatprep.subr.bf16.mxu0 0
    %2955 = vmatpush2.bf16.msra.mxu0 0
    %2956 = vmatprep.subr.bf16.mxu0 0
    %2957 = vmatpush2.bf16.msra.mxu0 0
    %2958 = vmatprep.subr.bf16.mxu0 0
    %2959 = vmatpush2.bf16.msra.mxu0 0
    %2960 = vmatprep.subr.bf16.mxu0 0
    %2961 = vmatpush2.bf16.msra.mxu0 0
    %2962 = vmatprep.mubr.bf16.mxu0 0
    %2963 = vmatmul.mubr.bf16.gmra.mxu0 %v2519
    %v2964 = vpop.f32.mrf.mxu0
    %v2965 = vadd.f32 %v2708, %v2964
    %v2966 = vpop.f32.mrf.mxu0
    %v2967 = vadd.f32 %v2712, %v2966
    %v2968 = vpop.f32.mrf.mxu0
    %v2969 = vadd.f32 %v2708, %v2968
    %v2970 = vpop.f32.mrf.mxu0
    %v2971 = vadd.f32 %v2712, %v2970
    %2972 = vmatprep.mubr.bf16.mxu0 0
    %2973 = vmatmul.mubr.bf16.gmra.mxu0 %v2694
    %v2974 = vpop.f32.mrf.mxu0
    %v2975 = vadd.f32 %v2708, %v2974
    %v2976 = vpop.f32.mrf.mxu0
    %v2977 = vadd.f32 %v2712, %v2976
    %v2978 = vpop.f32.mrf.mxu0
    %v2979 = vadd.f32 %v2708, %v2978
    %v2980 = vpop.f32.mrf.mxu0
    %v2981 = vadd.f32 %v2712, %v2980
    %2982 = vdwg.mxu0
    %v2983 = vld [vmem:[#allocation13] sm:$0xff]
    %v2984 = vld [vmem:[#allocation13 + $0x8] sm:$0xff]
    %v2985 = vld [vmem:[#allocation13 + $0x10] sm:$0xff]
    %v2986 = vld [vmem:[#allocation13 + $0x18] sm:$0xff]
    %v2987 = vld [vmem:[#allocation13 + $0x20] sm:$0xff]
    %v2988 = vld [vmem:[#allocation13 + $0x28] sm:$0xff]
    %v2989 = vld [vmem:[#allocation13 + $0x30] sm:$0xff]
    %v2990 = vld [vmem:[#allocation13 + $0x38] sm:$0xff]
    %v2991 = vld [vmem:[#allocation13 + $0x40] sm:$0xff]
    %v2992 = vld [vmem:[#allocation13 + $0x48] sm:$0xff]
    %v2993 = vld [vmem:[#allocation13 + $0x50] sm:$0xff]
    %v2994 = vld [vmem:[#allocation13 + $0x58] sm:$0xff]
    %v2995 = vld [vmem:[#allocation13 + $0x60] sm:$0xff]
    %v2996 = vld [vmem:[#allocation13 + $0x68] sm:$0xff]
    %v2997 = vld [vmem:[#allocation13 + $0x70] sm:$0xff]
    %v2998 = vld [vmem:[#allocation13 + $0x78] sm:$0xff]
    %v2999 = vld [vmem:[#allocation13 + $0x80] sm:$0xff]
    %v3000 = vld [vmem:[#allocation13 + $0x88] sm:$0xff]
    %v3001 = vld [vmem:[#allocation13 + $0x90] sm:$0xff]
    %v3002 = vld [vmem:[#allocation13 + $0x98] sm:$0xff]
    %v3003 = vld [vmem:[#allocation13 + $0xa0] sm:$0xff]
    %v3004 = vld [vmem:[#allocation13 + $0xa8] sm:$0xff]
    %v3005 = vld [vmem:[#allocation13 + $0xb0] sm:$0xff]
    %v3006 = vld [vmem:[#allocation13 + $0xb8] sm:$0xff]
    %v3007 = vld [vmem:[#allocation13 + $0xc0] sm:$0xff]
    %v3008 = vld [vmem:[#allocation13 + $0xc8] sm:$0xff]
    %v3009 = vld [vmem:[#allocation13 + $0xd0] sm:$0xff]
    %v3010 = vld [vmem:[#allocation13 + $0xd8] sm:$0xff]
    %v3011 = vld [vmem:[#allocation13 + $0xe0] sm:$0xff]
    %v3012 = vld [vmem:[#allocation13 + $0xe8] sm:$0xff]
    %v3013 = vld [vmem:[#allocation13 + $0xf0] sm:$0xff]
    %v3014 = vld [vmem:[#allocation13 + $0xf8] sm:$0xff]
    %v3015 = vpack.c.bf16 %v1861, %v1860
    %v3048 = vunpack.c.l.b16 %v2983
    %v3049 = vunpack.c.h.b16 %v2983
    %v3050 = vunpack.c.l.b16 %v2984
    %v3051 = vunpack.c.h.b16 %v2984
    %v3052 = vunpack.c.l.b16 %v2985
    %v3053 = vunpack.c.h.b16 %v2985
    %v3054 = vunpack.c.l.b16 %v2986
    %v3055 = vunpack.c.h.b16 %v2986
    %v3056 = vunpack.c.l.b16 %v2987
    %v3057 = vunpack.c.h.b16 %v2987
    %v3058 = vunpack.c.l.b16 %v2988
    %v3059 = vunpack.c.h.b16 %v2988
    %v3060 = vunpack.c.l.b16 %v2989
    %v3061 = vunpack.c.h.b16 %v2989
    %v3062 = vunpack.c.l.b16 %v2990
    %v3063 = vunpack.c.h.b16 %v2990
    %v3064 = vunpack.c.l.b16 %v2991
    %v3065 = vunpack.c.h.b16 %v2991
    %v3066 = vunpack.c.l.b16 %v2992
    %v3067 = vunpack.c.h.b16 %v2992
    %v3068 = vunpack.c.l.b16 %v2993
    %v3069 = vunpack.c.h.b16 %v2993
    %v3070 = vunpack.c.l.b16 %v2994
    %v3071 = vunpack.c.h.b16 %v2994
    %v3072 = vunpack.c.l.b16 %v2995
    %v3073 = vunpack.c.h.b16 %v2995
    %v3074 = vunpack.c.l.b16 %v2996
    %v3075 = vunpack.c.h.b16 %v2996
    %v3076 = vunpack.c.l.b16 %v2997
    %v3077 = vunpack.c.h.b16 %v2997
    %v3078 = vunpack.c.l.b16 %v2998
    %v3079 = vunpack.c.h.b16 %v2998
    %v3080 = vunpack.c.l.b16 %v2999
    %v3081 = vunpack.c.h.b16 %v2999
    %v3082 = vunpack.c.l.b16 %v3000
    %v3083 = vunpack.c.h.b16 %v3000
    %v3084 = vunpack.c.l.b16 %v3001
    %v3085 = vunpack.c.h.b16 %v3001
    %v3086 = vunpack.c.l.b16 %v3002
    %v3087 = vunpack.c.h.b16 %v3002
    %v3088 = vunpack.c.l.b16 %v3003
    %v3089 = vunpack.c.h.b16 %v3003
    %v3090 = vunpack.c.l.b16 %v3004
    %v3091 = vunpack.c.h.b16 %v3004
    %v3092 = vunpack.c.l.b16 %v3005
    %v3093 = vunpack.c.h.b16 %v3005
    %v3094 = vunpack.c.l.b16 %v3006
    %v3095 = vunpack.c.h.b16 %v3006
    %v3096 = vunpack.c.l.b16 %v3007
    %v3097 = vunpack.c.h.b16 %v3007
    %v3098 = vunpack.c.l.b16 %v3008
    %v3099 = vunpack.c.h.b16 %v3008
    %v3100 = vunpack.c.l.b16 %v3009
    %v3101 = vunpack.c.h.b16 %v3009
    %v3102 = vunpack.c.l.b16 %v3010
    %v3103 = vunpack.c.h.b16 %v3010
    %v3104 = vunpack.c.l.b16 %v3011
    %v3105 = vunpack.c.h.b16 %v3011
    %v3106 = vunpack.c.l.b16 %v3012
    %v3107 = vunpack.c.h.b16 %v3012
    %v3108 = vunpack.c.l.b16 %v3013
    %v3109 = vunpack.c.h.b16 %v3013
    %v3110 = vunpack.c.l.b16 %v3014
    %v3111 = vunpack.c.h.b16 %v3014
    %v3112 = vpack.c.b16 %v3052, %v3048
    %v3113 = vpack.c.b16 %v3053, %v3049
    %v3114 = vpack.c.b16 %v3054, %v3050
    %v3115 = vpack.c.b16 %v3055, %v3051
    %v3116 = vpack.c.b16 %v3060, %v3056
    %v3117 = vpack.c.b16 %v3061, %v3057
    %v3118 = vpack.c.b16 %v3062, %v3058
    %v3119 = vpack.c.b16 %v3063, %v3059
    %v3120 = vpack.c.b16 %v3068, %v3064
    %v3121 = vpack.c.b16 %v3069, %v3065
    %v3122 = vpack.c.b16 %v3070, %v3066
    %v3123 = vpack.c.b16 %v3071, %v3067
    %v3124 = vpack.c.b16 %v3076, %v3072
    %v3125 = vpack.c.b16 %v3077, %v3073
    %v3126 = vpack.c.b16 %v3078, %v3074
    %v3127 = vpack.c.b16 %v3079, %v3075
    %v3128 = vpack.c.b16 %v3084, %v3080
    %v3129 = vpack.c.b16 %v3085, %v3081
    %v3130 = vpack.c.b16 %v3086, %v3082
    %v3131 = vpack.c.b16 %v3087, %v3083
    %v3132 = vpack.c.b16 %v3092, %v3088
    %v3133 = vpack.c.b16 %v3093, %v3089
    %v3134 = vpack.c.b16 %v3094, %v3090
    %v3135 = vpack.c.b16 %v3095, %v3091
    %v3136 = vpack.c.b16 %v3100, %v3096
    %v3137 = vpack.c.b16 %v3101, %v3097
    %v3138 = vpack.c.b16 %v3102, %v3098
    %v3139 = vpack.c.b16 %v3103, %v3099
    %v3140 = vpack.c.b16 %v3108, %v3104
    %v3141 = vpack.c.b16 %v3109, %v3105
    %v3142 = vpack.c.b16 %v3110, %v3106
    %v3143 = vpack.c.b16 %v3111, %v3107
    %3176 = vmatprep.subr.bf16.mxu0 %v3141
    %3177 = vmatpush1.bf16.msra.mxu0 %v3140
    %3178 = vmatprep.subr.bf16.mxu0 %v3137
    %3179 = vmatpush1.bf16.msra.mxu0 %v3136
    %3180 = vmatprep.subr.bf16.mxu0 %v3133
    %3181 = vmatpush1.bf16.msra.mxu0 %v3132
    %3182 = vmatprep.subr.bf16.mxu0 %v3129
    %3183 = vmatpush1.bf16.msra.mxu0 %v3128
    %3184 = vmatprep.subr.bf16.mxu0 %v3125
    %3185 = vmatpush1.bf16.msra.mxu0 %v3124
    %3186 = vmatprep.subr.bf16.mxu0 %v3121
    %3187 = vmatpush1.bf16.msra.mxu0 %v3120
    %3188 = vmatprep.subr.bf16.mxu0 %v3117
    %3189 = vmatpush1.bf16.msra.mxu0 %v3116
    %3190 = vmatprep.subr.bf16.mxu0 %v3113
    %3191 = vmatpush1.bf16.msra.mxu0 %v3112
    %3192 = vmatprep.subr.bf16.mxu0 0
    %3193 = vmatpush2.bf16.msra.mxu0 0
    %3194 = vmatprep.subr.bf16.mxu0 0
    %3195 = vmatpush2.bf16.msra.mxu0 0
    %3196 = vmatprep.subr.bf16.mxu0 0
    %3197 = vmatpush2.bf16.msra.mxu0 0
    %3198 = vmatprep.subr.bf16.mxu0 0
    %3199 = vmatpush2.bf16.msra.mxu0 0
    %3200 = vmatprep.subr.bf16.mxu0 0
    %3201 = vmatpush2.bf16.msra.mxu0 0
    %3202 = vmatprep.subr.bf16.mxu0 0
    %3203 = vmatpush2.bf16.msra.mxu0 0
    %3204 = vmatprep.subr.bf16.mxu0 0
    %3205 = vmatpush2.bf16.msra.mxu0 0
    %3206 = vmatprep.subr.bf16.mxu0 0
    %3207 = vmatpush2.bf16.msra.mxu0 0
    %3208 = vmatprep.mubr.bf16.mxu0 0
    %3209 = vmatmul.mubr.bf16.gmra.mxu0 %v3015
    %v3210 = vpop.f32.mrf.mxu0
    %v3211 = vadd.f32 0.0, %v3210
    %v3212 = vpop.f32.mrf.mxu0
    %v3213 = vadd.f32 0.0, %v3212
    %v3214 = vpop.f32.mrf.mxu0
    %v3215 = vadd.f32 0.0, %v3214
    %v3216 = vpop.f32.mrf.mxu0
    %v3217 = vadd.f32 0.0, %v3216
    %3218 = vdwg.mxu0
    %3219 = vmatprep.subr.bf16.mxu0 %v3143
    %3220 = vmatpush1.bf16.msra.mxu0 %v3142
    %3221 = vmatprep.subr.bf16.mxu0 %v3139
    %3222 = vmatpush1.bf16.msra.mxu0 %v3138
    %3223 = vmatprep.subr.bf16.mxu0 %v3135
    %3224 = vmatpush1.bf16.msra.mxu0 %v3134
    %3225 = vmatprep.subr.bf16.mxu0 %v3131
    %3226 = vmatpush1.bf16.msra.mxu0 %v3130
    %3227 = vmatprep.subr.bf16.mxu0 %v3127
    %3228 = vmatpush1.bf16.msra.mxu0 %v3126
    %3229 = vmatprep.subr.bf16.mxu0 %v3123
    %3230 = vmatpush1.bf16.msra.mxu0 %v3122
    %3231 = vmatprep.subr.bf16.mxu0 %v3119
    %3232 = vmatpush1.bf16.msra.mxu0 %v3118
    %3233 = vmatprep.subr.bf16.mxu0 %v3115
    %3234 = vmatpush1.bf16.msra.mxu0 %v3114
    %3235 = vmatprep.subr.bf16.mxu0 0
    %3236 = vmatpush2.bf16.msra.mxu0 0
    %3237 = vmatprep.subr.bf16.mxu0 0
    %3238 = vmatpush2.bf16.msra.mxu0 0
    %3239 = vmatprep.subr.bf16.mxu0 0
    %3240 = vmatpush2.bf16.msra.mxu0 0
    %3241 = vmatprep.subr.bf16.mxu0 0
    %3242 = vmatpush2.bf16.msra.mxu0 0
    %3243 = vmatprep.subr.bf16.mxu0 0
    %3244 = vmatpush2.bf16.msra.mxu0 0
    %3245 = vmatprep.subr.bf16.mxu0 0
    %3246 = vmatpush2.bf16.msra.mxu0 0
    %3247 = vmatprep.subr.bf16.mxu0 0
    %3248 = vmatpush2.bf16.msra.mxu0 0
    %3249 = vmatprep.subr.bf16.mxu0 0
    %3250 = vmatpush2.bf16.msra.mxu0 0
    %3251 = vmatprep.mubr.bf16.mxu0 0
    %3252 = vmatmul.mubr.bf16.gmra.mxu0 %v3015
    %v3253 = vpop.f32.mrf.mxu0
    %v3254 = vadd.f32 0.0, %v3253
    %v3255 = vpop.f32.mrf.mxu0
    %v3256 = vadd.f32 0.0, %v3255
    %v3257 = vpop.f32.mrf.mxu0
    %v3258 = vadd.f32 0.0, %v3257
    %v3259 = vpop.f32.mrf.mxu0
    %v3260 = vadd.f32 0.0, %v3259
    %3261 = vdwg.mxu0
    %v3262 = vadd.f32 %v2912, %v3211
    %v3263 = vadd.f32 %v2914, %v3213
    %v3264 = vadd.f32 %v2965, %v3254
    %v3265 = vadd.f32 %v2967, %v3256
    %v3266 = vadd.f32 %v2916, %v3215
    %v3267 = vadd.f32 %v2918, %v3217
    %v3268 = vadd.f32 %v2969, %v3258
    %v3269 = vadd.f32 %v2971, %v3260
    %v3270 = vxor.u32 %v3262, 2147483648
    %v3271 = vxor.u32 %v3266, 2147483648
    %v3272 = vmul.f32 %v3270, 1.442695
    %v3273 = vpow.pop %v3272
    %v3274 = vmul.f32 %v3271, 1.442695
    %v3275 = vpow.pop %v3274
    %v3276 = vadd.f32 %v3273, 1.0
    %v3277 = vadd.f32 %v3275, 1.0
    %v3278 = vrcp.pop %v3276
    %v3279 = vmul.f32 1.0, %v3278
    %v3280 = vrcp.pop %v3277
    %v3281 = vmul.f32 1.0, %v3280
    %v3282 = vxor.u32 %v3263, 2147483648
    %v3283 = vxor.u32 %v3267, 2147483648
    %v3284 = vmul.f32 %v3282, 1.442695
    %v3285 = vpow.pop %v3284
    %v3286 = vmul.f32 %v3283, 1.442695
    %v3287 = vpow.pop %v3286
    %v3288 = vadd.f32 %v3285, 1.0
    %v3289 = vadd.f32 %v3287, 1.0
    %v3290 = vrcp.pop %v3288
    %v3291 = vmul.f32 1.0, %v3290
    %v3292 = vrcp.pop %v3289
    %v3293 = vmul.f32 1.0, %v3292
    %v3294 = vtanh.pop %v3264
    %v3295 = vtanh.pop %v3268
    %v3296 = vxor.u32 %v3265, 2147483648
    %v3297 = vxor.u32 %v3269, 2147483648
    %v3298 = vmul.f32 %v3296, 1.442695
    %v3299 = vpow.pop %v3298
    %v3300 = vmul.f32 %v3297, 1.442695
    %v3301 = vpow.pop %v3300
    %v3302 = vadd.f32 %v3299, 1.0
    %v3303 = vadd.f32 %v3301, 1.0
    %v3304 = vrcp.pop %v3302
    %v3305 = vmul.f32 1.0, %v3304
    %v3306 = vrcp.pop %v3303
    %v3307 = vmul.f32 1.0, %v3306
    %v3308 = vmul.f32 %v3291, 0.0
    %v3309 = vmul.f32 %v3293, 0.0
    %v3310 = vmul.f32 %v3279, %v3294
    %v3311 = vmul.f32 %v3281, %v3295
    %v3312 = vadd.f32 %v3308, %v3310
    %v3313 = vadd.f32 %v3309, %v3311
    %v3314 = vtanh.pop %v3312
    %v3315 = vtanh.pop %v3313
    %v3316 = vmul.f32 %v3305, %v3314
    %v3317 = vmul.f32 %v3307, %v3315
    %v3318 = vpack.c.bf16 %v3317, %v3316
    %3319 = vmatprep.subr.bf16.mxu0 %v3141
    %3320 = vmatpush1.bf16.msra.mxu0 %v3140
    %3321 = vmatprep.subr.bf16.mxu0 %v3137
    %3322 = vmatpush1.bf16.msra.mxu0 %v3136
    %3323 = vmatprep.subr.bf16.mxu0 %v3133
    %3324 = vmatpush1.bf16.msra.mxu0 %v3132
    %3325 = vmatprep.subr.bf16.mxu0 %v3129
    %3326 = vmatpush1.bf16.msra.mxu0 %v3128
    %3327 = vmatprep.subr.bf16.mxu0 %v3125
    %3328 = vmatpush1.bf16.msra.mxu0 %v3124
    %3329 = vmatprep.subr.bf16.mxu0 %v3121
    %3330 = vmatpush1.bf16.msra.mxu0 %v3120
    %3331 = vmatprep.subr.bf16.mxu0 %v3117
    %3332 = vmatpush1.bf16.msra.mxu0 %v3116
    %3333 = vmatprep.subr.bf16.mxu0 %v3113
    %3334 = vmatpush1.bf16.msra.mxu0 %v3112
    %3335 = vmatprep.subr.bf16.mxu0 0
    %3336 = vmatpush2.bf16.msra.mxu0 0
    %3337 = vmatprep.subr.bf16.mxu0 0
    %3338 = vmatpush2.bf16.msra.mxu0 0
    %3339 = vmatprep.subr.bf16.mxu0 0
    %3340 = vmatpush2.bf16.msra.mxu0 0
    %3341 = vmatprep.subr.bf16.mxu0 0
    %3342 = vmatpush2.bf16.msra.mxu0 0
    %3343 = vmatprep.subr.bf16.mxu0 0
    %3344 = vmatpush2.bf16.msra.mxu0 0
    %3345 = vmatprep.subr.bf16.mxu0 0
    %3346 = vmatpush2.bf16.msra.mxu0 0
    %3347 = vmatprep.subr.bf16.mxu0 0
    %3348 = vmatpush2.bf16.msra.mxu0 0
    %3349 = vmatprep.subr.bf16.mxu0 0
    %3350 = vmatpush2.bf16.msra.mxu0 0
    %3351 = vmatprep.mubr.bf16.mxu0 0
    %3352 = vmatmul.mubr.bf16.gmra.mxu0 %v3318
    %v3353 = vpop.f32.mrf.mxu0
    %v3354 = vadd.f32 0.0, %v3353
    %v3355 = vpop.f32.mrf.mxu0
    %v3356 = vadd.f32 0.0, %v3355
    %v3357 = vpop.f32.mrf.mxu0
    %v3358 = vadd.f32 0.0, %v3357
    %v3359 = vpop.f32.mrf.mxu0
    %v3360 = vadd.f32 0.0, %v3359
    %3361 = vdwg.mxu0
    %3362 = vmatprep.subr.bf16.mxu0 %v3143
    %3363 = vmatpush1.bf16.msra.mxu0 %v3142
    %3364 = vmatprep.subr.bf16.mxu0 %v3139
    %3365 = vmatpush1.bf16.msra.mxu0 %v3138
    %3366 = vmatprep.subr.bf16.mxu0 %v3135
    %3367 = vmatpush1.bf16.msra.mxu0 %v3134
    %3368 = vmatprep.subr.bf16.mxu0 %v3131
    %3369 = vmatpush1.bf16.msra.mxu0 %v3130
    %3370 = vmatprep.subr.bf16.mxu0 %v3127
    %3371 = vmatpush1.bf16.msra.mxu0 %v3126
    %3372 = vmatprep.subr.bf16.mxu0 %v3123
    %3373 = vmatpush1.bf16.msra.mxu0 %v3122
    %3374 = vmatprep.subr.bf16.mxu0 %v3119
    %3375 = vmatpush1.bf16.msra.mxu0 %v3118
    %3376 = vmatprep.subr.bf16.mxu0 %v3115
    %3377 = vmatpush1.bf16.msra.mxu0 %v3114
    %3378 = vmatprep.subr.bf16.mxu0 0
    %3379 = vmatpush2.bf16.msra.mxu0 0
    %3380 = vmatprep.subr.bf16.mxu0 0
    %3381 = vmatpush2.bf16.msra.mxu0 0
    %3382 = vmatprep.subr.bf16.mxu0 0
    %3383 = vmatpush2.bf16.msra.mxu0 0
    %3384 = vmatprep.subr.bf16.mxu0 0
    %3385 = vmatpush2.bf16.msra.mxu0 0
    %3386 = vmatprep.subr.bf16.mxu0 0
    %3387 = vmatpush2.bf16.msra.mxu0 0
    %3388 = vmatprep.subr.bf16.mxu0 0
    %3389 = vmatpush2.bf16.msra.mxu0 0
    %3390 = vmatprep.subr.bf16.mxu0 0
    %3391 = vmatpush2.bf16.msra.mxu0 0
    %3392 = vmatprep.subr.bf16.mxu0 0
    %3393 = vmatpush2.bf16.msra.mxu0 0
    %3394 = vmatprep.mubr.bf16.mxu0 0
    %3395 = vmatmul.mubr.bf16.gmra.mxu0 %v3318
    %v3396 = vpop.f32.mrf.mxu0
    %v3397 = vadd.f32 0.0, %v3396
    %v3398 = vpop.f32.mrf.mxu0
    %v3399 = vadd.f32 0.0, %v3398
    %v3400 = vpop.f32.mrf.mxu0
    %v3401 = vadd.f32 0.0, %v3400
    %v3402 = vpop.f32.mrf.mxu0
    %v3403 = vadd.f32 0.0, %v3402
    %3404 = vdwg.mxu0
    %v3405 = vadd.f32 %v2922, %v3354
    %v3406 = vadd.f32 %v2924, %v3356
    %v3407 = vadd.f32 %v2975, %v3397
    %v3408 = vadd.f32 %v2977, %v3399
    %v3409 = vadd.f32 %v2926, %v3358
    %v3410 = vadd.f32 %v2928, %v3360
    %v3411 = vadd.f32 %v2979, %v3401
    %v3412 = vadd.f32 %v2981, %v3403
    %v3413 = vxor.u32 %v3405, 2147483648
    %v3414 = vxor.u32 %v3409, 2147483648
    %v3415 = vmul.f32 %v3413, 1.442695
    %v3416 = vpow.pop %v3415
    %v3417 = vmul.f32 %v3414, 1.442695
    %v3418 = vpow.pop %v3417
    %v3419 = vadd.f32 %v3416, 1.0
    %v3420 = vadd.f32 %v3418, 1.0
    %v3421 = vrcp.pop %v3419
    %v3422 = vmul.f32 1.0, %v3421
    %v3423 = vrcp.pop %v3420
    %v3424 = vmul.f32 1.0, %v3423
    %v3425 = vxor.u32 %v3406, 2147483648
    %v3426 = vxor.u32 %v3410, 2147483648
    %v3427 = vmul.f32 %v3425, 1.442695
    %v3428 = vpow.pop %v3427
    %v3429 = vmul.f32 %v3426, 1.442695
    %v3430 = vpow.pop %v3429
    %v3431 = vadd.f32 %v3428, 1.0
    %v3432 = vadd.f32 %v3430, 1.0
    %v3433 = vrcp.pop %v3431
    %v3434 = vmul.f32 1.0, %v3433
    %v3435 = vrcp.pop %v3432
    %v3436 = vmul.f32 1.0, %v3435
    %v3437 = vtanh.pop %v3407
    %v3438 = vtanh.pop %v3411
    %v3439 = vxor.u32 %v3408, 2147483648
    %v3440 = vxor.u32 %v3412, 2147483648
    %v3441 = vmul.f32 %v3439, 1.442695
    %v3442 = vpow.pop %v3441
    %v3443 = vmul.f32 %v3440, 1.442695
    %v3444 = vpow.pop %v3443
    %v3445 = vadd.f32 %v3442, 1.0
    %v3446 = vadd.f32 %v3444, 1.0
    %v3447 = vrcp.pop %v3445
    %v3448 = vmul.f32 1.0, %v3447
    %v3449 = vrcp.pop %v3446
    %v3450 = vmul.f32 1.0, %v3449
    %v3451 = vmul.f32 %v3434, %v3312
    %v3452 = vmul.f32 %v3436, %v3313
    %v3453 = vmul.f32 %v3422, %v3437
    %v3454 = vmul.f32 %v3424, %v3438
    %v3455 = vadd.f32 %v3451, %v3453
    %v3456 = vadd.f32 %v3452, %v3454
    %v3457 = vtanh.pop %v3455
    %v3458 = vtanh.pop %v3456
    %v3459 = vmul.f32 %v3448, %v3457
    %v3460 = vmul.f32 %v3450, %v3458
    %v3461 = vld [vmem:[%s17] sm:$0xf]
    %v3462 = vld [vmem:[%s17 + $0x4] sm:$0xf]
    %v3463 = vld [vmem:[%s17 + $0x8] sm:$0xf]
    %v3464 = vld [vmem:[%s17 + $0xc] sm:$0xf]
    %v3465 = vld [vmem:[%s17 + $0x10] sm:$0xf]
    %v3466 = vld [vmem:[%s17 + $0x14] sm:$0xf]
    %v3467 = vld [vmem:[%s17 + $0x18] sm:$0xf]
    %v3468 = vld [vmem:[%s17 + $0x1c] sm:$0xf]
    %v3469 = vld [vmem:[%s17 + $0x20] sm:$0xf]
    %v3470 = vld [vmem:[%s17 + $0x24] sm:$0xf]
    %v3471 = vld [vmem:[%s17 + $0x28] sm:$0xf]
    %v3472 = vld [vmem:[%s17 + $0x2c] sm:$0xf]
    %v3473 = vld [vmem:[%s17 + $0x30] sm:$0xf]
    %v3474 = vld [vmem:[%s17 + $0x34] sm:$0xf]
    %v3475 = vld [vmem:[%s17 + $0x38] sm:$0xf]
    %v3476 = vld [vmem:[%s17 + $0x3c] sm:$0xf]
    %v3477 = vpack.c.bf16 %v3460, %v3459
    %v3478 = vld [vmem:[%s18] sm:$0x1]
    %v3480 = vlaneseq
    %v3481 = vshrl.u32 %v3480, 7
    %v3482 = vsub.s32 0, %v3481
    %v3483 = vrot.slane %v3478, %v3482
    %v3501 = vunpack.c.l.b16 %v3461
    %v3502 = vunpack.c.l.b16 %v3462
    %v3503 = vunpack.c.l.b16 %v3463
    %v3504 = vunpack.c.l.b16 %v3464
    %v3505 = vunpack.c.l.b16 %v3465
    %v3506 = vunpack.c.l.b16 %v3466
    %v3507 = vunpack.c.l.b16 %v3467
    %v3508 = vunpack.c.l.b16 %v3468
    %v3509 = vunpack.c.l.b16 %v3469
    %v3510 = vunpack.c.l.b16 %v3470
    %v3511 = vunpack.c.l.b16 %v3471
    %v3512 = vunpack.c.l.b16 %v3472
    %v3513 = vunpack.c.l.b16 %v3473
    %v3514 = vunpack.c.l.b16 %v3474
    %v3515 = vunpack.c.l.b16 %v3475
    %v3516 = vunpack.c.l.b16 %v3476
    %v3517 = vpack.c.b16 %v3502, %v3501
    %v3518 = vpack.c.b16 %v3504, %v3503
    %v3519 = vpack.c.b16 %v3506, %v3505
    %v3520 = vpack.c.b16 %v3508, %v3507
    %v3521 = vpack.c.b16 %v3510, %v3509
    %v3522 = vpack.c.b16 %v3512, %v3511
    %v3523 = vpack.c.b16 %v3514, %v3513
    %v3524 = vpack.c.b16 %v3516, %v3515
    %3533 = vmatprep.subr.bf16.mxu0 0
    %3534 = vmatpush1.bf16.msra.mxu0 %v3524
    %3535 = vmatprep.subr.bf16.mxu0 0
    %3536 = vmatpush1.bf16.msra.mxu0 %v3523
    %3537 = vmatprep.subr.bf16.mxu0 0
    %3538 = vmatpush1.bf16.msra.mxu0 %v3522
    %3539 = vmatprep.subr.bf16.mxu0 0
    %3540 = vmatpush1.bf16.msra.mxu0 %v3521
    %3541 = vmatprep.subr.bf16.mxu0 0
    %3542 = vmatpush1.bf16.msra.mxu0 %v3520
    %3543 = vmatprep.subr.bf16.mxu0 0
    %3544 = vmatpush1.bf16.msra.mxu0 %v3519
    %3545 = vmatprep.subr.bf16.mxu0 0
    %3546 = vmatpush1.bf16.msra.mxu0 %v3518
    %3547 = vmatprep.subr.bf16.mxu0 0
    %3548 = vmatpush1.bf16.msra.mxu0 %v3517
    %3549 = vmatprep.subr.bf16.mxu0 0
    %3550 = vmatpush2.bf16.msra.mxu0 0
    %3551 = vmatprep.subr.bf16.mxu0 0
    %3552 = vmatpush2.bf16.msra.mxu0 0
    %3553 = vmatprep.subr.bf16.mxu0 0
    %3554 = vmatpush2.bf16.msra.mxu0 0
    %3555 = vmatprep.subr.bf16.mxu0 0
    %3556 = vmatpush2.bf16.msra.mxu0 0
    %3557 = vmatprep.subr.bf16.mxu0 0
    %3558 = vmatpush2.bf16.msra.mxu0 0
    %3559 = vmatprep.subr.bf16.mxu0 0
    %3560 = vmatpush2.bf16.msra.mxu0 0
    %3561 = vmatprep.subr.bf16.mxu0 0
    %3562 = vmatpush2.bf16.msra.mxu0 0
    %3563 = vmatprep.subr.bf16.mxu0 0
    %3564 = vmatpush2.bf16.msra.mxu0 0
    %3565 = vmatprep.mubr.bf16.mxu0 0
    %3566 = vmatmul.mubr.bf16.gmra.mxu0 %v3318
    %v3567 = vpop.f32.mrf.mxu0
    %v3568 = vadd.f32 %v3483, %v3567
    %v3569 = vpop.f32.mrf.mxu0
    %v3570 = vpop.f32.mrf.mxu0
    %v3571 = vadd.f32 %v3483, %v3570
    %v3572 = vpop.f32.mrf.mxu0
    %3573 = vmatprep.mubr.bf16.mxu0 0
    %3574 = vmatmul.mubr.bf16.gmra.mxu0 %v3477
    %v3575 = vpop.f32.mrf.mxu0
    %v3576 = vadd.f32 %v3483, %v3575
    %v3577 = vpop.f32.mrf.mxu0
    %v3578 = vpop.f32.mrf.mxu0
    %v3579 = vadd.f32 %v3483, %v3578
    %v3580 = vpop.f32.mrf.mxu0
    %3581 = vdwg.mxu0
    %v3582 = vmax.f32 %v3568, %v3576
    %v3583 = vmax.f32 %v3571, %v3579
    %v3584 = vsub.f32 %v3568, %v3582
    %v3585 = vsub.f32 %v3571, %v3583
    %v3586 = vmul.f32 %v3584, 1.442695
    %v3587 = vpow.pop %v3586
    %v3588 = vmul.f32 %v3585, 1.442695
    %v3589 = vpow.pop %v3588
    %v3590 = vsub.f32 %v3576, %v3582
    %v3591 = vsub.f32 %v3579, %v3583
    %v3592 = vmul.f32 %v3590, 1.442695
    %v3593 = vpow.pop %v3592
    %v3594 = vmul.f32 %v3591, 1.442695
    %v3595 = vpow.pop %v3594
    %v3596 = vadd.f32 %v3587, %v3593
    %v3597 = vadd.f32 %v3589, %v3595
    %v3598 = vrcp.pop %v3596
    %v3599 = vrcp.pop %v3597
    %v3600 = vmul.f32 %v3587, %v3598
    %v3601 = vmul.f32 %v3589, %v3599
    %v3602 = vmul.f32 %v3593, %v3598
    %v3603 = vmul.f32 %v3595, %v3599
    %3604 = vst.msk [vmem:[%s19] sm:$0xff] %vm212, %v3600
    %3605 = vst.msk [vmem:[%s19 + $0x8] sm:$0xff] %vm212, %v3601
    %3606 = vst.msk [vmem:[%s19 + $0x10] sm:$0xff] %vm212, %v3602
    %3607 = vst.msk [vmem:[%s19 + $0x18] sm:$0xff] %vm212, %v3603
    // Predicated region
    $region110: #{tpu_custom_call.1} parent=1 // pred_check
      _
    $region111: #{tpu_custom_call.1} parent=1 // pred_check_branch
      %3609 = sbr.rel (0) target = $region113
    $region112: #{tpu_custom_call.1} parent=1 // pred_region
      _
    $region113: #{tpu_custom_call.1} parent=1 // pred_fallthru
      _
    // Predicated region
    $region114: #{tpu_custom_call.1} parent=1 // pred_check
      _
    $region115: #{tpu_custom_call.1} parent=1 // pred_check_branch
      %3611 = sbr.rel (0) target = $region117
    $region116: #{tpu_custom_call.1} parent=1 // pred_region
      _
    $region117: #{tpu_custom_call.1} parent=1 // pred_fallthru
      _
    %3612 = vsyncpa [#allocation3], 1
    %3613 = vsyncpa [#allocation5], 1
    %3614 = vsyncpa [#allocation8], 1
    %3615 = vsyncpa [#allocation11], 1
    %3616 = vsyncpa [#allocation14], 1

</llo_original>
